<compile_context>
chip_gen: v6e
topology: v6e:2x2x1
jax: 0.10.0
libtpu: 0.0.40
codegen_flags: <defaults>
</compile_context>

<pallas_src>
import jax
import jax.numpy as jnp
from jax.experimental import pallas as pl
from jax.experimental.pallas import tpu as pltpu

HID = 516           # obs_net hidden width (fixed by the module)
V1 = 516            # v_net first layer width
V2 = 256            # v_net second layer width
NATOMS = 3          # v_net output (distributional atoms)
LANE = 128
LEAKY_SLOPE = 0.01  # nn.LeakyReLU default


def _round_up(x, m):
    return ((x + m - 1) // m) * m


HID_P = _round_up(HID, LANE)     # 640
V1_P = _round_up(V1, LANE)       # 640
V2_P = _round_up(V2, LANE)       # 256 (already aligned)
OUT_P = _round_up(NATOMS, LANE)  # 128 (lane-dense output store)


def _critic_kernel(obs_ref, act_ref,
                   w1_ref, b1_ref, w2_ref, b2_ref, w3_ref, b3_ref,
                   w4h_ref, w4a_ref, b4_ref,
                   w5_ref, b5_ref, w6_ref, b6_ref,
                   out_ref):
    f32 = jnp.float32
    bf16 = jnp.bfloat16

    def mm(x_bf16, w_ref):
        # bf16 x bf16 on the MXU with f32 accumulation.
        return jnp.dot(x_bf16, w_ref[...], preferred_element_type=f32)

    def relu_bf16(y):
        return jnp.maximum(y, 0.0).astype(bf16)

    def leaky_bf16(y):
        return jnp.where(y > 0, y, LEAKY_SLOPE * y).astype(bf16)

    # ---- obs_net: Linear -> ReLU (x3) ----
    h = relu_bf16(mm(obs_ref[...].astype(bf16), w1_ref) + b1_ref[...])
    h = relu_bf16(mm(h, w2_ref) + b2_ref[...])
    h = relu_bf16(mm(h, w3_ref) + b3_ref[...])

    # ---- concat(hidden, act) @ W4  ==  hidden @ W4_h + act @ W4_a ----
    z = mm(h, w4h_ref) + mm(act_ref[...].astype(bf16), w4a_ref) + b4_ref[...]
    z = leaky_bf16(z)
    z = leaky_bf16(mm(z, w5_ref) + b5_ref[...])

    # Final layer padded to 128 output lanes -> unmasked, lane-dense store.
    out_ref[...] = (mm(z, w6_ref) + b6_ref[...]).astype(out_ref.dtype)


def _pad2(x, rows, cols):
    r, c = x.shape
    return jnp.pad(x, ((0, rows - r), (0, cols - c)))


def critic_forward(obs, act, params, *, batch_tile=256):
    """obs: (B, inp) f32, act: (B, out) f32 -> (B, 3) f32."""
    B, inp = obs.shape
    out = act.shape[1]

    # Batch tile: multiple of 8 sublanes, up to 256 rows.  Pad B up to a
    # multiple of the tile; padded rows are sliced away after the kernel.
    TB = min(batch_tile, _round_up(max(B, 1), 8))
    B_pad = _round_up(B, TB)
    if B_pad != B:
        obs = jnp.pad(obs, ((0, B_pad - B), (0, 0)))
        act = jnp.pad(act, ((0, B_pad - B), (0, 0)))

    # Lane-dense zero-padding of every hidden width (exact: ReLU/LeakyReLU(0)=0
    # and zero weight rows/columns contribute nothing to subsequent layers).
    w1 = _pad2(params["w1"], inp, HID_P);   b1 = _pad2(params["b1"], 1, HID_P)
    w2 = _pad2(params["w2"], HID_P, HID_P); b2 = _pad2(params["b2"], 1, HID_P)
    w3 = _pad2(params["w3"], HID_P, HID_P); b3 = _pad2(params["b3"], 1, HID_P)
    w4h = _pad2(params["w4h"], HID_P, V1_P)
    w4a = _pad2(params["w4a"], out, V1_P)
    b4 = _pad2(params["b4"], 1, V1_P)
    w5 = _pad2(params["w5"], V1_P, V2_P);   b5 = _pad2(params["b5"], 1, V2_P)
    w6 = _pad2(params["w6"], V2_P, OUT_P);  b6 = _pad2(params["b6"], 1, OUT_P)

    args = (obs, act, w1, b1, w2, b2, w3, b3, w4h, w4a, b4, w5, b5, w6, b6)

    def tiled(shape):
        # A new tile of batch rows per grid step.
        return pl.BlockSpec(shape, lambda i: (i, 0))

    def resident(x):
        # Whole array, same block index every step -> DMA'd once, VMEM-resident.
        return pl.BlockSpec(x.shape, lambda i: (0, 0))

    in_specs = ([tiled((TB, inp)), tiled((TB, out))]
                + [resident(a) for a in args[2:]])

    grid = (B_pad // TB,)

    flops = int(2 * B_pad * (inp * HID_P + 2 * HID_P * HID_P + HID_P * V1_P
                             + out * V1_P + V1_P * V2_P + V2_P * OUT_P))
    bytes_accessed = int(sum(int(a.size) * a.dtype.itemsize for a in args)
                         + B_pad * OUT_P * 4)

    out_padded = pl.pallas_call(
        _critic_kernel,
        out_shape=jax.ShapeDtypeStruct((B_pad, OUT_P), jnp.float32),
        grid=grid,
        in_specs=in_specs,
        out_specs=pl.BlockSpec((TB, OUT_P), lambda i: (i, 0)),
        compiler_params=pltpu.CompilerParams(
            dimension_semantics=("parallel",),    # batch tiles -> megacore on v7x
            vmem_limit_bytes=32 << 20,
        ),
        cost_estimate=pl.CostEstimate(
            flops=flops, transcendentals=0, bytes_accessed=bytes_accessed),
    )(*args)

    return out_padded[:B, :NATOMS]


def init_params(key, inp, out):
    """PyTorch-style uniform(-1/sqrt(fan_in), 1/sqrt(fan_in)) init.

    Weights are stored transposed, shape (in_features, out_features), in bf16
    (MXU-native); biases stay f32 with shape (1, out_features).
    """
    def linear(k, fan_in, fan_out):
        kw, kb = jax.random.split(k)
        bound = 1.0 / jnp.sqrt(float(fan_in))
        w = jax.random.uniform(kw, (fan_in, fan_out), jnp.float32, -bound, bound)
        b = jax.random.uniform(kb, (1, fan_out), jnp.float32, -bound, bound)
        return w.astype(jnp.bfloat16), b

    ks = jax.random.split(key, 6)
    w1, b1 = linear(ks[0], inp, HID)
    w2, b2 = linear(ks[1], HID, HID)
    w3, b3 = linear(ks[2], HID, HID)
    w4, b4 = linear(ks[3], HID + out, V1)     # consumes concat(hidden, act)
    w5, b5 = linear(ks[4], V1, V2)
    w6, b6 = linear(ks[5], V2, NATOMS)
    return {
        "w1": w1, "b1": b1, "w2": w2, "b2": b2, "w3": w3, "b3": b3,
        "w4h": w4[:HID, :], "w4a": w4[HID:, :], "b4": b4,
        "w5": w5, "b5": b5, "w6": w6, "b6": b6,
    }


def critic_reference(obs, act, params):
    """Pure-JAX reference (unpadded) mirroring the bf16-matmul / f32-accumulate path."""
    bf16 = jnp.bfloat16
    f32 = jnp.float32

    def mm(x, w):
        return jnp.dot(x.astype(bf16), w, preferred_element_type=f32)

    h = jax.nn.relu(mm(obs, params["w1"]) + params["b1"])
    h = jax.nn.relu(mm(h, params["w2"]) + params["b2"])
    h = jax.nn.relu(mm(h, params["w3"]) + params["b3"])
    z = mm(h, params["w4h"]) + mm(act, params["w4a"]) + params["b4"]
    z = jnp.where(z > 0, z, LEAKY_SLOPE * z)
    z = mm(z, params["w5"]) + params["b5"]
    z = jnp.where(z > 0, z, LEAKY_SLOPE * z)
    return mm(z, params["w6"]) + params["b6"]


def get_expected(logits):
    # Critic.getExpected: softmax over atoms weighted by arange(-1, 2, 1) = [-1, 0, 1]
    atoms_weight = jnp.arange(-1.0, 2.0, 1.0, dtype=jnp.float32)
    return jnp.sum(jax.nn.softmax(logits, axis=1) * atoms_weight, axis=1)


if __name__ == "__main__":
    B, INP, OUT = 2, 16, 4   # small synthetic shapes: obs dim 16, action dim 4

    key = jax.random.PRNGKey(0)
    k_obs, k_act, k_params = jax.random.split(key, 3)
    obs = jax.random.normal(k_obs, (B, INP), jnp.float32)
    act = jax.random.normal(k_act, (B, OUT), jnp.float32)
    params = init_params(k_params, INP, OUT)

    values = critic_forward(obs, act, params)
    values = jax.block_until_ready(values)

    ref = critic_reference(obs, act, params)
    assert values.shape == (B, NATOMS)
    assert jnp.allclose(values, ref, atol=1e-2, rtol=1e-2), "mismatch vs reference"

    # exercise the distributional expectation head too (plain JAX glue)
    _ = jax.block_until_ready(get_expected(values))

    print("KERNEL_OK")
</pallas_src>

<mosaic_0001>
module attributes {stable_mosaic.version = 11 : i64} {
  func.func @_critic_kernel(%arg0: i32, %arg1: memref<8x16xf32, #tpu.memory_space<vmem>>, %arg2: memref<8x4xf32, #tpu.memory_space<vmem>>, %arg3: memref<16x640xbf16, #tpu.memory_space<vmem>>, %arg4: memref<1x640xf32, #tpu.memory_space<vmem>>, %arg5: memref<640x640xbf16, #tpu.memory_space<vmem>>, %arg6: memref<1x640xf32, #tpu.memory_space<vmem>>, %arg7: memref<640x640xbf16, #tpu.memory_space<vmem>>, %arg8: memref<1x640xf32, #tpu.memory_space<vmem>>, %arg9: memref<640x640xbf16, #tpu.memory_space<vmem>>, %arg10: memref<4x640xbf16, #tpu.memory_space<vmem>>, %arg11: memref<1x640xf32, #tpu.memory_space<vmem>>, %arg12: memref<640x256xbf16, #tpu.memory_space<vmem>>, %arg13: memref<1x256xf32, #tpu.memory_space<vmem>>, %arg14: memref<256x128xbf16, #tpu.memory_space<vmem>>, %arg15: memref<1x128xf32, #tpu.memory_space<vmem>>, %arg16: memref<8x128xf32, #tpu.memory_space<vmem>>) attributes {dimension_semantics = [#tpu.dimension_semantics<parallel>], iteration_bounds = array<i64: 1>, scalar_prefetch = 0 : i64, scratch_operands = 0 : i64, tpu.core_type = #tpu.core_type<tc>, window_params = [{transform_indices = @transform_0, window_bounds = array<i64: 8, 16>}, {transform_indices = @transform_1, window_bounds = array<i64: 8, 4>}, {pipeline_mode = #tpu.pipeline_mode<synchronous>, transform_indices = @transform_2, window_bounds = array<i64: 16, 640>}, {pipeline_mode = #tpu.pipeline_mode<synchronous>, transform_indices = @transform_3, window_bounds = array<i64: 1, 640>}, {pipeline_mode = #tpu.pipeline_mode<synchronous>, transform_indices = @transform_4, window_bounds = array<i64: 640, 640>}, {pipeline_mode = #tpu.pipeline_mode<synchronous>, transform_indices = @transform_5, window_bounds = array<i64: 1, 640>}, {pipeline_mode = #tpu.pipeline_mode<synchronous>, transform_indices = @transform_6, window_bounds = array<i64: 640, 640>}, {pipeline_mode = #tpu.pipeline_mode<synchronous>, transform_indices = @transform_7, window_bounds = array<i64: 1, 640>}, {pipeline_mode = #tpu.pipeline_mode<synchronous>, transform_indices = @transform_8, window_bounds = array<i64: 640, 640>}, {pipeline_mode = #tpu.pipeline_mode<synchronous>, transform_indices = @transform_9, window_bounds = array<i64: 4, 640>}, {pipeline_mode = #tpu.pipeline_mode<synchronous>, transform_indices = @transform_10, window_bounds = array<i64: 1, 640>}, {pipeline_mode = #tpu.pipeline_mode<synchronous>, transform_indices = @transform_11, window_bounds = array<i64: 640, 256>}, {pipeline_mode = #tpu.pipeline_mode<synchronous>, transform_indices = @transform_12, window_bounds = array<i64: 1, 256>}, {pipeline_mode = #tpu.pipeline_mode<synchronous>, transform_indices = @transform_13, window_bounds = array<i64: 256, 128>}, {pipeline_mode = #tpu.pipeline_mode<synchronous>, transform_indices = @transform_14, window_bounds = array<i64: 1, 128>}, {transform_indices = @transform_15, window_bounds = array<i64: 8, 128>}]} {
    %c0 = arith.constant 0 : index
    %c0_0 = arith.constant 0 : index
    %0 = vector.load %arg1[%c0, %c0_0] : memref<8x16xf32, #tpu.memory_space<vmem>>, vector<8x16xf32>
    %1 = arith.truncf %0 : vector<8x16xf32> to vector<8x16xbf16>
    %c0_1 = arith.constant 0 : index
    %c0_2 = arith.constant 0 : index
    %2 = vector.load %arg3[%c0_1, %c0_2] : memref<16x640xbf16, #tpu.memory_space<vmem>>, vector<16x640xbf16>
    %cst = arith.constant dense<0.000000e+00> : vector<8x640xf32>
    %3 = tpu.matmul %1, %2, %cst {dimension_numbers = #tpu.dot_dimension_numbers<[1], [0], [0], [1], [0, 0, 1, 1], [], []>} : vector<8x16xbf16>, vector<16x640xbf16>, vector<8x640xf32> -> vector<8x640xf32>
    %c0_3 = arith.constant 0 : index
    %c0_4 = arith.constant 0 : index
    %4 = vector.load %arg4[%c0_3, %c0_4] : memref<1x640xf32, #tpu.memory_space<vmem>>, vector<1x640xf32>
    %5 = vector.broadcast %4 : vector<1x640xf32> to vector<8x640xf32>
    %6 = arith.addf %3, %5 : vector<8x640xf32>
    %cst_5 = arith.constant 0.000000e+00 : f32
    %7 = vector.broadcast %cst_5 : f32 to vector<8x640xf32>
    %8 = arith.maximumf %6, %7 : vector<8x640xf32>
    %9 = arith.truncf %8 : vector<8x640xf32> to vector<8x640xbf16>
    %c0_6 = arith.constant 0 : index
    %c0_7 = arith.constant 0 : index
    %10 = vector.load %arg5[%c0_6, %c0_7] : memref<640x640xbf16, #tpu.memory_space<vmem>>, vector<640x640xbf16>
    %cst_8 = arith.constant dense<0.000000e+00> : vector<8x640xf32>
    %11 = tpu.matmul %9, %10, %cst_8 {dimension_numbers = #tpu.dot_dimension_numbers<[1], [0], [0], [1], [0, 0, 1, 1], [], []>} : vector<8x640xbf16>, vector<640x640xbf16>, vector<8x640xf32> -> vector<8x640xf32>
    %c0_9 = arith.constant 0 : index
    %c0_10 = arith.constant 0 : index
    %12 = vector.load %arg6[%c0_9, %c0_10] : memref<1x640xf32, #tpu.memory_space<vmem>>, vector<1x640xf32>
    %13 = vector.broadcast %12 : vector<1x640xf32> to vector<8x640xf32>
    %14 = arith.addf %11, %13 : vector<8x640xf32>
    %cst_11 = arith.constant 0.000000e+00 : f32
    %15 = vector.broadcast %cst_11 : f32 to vector<8x640xf32>
    %16 = arith.maximumf %14, %15 : vector<8x640xf32>
    %17 = arith.truncf %16 : vector<8x640xf32> to vector<8x640xbf16>
    %c0_12 = arith.constant 0 : index
    %c0_13 = arith.constant 0 : index
    %18 = vector.load %arg7[%c0_12, %c0_13] : memref<640x640xbf16, #tpu.memory_space<vmem>>, vector<640x640xbf16>
    %cst_14 = arith.constant dense<0.000000e+00> : vector<8x640xf32>
    %19 = tpu.matmul %17, %18, %cst_14 {dimension_numbers = #tpu.dot_dimension_numbers<[1], [0], [0], [1], [0, 0, 1, 1], [], []>} : vector<8x640xbf16>, vector<640x640xbf16>, vector<8x640xf32> -> vector<8x640xf32>
    %c0_15 = arith.constant 0 : index
    %c0_16 = arith.constant 0 : index
    %20 = vector.load %arg8[%c0_15, %c0_16] : memref<1x640xf32, #tpu.memory_space<vmem>>, vector<1x640xf32>
    %21 = vector.broadcast %20 : vector<1x640xf32> to vector<8x640xf32>
    %22 = arith.addf %19, %21 : vector<8x640xf32>
    %cst_17 = arith.constant 0.000000e+00 : f32
    %23 = vector.broadcast %cst_17 : f32 to vector<8x640xf32>
    %24 = arith.maximumf %22, %23 : vector<8x640xf32>
    %25 = arith.truncf %24 : vector<8x640xf32> to vector<8x640xbf16>
    %c0_18 = arith.constant 0 : index
    %c0_19 = arith.constant 0 : index
    %26 = vector.load %arg9[%c0_18, %c0_19] : memref<640x640xbf16, #tpu.memory_space<vmem>>, vector<640x640xbf16>
    %cst_20 = arith.constant dense<0.000000e+00> : vector<8x640xf32>
    %27 = tpu.matmul %25, %26, %cst_20 {dimension_numbers = #tpu.dot_dimension_numbers<[1], [0], [0], [1], [0, 0, 1, 1], [], []>} : vector<8x640xbf16>, vector<640x640xbf16>, vector<8x640xf32> -> vector<8x640xf32>
    %c0_21 = arith.constant 0 : index
    %c0_22 = arith.constant 0 : index
    %28 = vector.load %arg2[%c0_21, %c0_22] : memref<8x4xf32, #tpu.memory_space<vmem>>, vector<8x4xf32>
    %29 = arith.truncf %28 : vector<8x4xf32> to vector<8x4xbf16>
    %c0_23 = arith.constant 0 : index
    %c0_24 = arith.constant 0 : index
    %30 = vector.load %arg10[%c0_23, %c0_24] : memref<4x640xbf16, #tpu.memory_space<vmem>>, vector<4x640xbf16>
    %cst_25 = arith.constant dense<0.000000e+00> : vector<8x640xf32>
    %31 = tpu.matmul %29, %30, %cst_25 {dimension_numbers = #tpu.dot_dimension_numbers<[1], [0], [0], [1], [0, 0, 1, 1], [], []>} : vector<8x4xbf16>, vector<4x640xbf16>, vector<8x640xf32> -> vector<8x640xf32>
    %32 = arith.addf %27, %31 : vector<8x640xf32>
    %c0_26 = arith.constant 0 : index
    %c0_27 = arith.constant 0 : index
    %33 = vector.load %arg11[%c0_26, %c0_27] : memref<1x640xf32, #tpu.memory_space<vmem>>, vector<1x640xf32>
    %34 = vector.broadcast %33 : vector<1x640xf32> to vector<8x640xf32>
    %35 = arith.addf %32, %34 : vector<8x640xf32>
    %cst_28 = arith.constant 0.000000e+00 : f32
    %36 = vector.broadcast %cst_28 : f32 to vector<8x640xf32>
    %37 = arith.cmpf ogt, %35, %36 : vector<8x640xf32>
    %cst_29 = arith.constant 0.00999999977 : f32
    %38 = vector.broadcast %cst_29 : f32 to vector<8x640xf32>
    %39 = arith.mulf %38, %35 : vector<8x640xf32>
    %40 = arith.select %37, %35, %39 : vector<8x640xi1>, vector<8x640xf32>
    %41 = arith.truncf %40 : vector<8x640xf32> to vector<8x640xbf16>
    %c0_30 = arith.constant 0 : index
    %c0_31 = arith.constant 0 : index
    %42 = vector.load %arg12[%c0_30, %c0_31] : memref<640x256xbf16, #tpu.memory_space<vmem>>, vector<640x256xbf16>
    %cst_32 = arith.constant dense<0.000000e+00> : vector<8x256xf32>
    %43 = tpu.matmul %41, %42, %cst_32 {dimension_numbers = #tpu.dot_dimension_numbers<[1], [0], [0], [1], [0, 0, 1, 1], [], []>} : vector<8x640xbf16>, vector<640x256xbf16>, vector<8x256xf32> -> vector<8x256xf32>
    %c0_33 = arith.constant 0 : index
    %c0_34 = arith.constant 0 : index
    %44 = vector.load %arg13[%c0_33, %c0_34] : memref<1x256xf32, #tpu.memory_space<vmem>>, vector<1x256xf32>
    %45 = vector.broadcast %44 : vector<1x256xf32> to vector<8x256xf32>
    %46 = arith.addf %43, %45 : vector<8x256xf32>
    %cst_35 = arith.constant 0.000000e+00 : f32
    %47 = vector.broadcast %cst_35 : f32 to vector<8x256xf32>
    %48 = arith.cmpf ogt, %46, %47 : vector<8x256xf32>
    %cst_36 = arith.constant 0.00999999977 : f32
    %49 = vector.broadcast %cst_36 : f32 to vector<8x256xf32>
    %50 = arith.mulf %49, %46 : vector<8x256xf32>
    %51 = arith.select %48, %46, %50 : vector<8x256xi1>, vector<8x256xf32>
    %52 = arith.truncf %51 : vector<8x256xf32> to vector<8x256xbf16>
    %c0_37 = arith.constant 0 : index
    %c0_38 = arith.constant 0 : index
    %53 = vector.load %arg14[%c0_37, %c0_38] : memref<256x128xbf16, #tpu.memory_space<vmem>>, vector<256x128xbf16>
    %cst_39 = arith.constant dense<0.000000e+00> : vector<8x128xf32>
    %54 = tpu.matmul %52, %53, %cst_39 {dimension_numbers = #tpu.dot_dimension_numbers<[1], [0], [0], [1], [0, 0, 1, 1], [], []>} : vector<8x256xbf16>, vector<256x128xbf16>, vector<8x128xf32> -> vector<8x128xf32>
    %c0_40 = arith.constant 0 : index
    %c0_41 = arith.constant 0 : index
    %55 = vector.load %arg15[%c0_40, %c0_41] : memref<1x128xf32, #tpu.memory_space<vmem>>, vector<1x128xf32>
    %56 = vector.broadcast %55 : vector<1x128xf32> to vector<8x128xf32>
    %57 = arith.addf %54, %56 : vector<8x128xf32>
    %c0_42 = arith.constant 0 : index
    %c0_43 = arith.constant 0 : index
    %58 = vector.load %arg16[%c0_42, %c0_43] : memref<8x128xf32, #tpu.memory_space<vmem>>, vector<8x128xf32>
    tpu.vector_store %arg16[%c0_42, %c0_43], %57 {strides = array<i32>} : memref<8x128xf32, #tpu.memory_space<vmem>>, vector<8x128xf32>,
    return
  }
  func.func @transform_0(%arg0: i32) -> (i32, i32) {
    %c0_i32 = arith.constant 0 : i32
    %c0_i32_0 = arith.constant 0 : i32
    return %arg0, %c0_i32 : i32, i32
  }
  func.func @transform_1(%arg0: i32) -> (i32, i32) {
    %c0_i32 = arith.constant 0 : i32
    %c0_i32_0 = arith.constant 0 : i32
    return %arg0, %c0_i32 : i32, i32
  }
  func.func @transform_2(%arg0: i32) -> (i32, i32) {
    %c0_i32 = arith.constant 0 : i32
    %c0_i32_0 = arith.constant 0 : i32
    %c0_i32_1 = arith.constant 0 : i32
    return %c0_i32, %c0_i32_0 : i32, i32
  }
  func.func @transform_3(%arg0: i32) -> (i32, i32) {
    %c0_i32 = arith.constant 0 : i32
    %c0_i32_0 = arith.constant 0 : i32
    %c0_i32_1 = arith.constant 0 : i32
    return %c0_i32, %c0_i32_0 : i32, i32
  }
  func.func @transform_4(%arg0: i32) -> (i32, i32) {
    %c0_i32 = arith.constant 0 : i32
    %c0_i32_0 = arith.constant 0 : i32
    %c0_i32_1 = arith.constant 0 : i32
    return %c0_i32, %c0_i32_0 : i32, i32
  }
  func.func @transform_5(%arg0: i32) -> (i32, i32) {
    %c0_i32 = arith.constant 0 : i32
    %c0_i32_0 = arith.constant 0 : i32
    %c0_i32_1 = arith.constant 0 : i32
    return %c0_i32, %c0_i32_0 : i32, i32
  }
  func.func @transform_6(%arg0: i32) -> (i32, i32) {
    %c0_i32 = arith.constant 0 : i32
    %c0_i32_0 = arith.constant 0 : i32
    %c0_i32_1 = arith.constant 0 : i32
    return %c0_i32, %c0_i32_0 : i32, i32
  }
  func.func @transform_7(%arg0: i32) -> (i32, i32) {
    %c0_i32 = arith.constant 0 : i32
    %c0_i32_0 = arith.constant 0 : i32
    %c0_i32_1 = arith.constant 0 : i32
    return %c0_i32, %c0_i32_0 : i32, i32
  }
  func.func @transform_8(%arg0: i32) -> (i32, i32) {
    %c0_i32 = arith.constant 0 : i32
    %c0_i32_0 = arith.constant 0 : i32
    %c0_i32_1 = arith.constant 0 : i32
    return %c0_i32, %c0_i32_0 : i32, i32
  }
  func.func @transform_9(%arg0: i32) -> (i32, i32) {
    %c0_i32 = arith.constant 0 : i32
    %c0_i32_0 = arith.constant 0 : i32
    %c0_i32_1 = arith.constant 0 : i32
    return %c0_i32, %c0_i32_0 : i32, i32
  }
  func.func @transform_10(%arg0: i32) -> (i32, i32) {
    %c0_i32 = arith.constant 0 : i32
    %c0_i32_0 = arith.constant 0 : i32
    %c0_i32_1 = arith.constant 0 : i32
    return %c0_i32, %c0_i32_0 : i32, i32
  }
  func.func @transform_11(%arg0: i32) -> (i32, i32) {
    %c0_i32 = arith.constant 0 : i32
    %c0_i32_0 = arith.constant 0 : i32
    %c0_i32_1 = arith.constant 0 : i32
    return %c0_i32, %c0_i32_0 : i32, i32
  }
  func.func @transform_12(%arg0: i32) -> (i32, i32) {
    %c0_i32 = arith.constant 0 : i32
    %c0_i32_0 = arith.constant 0 : i32
    %c0_i32_1 = arith.constant 0 : i32
    return %c0_i32, %c0_i32_0 : i32, i32
  }
  func.func @transform_13(%arg0: i32) -> (i32, i32) {
    %c0_i32 = arith.constant 0 : i32
    %c0_i32_0 = arith.constant 0 : i32
    %c0_i32_1 = arith.constant 0 : i32
    return %c0_i32, %c0_i32_0 : i32, i32
  }
  func.func @transform_14(%arg0: i32) -> (i32, i32) {
    %c0_i32 = arith.constant 0 : i32
    %c0_i32_0 = arith.constant 0 : i32
    %c0_i32_1 = arith.constant 0 : i32
    return %c0_i32, %c0_i32_0 : i32, i32
  }
  func.func @transform_15(%arg0: i32) -> (i32, i32) {
    %c0_i32 = arith.constant 0 : i32
    %c0_i32_0 = arith.constant 0 : i32
    return %arg0, %c0_i32 : i32, i32
  }
}

</mosaic_0001>

<llo_original>
// kernel: tpu_custom_call.1
$region0: #{tpu_custom_call.1}
  #allocation0 [shape = 'u32[]', space=smem, size = 0x4, offset = 0x4, fixed_abs, tag = 'smem constant byte address 0x4 - core index']
  #allocation1 [shape = 'u32[144,128]{1,0:T(1,128)}', space=vmem, size = 0x12000, scoped, tag = 'internal scratch']
  %s0 = inlined_call_operand.vmem [shape: f32[8,16], index: 0, kind: input, shape index: {}]
  %s1 = inlined_call_operand.vmem [shape: f32[8,4], index: 1, kind: input, shape index: {}]
  %s2 = inlined_call_operand.hbm [shape: bf16[16,640], index: 2, kind: input, shape index: {}]
  %s3 = inlined_call_operand.hbm [shape: f32[1,640], index: 3, kind: input, shape index: {}]
  %s4 = inlined_call_operand.hbm [shape: bf16[640,640], index: 4, kind: input, shape index: {}]
  %s5 = inlined_call_operand.hbm [shape: f32[1,640], index: 5, kind: input, shape index: {}]
  %s6 = inlined_call_operand.hbm [shape: bf16[640,640], index: 6, kind: input, shape index: {}]
  %s7 = inlined_call_operand.vmem [shape: f32[1,640], index: 7, kind: input, shape index: {}]
  %s8 = inlined_call_operand.hbm [shape: bf16[640,640], index: 8, kind: input, shape index: {}]
  %s9 = inlined_call_operand.vmem [shape: bf16[4,640], index: 9, kind: input, shape index: {}]
  %s10 = inlined_call_operand.vmem [shape: f32[1,640], index: 10, kind: input, shape index: {}]
  %s11 = inlined_call_operand.hbm [shape: bf16[640,256], index: 11, kind: input, shape index: {}]
  %s12 = inlined_call_operand.vmem [shape: f32[1,256], index: 12, kind: input, shape index: {}]
  %s13 = inlined_call_operand.hbm [shape: bf16[256,128], index: 13, kind: input, shape index: {}]
  %s14 = inlined_call_operand.vmem [shape: f32[1,128], index: 14, kind: input, shape index: {}]
  %s15 = inlined_call_operand.hbm [shape: f32[8,128], index: 15, kind: output, shape index: {}]
  %s16 = sld [smem:[#allocation0]]
  $region102: #{tpu_custom_call.1} parent=0
    _
  %s18 = ssub.s32 1, %s16
  %s19 = scalar_select 0, %s18, %s16
  $region1: #{tpu_custom_call.1} parent=0
    #allocation2 [shape = 'u8[20480]{0}', space=vmem, size = 0x5000, scoped, tag = 'input window, operand 2, single buffered']
    #allocation3 [shape = 's32[1]{0}', space=sflag, size = 0x4, scoped, tag = 'scoped memory for tpu_custom_call.1']
    #allocation4 [shape = 's32[1]{0}', space=sflag, size = 0x4, scoped, tag = 'scoped memory for tpu_custom_call.1']
    #allocation5 [shape = 'u8[2560]{0}', space=vmem, size = 0xc00, scoped, tag = 'input window, operand 3, single buffered']
    #allocation6 [shape = 's32[1]{0}', space=sflag, size = 0x4, scoped, tag = 'scoped memory for tpu_custom_call.1']
    #allocation7 [shape = 'u8[819200]{0}', space=vmem, size = 0xc8000, scoped, tag = 'input window, operand 4, single buffered']
    #allocation8 [shape = 'u8[2560]{0}', space=vmem, size = 0xc00, scoped, tag = 'input window, operand 5, single buffered']
    #allocation9 [shape = 's32[1]{0}', space=sflag, size = 0x4, scoped, tag = 'scoped memory for tpu_custom_call.1']
    #allocation10 [shape = 'u8[819200]{0}', space=vmem, size = 0xc8000, scoped, tag = 'input window, operand 6, single buffered']
    #allocation11 [shape = 'u8[819200]{0}', space=vmem, size = 0xc8000, scoped, tag = 'input window, operand 8, single buffered']
    #allocation12 [shape = 's32[1]{0}', space=sflag, size = 0x4, scoped, tag = 'scoped memory for tpu_custom_call.1']
    #allocation13 [shape = 'u8[327680]{0}', space=vmem, size = 0x50000, scoped, tag = 'input window, operand 11, single buffered']
    #allocation14 [shape = 'u8[65536]{0}', space=vmem, size = 0x10000, scoped, tag = 'input window, operand 13, single buffered']
    #allocation15 [shape = 's32[1]{0}', space=sflag, size = 0x4, scoped, tag = 'scoped memory for tpu_custom_call.1']
    #allocation16 [shape = 'u8[4096]{0}', space=vmem, size = 0x1000, scoped, tag = 'output window, operand 0, single buffered']
    %20 = vsyncpa [#allocation3], 0
    %21 = vsyncpa [#allocation6], 0
    %22 = vsyncpa [#allocation9], 0
    %23 = vsyncpa [#allocation12], 0
    %24 = vsyncpa [#allocation15], 0
    %25 = vsyncpa [#allocation4], 0
    // Predicated region
    $region2: #{tpu_custom_call.1} parent=1 // pred_check
      _
    $region3: #{tpu_custom_call.1} parent=1 // pred_check_branch
      %27 = sbr.rel (0) target = $region5
    $region4: #{tpu_custom_call.1} parent=1 // pred_region
      _
    $region5: #{tpu_custom_call.1} parent=1 // pred_fallthru
      _
    // Predicated region
    $region6: #{tpu_custom_call.1} parent=1 // pred_check
      _
    $region7: #{tpu_custom_call.1} parent=1 // pred_check_branch
      %29 = sbr.rel (0) target = $region9
    $region8: #{tpu_custom_call.1} parent=1 // pred_region
      _
    $region9: #{tpu_custom_call.1} parent=1 // pred_fallthru
      _
    // Predicated region
    $region10: #{tpu_custom_call.1} parent=1 // pred_check
      _
    $region11: #{tpu_custom_call.1} parent=1 // pred_check_branch
      %31 = sbr.rel (0) target = $region13
    $region12: #{tpu_custom_call.1} parent=1 // pred_region
      %s33 = ssub.s32 640, 640
      %34 = vsyncadd [#allocation3], %s33
      %s35 = sshll.u32 [#allocation2], 4
      %s36 = int_to_ptr.vmem [resolvable:$true] %s35
      %41 = dma.hbm_to_vmem [thread:$0]  %s2, 640, %s36, [#allocation3], 320, 320, 20
    $region13: #{tpu_custom_call.1} parent=1 // pred_fallthru
      _
    // Predicated region
    $region14: #{tpu_custom_call.1} parent=1 // pred_check
      _
    $region15: #{tpu_custom_call.1} parent=1 // pred_check_branch
      %43 = sbr.rel (0) target = $region17
    $region16: #{tpu_custom_call.1} parent=1 // pred_region
      %s45 = ssub.s32 80, 80
      %46 = vsyncadd [#allocation6], %s45
      %s48 = sshll.u32 [#allocation5], 4
      %s49 = int_to_ptr.vmem [resolvable:$true] %s48
      %51 = dma.hbm_to_vmem [thread:$0]  %s3, 80, %s49, [#allocation6]
    $region17: #{tpu_custom_call.1} parent=1 // pred_fallthru
      _
    // Predicated region
    $region18: #{tpu_custom_call.1} parent=1 // pred_check
      _
    $region19: #{tpu_custom_call.1} parent=1 // pred_check_branch
      %53 = sbr.rel (0) target = $region21
    $region20: #{tpu_custom_call.1} parent=1 // pred_region
      %s55 = ssub.s32 25600, 25600
      %56 = vsyncadd [#allocation6], %s55
      %s57 = sshll.u32 [#allocation7], 4
      %s58 = int_to_ptr.vmem [resolvable:$true] %s57
      %63 = dma.hbm_to_vmem [thread:$0]  %s4, 25600, %s58, [#allocation6], 320, 320, 20
    $region21: #{tpu_custom_call.1} parent=1 // pred_fallthru
      _
    // Predicated region
    $region22: #{tpu_custom_call.1} parent=1 // pred_check
      _
    $region23: #{tpu_custom_call.1} parent=1 // pred_check_branch
      %65 = sbr.rel (0) target = $region25
    $region24: #{tpu_custom_call.1} parent=1 // pred_region
      %s67 = ssub.s32 80, 80
      %68 = vsyncadd [#allocation9], %s67
      %s70 = sshll.u32 [#allocation8], 4
      %s71 = int_to_ptr.vmem [resolvable:$true] %s70
      %73 = dma.hbm_to_vmem [thread:$0]  %s5, 80, %s71, [#allocation9]
    $region25: #{tpu_custom_call.1} parent=1 // pred_fallthru
      _
    // Predicated region
    $region26: #{tpu_custom_call.1} parent=1 // pred_check
      _
    $region27: #{tpu_custom_call.1} parent=1 // pred_check_branch
      %75 = sbr.rel (0) target = $region29
    $region28: #{tpu_custom_call.1} parent=1 // pred_region
      %s77 = ssub.s32 25600, 25600
      %78 = vsyncadd [#allocation9], %s77
      %s79 = sshll.u32 [#allocation10], 4
      %s80 = int_to_ptr.vmem [resolvable:$true] %s79
      %85 = dma.hbm_to_vmem [thread:$0]  %s6, 25600, %s80, [#allocation9], 320, 320, 20
    $region29: #{tpu_custom_call.1} parent=1 // pred_fallthru
      _
    // Predicated region
    $region30: #{tpu_custom_call.1} parent=1 // pred_check
      _
    $region31: #{tpu_custom_call.1} parent=1 // pred_check_branch
      %87 = sbr.rel (0) target = $region33
    $region32: #{tpu_custom_call.1} parent=1 // pred_region
      _
    $region33: #{tpu_custom_call.1} parent=1 // pred_fallthru
      _
    // Predicated region
    $region34: #{tpu_custom_call.1} parent=1 // pred_check
      _
    $region35: #{tpu_custom_call.1} parent=1 // pred_check_branch
      %89 = sbr.rel (0) target = $region37
    $region36: #{tpu_custom_call.1} parent=1 // pred_region
      %s91 = ssub.s32 25600, 25600
      %92 = vsyncadd [#allocation12], %s91
      %s93 = sshll.u32 [#allocation11], 4
      %s94 = int_to_ptr.vmem [resolvable:$true] %s93
      %99 = dma.hbm_to_vmem [thread:$0]  %s8, 25600, %s94, [#allocation12], 320, 320, 20
    $region37: #{tpu_custom_call.1} parent=1 // pred_fallthru
      _
    // Predicated region
    $region38: #{tpu_custom_call.1} parent=1 // pred_check
      _
    $region39: #{tpu_custom_call.1} parent=1 // pred_check_branch
      %101 = sbr.rel (0) target = $region41
    $region40: #{tpu_custom_call.1} parent=1 // pred_region
      _
    $region41: #{tpu_custom_call.1} parent=1 // pred_fallthru
      _
    // Predicated region
    $region42: #{tpu_custom_call.1} parent=1 // pred_check
      _
    $region43: #{tpu_custom_call.1} parent=1 // pred_check_branch
      %103 = sbr.rel (0) target = $region45
    $region44: #{tpu_custom_call.1} parent=1 // pred_region
      _
    $region45: #{tpu_custom_call.1} parent=1 // pred_fallthru
      _
    // Predicated region
    $region46: #{tpu_custom_call.1} parent=1 // pred_check
      _
    $region47: #{tpu_custom_call.1} parent=1 // pred_check_branch
      %105 = sbr.rel (0) target = $region49
    $region48: #{tpu_custom_call.1} parent=1 // pred_region
      %s107 = ssub.s32 10240, 10240
      %108 = vsyncadd [#allocation12], %s107
      %s109 = sshll.u32 [#allocation13], 4
      %s110 = int_to_ptr.vmem [resolvable:$true] %s109
      %115 = dma.hbm_to_vmem [thread:$0]  %s11, 10240, %s110, [#allocation12], 128, 128, 8
    $region49: #{tpu_custom_call.1} parent=1 // pred_fallthru
      _
    // Predicated region
    $region50: #{tpu_custom_call.1} parent=1 // pred_check
      _
    $region51: #{tpu_custom_call.1} parent=1 // pred_check_branch
      %117 = sbr.rel (0) target = $region53
    $region52: #{tpu_custom_call.1} parent=1 // pred_region
      _
    $region53: #{tpu_custom_call.1} parent=1 // pred_fallthru
      _
    // Predicated region
    $region54: #{tpu_custom_call.1} parent=1 // pred_check
      _
    $region55: #{tpu_custom_call.1} parent=1 // pred_check_branch
      %119 = sbr.rel (0) target = $region57
    $region56: #{tpu_custom_call.1} parent=1 // pred_region
      %s121 = ssub.s32 2048, 2048
      %122 = vsyncadd [#allocation15], %s121
      %s123 = sshll.u32 [#allocation14], 4
      %s124 = int_to_ptr.vmem [resolvable:$true] %s123
      %129 = dma.hbm_to_vmem [thread:$0]  %s13, 2048, %s124, [#allocation15], 64, 64, 4
    $region57: #{tpu_custom_call.1} parent=1 // pred_fallthru
      _
    // Predicated region
    $region58: #{tpu_custom_call.1} parent=1 // pred_check
      _
    $region59: #{tpu_custom_call.1} parent=1 // pred_check_branch
      %131 = sbr.rel (0) target = $region61
    $region60: #{tpu_custom_call.1} parent=1 // pred_region
      _
    $region61: #{tpu_custom_call.1} parent=1 // pred_fallthru
      _
    // Predicated region
    $region62: #{tpu_custom_call.1} parent=1 // pred_check
      _
    $region63: #{tpu_custom_call.1} parent=1 // pred_check_branch
      %133 = sbr.rel (0) target = $region65
    $region64: #{tpu_custom_call.1} parent=1 // pred_region
      %134 = dma.done [#allocation3], 640
    $region65: #{tpu_custom_call.1} parent=1 // pred_fallthru
      _
    // Predicated region
    $region66: #{tpu_custom_call.1} parent=1 // pred_check
      _
    $region67: #{tpu_custom_call.1} parent=1 // pred_check_branch
      %136 = sbr.rel (0) target = $region69
    $region68: #{tpu_custom_call.1} parent=1 // pred_region
      %137 = dma.done [#allocation6], 80
    $region69: #{tpu_custom_call.1} parent=1 // pred_fallthru
      _
    // Predicated region
    $region70: #{tpu_custom_call.1} parent=1 // pred_check
      _
    $region71: #{tpu_custom_call.1} parent=1 // pred_check_branch
      %139 = sbr.rel (0) target = $region73
    $region72: #{tpu_custom_call.1} parent=1 // pred_region
      %140 = dma.done [#allocation6], 25600
    $region73: #{tpu_custom_call.1} parent=1 // pred_fallthru
      _
    // Predicated region
    $region74: #{tpu_custom_call.1} parent=1 // pred_check
      _
    $region75: #{tpu_custom_call.1} parent=1 // pred_check_branch
      %142 = sbr.rel (0) target = $region77
    $region76: #{tpu_custom_call.1} parent=1 // pred_region
      %143 = dma.done [#allocation9], 80
    $region77: #{tpu_custom_call.1} parent=1 // pred_fallthru
      _
    // Predicated region
    $region78: #{tpu_custom_call.1} parent=1 // pred_check
      _
    $region79: #{tpu_custom_call.1} parent=1 // pred_check_branch
      %145 = sbr.rel (0) target = $region81
    $region80: #{tpu_custom_call.1} parent=1 // pred_region
      %146 = dma.done [#allocation9], 25600
    $region81: #{tpu_custom_call.1} parent=1 // pred_fallthru
      _
    // Predicated region
    $region82: #{tpu_custom_call.1} parent=1 // pred_check
      _
    $region83: #{tpu_custom_call.1} parent=1 // pred_check_branch
      %148 = sbr.rel (0) target = $region85
    $region84: #{tpu_custom_call.1} parent=1 // pred_region
      %149 = dma.done [#allocation12], 25600
    $region85: #{tpu_custom_call.1} parent=1 // pred_fallthru
      _
    // Predicated region
    $region86: #{tpu_custom_call.1} parent=1 // pred_check
      _
    $region87: #{tpu_custom_call.1} parent=1 // pred_check_branch
      %151 = sbr.rel (0) target = $region89
    $region88: #{tpu_custom_call.1} parent=1 // pred_region
      %152 = dma.done [#allocation12], 10240
    $region89: #{tpu_custom_call.1} parent=1 // pred_fallthru
      _
    // Predicated region
    $region90: #{tpu_custom_call.1} parent=1 // pred_check
      _
    $region91: #{tpu_custom_call.1} parent=1 // pred_check_branch
      %154 = sbr.rel (0) target = $region93
    $region92: #{tpu_custom_call.1} parent=1 // pred_region
      %155 = dma.done [#allocation15], 2048
    $region93: #{tpu_custom_call.1} parent=1 // pred_fallthru
      _
    %v157 = vld [vmem:[%s0] sm:$0xff]
    %v158 = vpack.c.bf16 %v157, %v157
    %v159 = vld [vmem:[#allocation2] sm:$0xff]
    %v160 = vld [vmem:[#allocation2 + $0x8] sm:$0xff]
    %v161 = vld [vmem:[#allocation2 + $0x10] sm:$0xf]
    %v162 = vld [vmem:[#allocation2 + $0x14] sm:$0xff]
    %v163 = vld [vmem:[#allocation2 + $0x1c] sm:$0xff]
    %v164 = vld [vmem:[#allocation2 + $0x24] sm:$0xf]
    %v165 = vld [vmem:[#allocation5] sm:$0x1f]
    %v167 = vlaneseq
    %v168 = vshrl.u32 %v167, 7
    %v169 = vsub.s32 0, %v168
    %v170 = vrot.slane %v165, %v169
    %v171 = vlaneseq
    %v172 = vshrl.u32 %v171, 7
    %v173 = vsub.s32 1, %v172
    %v174 = vrot.slane %v165, %v173
    %v175 = vlaneseq
    %v176 = vshrl.u32 %v175, 7
    %v177 = vsub.s32 2, %v176
    %v178 = vrot.slane %v165, %v177
    %v179 = vlaneseq
    %v180 = vshrl.u32 %v179, 7
    %v181 = vsub.s32 3, %v180
    %v182 = vrot.slane %v165, %v181
    %v183 = vlaneseq
    %v184 = vshrl.u32 %v183, 7
    %v185 = vsub.s32 4, %v184
    %v186 = vrot.slane %v165, %v185
    %v198 = vunpack.c.l.b16 %v159
    %v199 = vunpack.c.h.b16 %v159
    %v200 = vunpack.c.l.b16 %v160
    %v201 = vunpack.c.h.b16 %v160
    %v202 = vunpack.c.l.b16 %v161
    %v203 = vunpack.c.l.b16 %v162
    %v204 = vunpack.c.h.b16 %v162
    %v205 = vunpack.c.l.b16 %v163
    %v206 = vunpack.c.h.b16 %v163
    %v207 = vunpack.c.l.b16 %v164
    %v208 = vpack.c.b16 %v203, %v198
    %v209 = vpack.c.b16 %v204, %v199
    %v210 = vpack.c.b16 %v205, %v200
    %v211 = vpack.c.b16 %v206, %v201
    %v212 = vpack.c.b16 %v207, %v202
    %vm218 = vcmask 130048
    %v220 = vsel %vm218, %v158, 0
    %222 = vmatprep.subr.bf16.mxu0 0
    %223 = vmatpush1.bf16.msra.mxu0 0
    %224 = vmatprep.subr.bf16.mxu0 0
    %225 = vmatpush1.bf16.msra.mxu0 0
    %226 = vmatprep.subr.bf16.mxu0 0
    %227 = vmatpush1.bf16.msra.mxu0 0
    %228 = vmatprep.subr.bf16.mxu0 0
    %229 = vmatpush1.bf16.msra.mxu0 0
    %230 = vmatprep.subr.bf16.mxu0 0
    %231 = vmatpush1.bf16.msra.mxu0 0
    %232 = vmatprep.subr.bf16.mxu0 0
    %233 = vmatpush1.bf16.msra.mxu0 0
    %234 = vmatprep.subr.bf16.mxu0 0
    %235 = vmatpush1.bf16.msra.mxu0 0
    %236 = vmatprep.subr.bf16.mxu0 %v209
    %237 = vmatpush1.bf16.msra.mxu0 %v208
    %238 = vmatprep.subr.bf16.mxu0 0
    %239 = vmatpush2.bf16.msra.mxu0 0
    %240 = vmatprep.subr.bf16.mxu0 0
    %241 = vmatpush2.bf16.msra.mxu0 0
    %242 = vmatprep.subr.bf16.mxu0 0
    %243 = vmatpush2.bf16.msra.mxu0 0
    %244 = vmatprep.subr.bf16.mxu0 0
    %245 = vmatpush2.bf16.msra.mxu0 0
    %246 = vmatprep.subr.bf16.mxu0 0
    %247 = vmatpush2.bf16.msra.mxu0 0
    %248 = vmatprep.subr.bf16.mxu0 0
    %249 = vmatpush2.bf16.msra.mxu0 0
    %250 = vmatprep.subr.bf16.mxu0 0
    %251 = vmatpush2.bf16.msra.mxu0 0
    %252 = vmatprep.subr.bf16.mxu0 0
    %253 = vmatpush2.bf16.msra.mxu0 0
    %254 = vmatprep.mubr.bf16.mxu0 0
    %255 = vmatmul.mubr.bf16.gmra.mxu0 %v220
    %v256 = vpop.f32.mrf.mxu0
    %v257 = vadd.f32 %v170, %v256
    %v258 = vpop.f32.mrf.mxu0
    %v259 = vadd.f32 %v174, %v258
    %v260 = vpop.f32.mrf.mxu0
    %v261 = vpop.f32.mrf.mxu0
    %262 = vdwg.mxu0
    %263 = vmatprep.subr.bf16.mxu0 0
    %264 = vmatpush1.bf16.msra.mxu0 0
    %265 = vmatprep.subr.bf16.mxu0 0
    %266 = vmatpush1.bf16.msra.mxu0 0
    %267 = vmatprep.subr.bf16.mxu0 0
    %268 = vmatpush1.bf16.msra.mxu0 0
    %269 = vmatprep.subr.bf16.mxu0 0
    %270 = vmatpush1.bf16.msra.mxu0 0
    %271 = vmatprep.subr.bf16.mxu0 0
    %272 = vmatpush1.bf16.msra.mxu0 0
    %273 = vmatprep.subr.bf16.mxu0 0
    %274 = vmatpush1.bf16.msra.mxu0 0
    %275 = vmatprep.subr.bf16.mxu0 0
    %276 = vmatpush1.bf16.msra.mxu0 0
    %277 = vmatprep.subr.bf16.mxu0 %v211
    %278 = vmatpush1.bf16.msra.mxu0 %v210
    %279 = vmatprep.subr.bf16.mxu0 0
    %280 = vmatpush2.bf16.msra.mxu0 0
    %281 = vmatprep.subr.bf16.mxu0 0
    %282 = vmatpush2.bf16.msra.mxu0 0
    %283 = vmatprep.subr.bf16.mxu0 0
    %284 = vmatpush2.bf16.msra.mxu0 0
    %285 = vmatprep.subr.bf16.mxu0 0
    %286 = vmatpush2.bf16.msra.mxu0 0
    %287 = vmatprep.subr.bf16.mxu0 0
    %288 = vmatpush2.bf16.msra.mxu0 0
    %289 = vmatprep.subr.bf16.mxu0 0
    %290 = vmatpush2.bf16.msra.mxu0 0
    %291 = vmatprep.subr.bf16.mxu0 0
    %292 = vmatpush2.bf16.msra.mxu0 0
    %293 = vmatprep.subr.bf16.mxu0 0
    %294 = vmatpush2.bf16.msra.mxu0 0
    %295 = vmatprep.mubr.bf16.mxu0 0
    %296 = vmatmul.mubr.bf16.gmra.mxu0 %v220
    %v297 = vpop.f32.mrf.mxu0
    %v298 = vadd.f32 %v178, %v297
    %v299 = vpop.f32.mrf.mxu0
    %v300 = vadd.f32 %v182, %v299
    %v301 = vpop.f32.mrf.mxu0
    %v302 = vpop.f32.mrf.mxu0
    %303 = vdwg.mxu0
    %304 = vmatprep.subr.bf16.mxu0 0
    %305 = vmatpush1.bf16.msra.mxu0 0
    %306 = vmatprep.subr.bf16.mxu0 0
    %307 = vmatpush1.bf16.msra.mxu0 0
    %308 = vmatprep.subr.bf16.mxu0 0
    %309 = vmatpush1.bf16.msra.mxu0 0
    %310 = vmatprep.subr.bf16.mxu0 0
    %311 = vmatpush1.bf16.msra.mxu0 0
    %312 = vmatprep.subr.bf16.mxu0 0
    %313 = vmatpush1.bf16.msra.mxu0 0
    %314 = vmatprep.subr.bf16.mxu0 0
    %315 = vmatpush1.bf16.msra.mxu0 0
    %316 = vmatprep.subr.bf16.mxu0 0
    %317 = vmatpush1.bf16.msra.mxu0 0
    %318 = vmatprep.subr.bf16.mxu0 0
    %319 = vmatpush1.bf16.msra.mxu0 %v212
    %320 = vmatprep.subr.bf16.mxu0 0
    %321 = vmatpush2.bf16.msra.mxu0 0
    %322 = vmatprep.subr.bf16.mxu0 0
    %323 = vmatpush2.bf16.msra.mxu0 0
    %324 = vmatprep.subr.bf16.mxu0 0
    %325 = vmatpush2.bf16.msra.mxu0 0
    %326 = vmatprep.subr.bf16.mxu0 0
    %327 = vmatpush2.bf16.msra.mxu0 0
    %328 = vmatprep.subr.bf16.mxu0 0
    %329 = vmatpush2.bf16.msra.mxu0 0
    %330 = vmatprep.subr.bf16.mxu0 0
    %331 = vmatpush2.bf16.msra.mxu0 0
    %332 = vmatprep.subr.bf16.mxu0 0
    %333 = vmatpush2.bf16.msra.mxu0 0
    %334 = vmatprep.subr.bf16.mxu0 0
    %335 = vmatpush2.bf16.msra.mxu0 0
    %336 = vmatprep.mubr.bf16.mxu0 0
    %337 = vmatmul.mubr.bf16.gmra.mxu0 %v220
    %v338 = vpop.f32.mrf.mxu0
    %v339 = vadd.f32 %v186, %v338
    %v340 = vpop.f32.mrf.mxu0
    %v341 = vpop.f32.mrf.mxu0
    %v342 = vpop.f32.mrf.mxu0
    %343 = vdwg.mxu0
    %v344 = vmax.f32 %v257, 0.0
    %v345 = vmax.f32 %v259, 0.0
    %v346 = vmax.f32 %v298, 0.0
    %v347 = vmax.f32 %v300, 0.0
    %v348 = vmax.f32 %v339, 0.0
    %v349 = vpack.c.bf16 %v344, %v344
    %v350 = vpack.c.bf16 %v345, %v345
    %v351 = vpack.c.bf16 %v346, %v346
    %v352 = vpack.c.bf16 %v347, %v347
    %v353 = vpack.c.bf16 %v348, %v348
    %v354 = vld [vmem:[#allocation7] sm:$0xff]
    %v355 = vld [vmem:[#allocation7 + $0x8] sm:$0xff]
    %v356 = vld [vmem:[#allocation7 + $0x10] sm:$0xf]
    %v357 = vld [vmem:[#allocation7 + $0x14] sm:$0xff]
    %v358 = vld [vmem:[#allocation7 + $0x1c] sm:$0xff]
    %v359 = vld [vmem:[#allocation7 + $0x24] sm:$0xf]
    %v360 = vld [vmem:[#allocation7 + $0x28] sm:$0xff]
    %v361 = vld [vmem:[#allocation7 + $0x30] sm:$0xff]
    %v362 = vld [vmem:[#allocation7 + $0x38] sm:$0xf]
    %v363 = vld [vmem:[#allocation7 + $0x3c] sm:$0xff]
    %v364 = vld [vmem:[#allocation7 + $0x44] sm:$0xff]
    %v365 = vld [vmem:[#allocation7 + $0x4c] sm:$0xf]
    %v366 = vld [vmem:[#allocation7 + $0x50] sm:$0xff]
    %v367 = vld [vmem:[#allocation7 + $0x58] sm:$0xff]
    %v368 = vld [vmem:[#allocation7 + $0x60] sm:$0xf]
    %v369 = vld [vmem:[#allocation7 + $0x64] sm:$0xff]
    %v370 = vld [vmem:[#allocation7 + $0x6c] sm:$0xff]
    %v371 = vld [vmem:[#allocation7 + $0x74] sm:$0xf]
    %v372 = vld [vmem:[#allocation7 + $0x78] sm:$0xff]
    %v373 = vld [vmem:[#allocation7 + $0x80] sm:$0xff]
    %v374 = vld [vmem:[#allocation7 + $0x88] sm:$0xf]
    %v375 = vld [vmem:[#allocation7 + $0x8c] sm:$0xff]
    %v376 = vld [vmem:[#allocation7 + $0x94] sm:$0xff]
    %v377 = vld [vmem:[#allocation7 + $0x9c] sm:$0xf]
    %v378 = vld [vmem:[#allocation7 + $0xa0] sm:$0xff]
    %v379 = vld [vmem:[#allocation7 + $0xa8] sm:$0xff]
    %v380 = vld [vmem:[#allocation7 + $0xb0] sm:$0xf]
    %v381 = vld [vmem:[#allocation7 + $0xb4] sm:$0xff]
    %v382 = vld [vmem:[#allocation7 + $0xbc] sm:$0xff]
    %v383 = vld [vmem:[#allocation7 + $0xc4] sm:$0xf]
    %v384 = vld [vmem:[#allocation7 + $0xc8] sm:$0xff]
    %v385 = vld [vmem:[#allocation7 + $0xd0] sm:$0xff]
    %v386 = vld [vmem:[#allocation7 + $0xd8] sm:$0xf]
    %v387 = vld [vmem:[#allocation7 + $0xdc] sm:$0xff]
    %v388 = vld [vmem:[#allocation7 + $0xe4] sm:$0xff]
    %v389 = vld [vmem:[#allocation7 + $0xec] sm:$0xf]
    %v390 = vld [vmem:[#allocation7 + $0xf0] sm:$0xff]
    %v391 = vld [vmem:[#allocation7 + $0xf8] sm:$0xff]
    %v392 = vld [vmem:[#allocation7 + $0x100] sm:$0xf]
    %v393 = vld [vmem:[#allocation7 + $0x104] sm:$0xff]
    %v394 = vld [vmem:[#allocation7 + $0x10c] sm:$0xff]
    %v395 = vld [vmem:[#allocation7 + $0x114] sm:$0xf]
    %v396 = vld [vmem:[#allocation7 + $0x118] sm:$0xff]
    %v397 = vld [vmem:[#allocation7 + $0x120] sm:$0xff]
    %v398 = vld [vmem:[#allocation7 + $0x128] sm:$0xf]
    %v399 = vld [vmem:[#allocation7 + $0x12c] sm:$0xff]
    %v400 = vld [vmem:[#allocation7 + $0x134] sm:$0xff]
    %v401 = vld [vmem:[#allocation7 + $0x13c] sm:$0xf]
    %v402 = vld [vmem:[#allocation7 + $0x140] sm:$0xff]
    %v403 = vld [vmem:[#allocation7 + $0x148] sm:$0xff]
    %v404 = vld [vmem:[#allocation7 + $0x150] sm:$0xf]
    %v405 = vld [vmem:[#allocation7 + $0x154] sm:$0xff]
    %v406 = vld [vmem:[#allocation7 + $0x15c] sm:$0xff]
    %v407 = vld [vmem:[#allocation7 + $0x164] sm:$0xf]
    %v408 = vld [vmem:[#allocation7 + $0x168] sm:$0xff]
    %v409 = vld [vmem:[#allocation7 + $0x170] sm:$0xff]
    %v410 = vld [vmem:[#allocation7 + $0x178] sm:$0xf]
    %v411 = vld [vmem:[#allocation7 + $0x17c] sm:$0xff]
    %v412 = vld [vmem:[#allocation7 + $0x184] sm:$0xff]
    %v413 = vld [vmem:[#allocation7 + $0x18c] sm:$0xf]
    %v414 = vld [vmem:[#allocation7 + $0x190] sm:$0xff]
    %v415 = vld [vmem:[#allocation7 + $0x198] sm:$0xff]
    %v416 = vld [vmem:[#allocation7 + $0x1a0] sm:$0xf]
    %v417 = vld [vmem:[#allocation7 + $0x1a4] sm:$0xff]
    %v418 = vld [vmem:[#allocation7 + $0x1ac] sm:$0xff]
    %v419 = vld [vmem:[#allocation7 + $0x1b4] sm:$0xf]
    %v420 = vld [vmem:[#allocation7 + $0x1b8] sm:$0xff]
    %v421 = vld [vmem:[#allocation7 + $0x1c0] sm:$0xff]
    %v422 = vld [vmem:[#allocation7 + $0x1c8] sm:$0xf]
    %v423 = vld [vmem:[#allocation7 + $0x1cc] sm:$0xff]
    %v424 = vld [vmem:[#allocation7 + $0x1d4] sm:$0xff]
    %v425 = vld [vmem:[#allocation7 + $0x1dc] sm:$0xf]
    %v426 = vld [vmem:[#allocation7 + $0x1e0] sm:$0xff]
    %v427 = vld [vmem:[#allocation7 + $0x1e8] sm:$0xff]
    %v428 = vld [vmem:[#allocation7 + $0x1f0] sm:$0xf]
    %v429 = vld [vmem:[#allocation7 + $0x1f4] sm:$0xff]
    %v430 = vld [vmem:[#allocation7 + $0x1fc] sm:$0xff]
    %v431 = vld [vmem:[#allocation7 + $0x204] sm:$0xf]
    %v432 = vld [vmem:[#allocation7 + $0x208] sm:$0xff]
    %v433 = vld [vmem:[#allocation7 + $0x210] sm:$0xff]
    %v434 = vld [vmem:[#allocation7 + $0x218] sm:$0xf]
    %v435 = vld [vmem:[#allocation7 + $0x21c] sm:$0xff]
    %v436 = vld [vmem:[#allocation7 + $0x224] sm:$0xff]
    %v437 = vld [vmem:[#allocation7 + $0x22c] sm:$0xf]
    %v438 = vld [vmem:[#allocation7 + $0x230] sm:$0xff]
    %v439 = vld [vmem:[#allocation7 + $0x238] sm:$0xff]
    %v440 = vld [vmem:[#allocation7 + $0x240] sm:$0xf]
    %v441 = vld [vmem:[#allocation7 + $0x244] sm:$0xff]
    %v442 = vld [vmem:[#allocation7 + $0x24c] sm:$0xff]
    %v443 = vld [vmem:[#allocation7 + $0x254] sm:$0xf]
    %v444 = vld [vmem:[#allocation7 + $0x258] sm:$0xff]
    %v445 = vld [vmem:[#allocation7 + $0x260] sm:$0xff]
    %v446 = vld [vmem:[#allocation7 + $0x268] sm:$0xf]
    %v447 = vld [vmem:[#allocation7 + $0x26c] sm:$0xff]
    %v448 = vld [vmem:[#allocation7 + $0x274] sm:$0xff]
    %v449 = vld [vmem:[#allocation7 + $0x27c] sm:$0xf]
    %v450 = vld [vmem:[#allocation7 + $0x280] sm:$0xff]
    %v451 = vld [vmem:[#allocation7 + $0x288] sm:$0xff]
    %v452 = vld [vmem:[#allocation7 + $0x290] sm:$0xf]
    %v453 = vld [vmem:[#allocation7 + $0x294] sm:$0xff]
    %v454 = vld [vmem:[#allocation7 + $0x29c] sm:$0xff]
    %v455 = vld [vmem:[#allocation7 + $0x2a4] sm:$0xf]
    %v456 = vld [vmem:[#allocation7 + $0x2a8] sm:$0xff]
    %v457 = vld [vmem:[#allocation7 + $0x2b0] sm:$0xff]
    %v458 = vld [vmem:[#allocation7 + $0x2b8] sm:$0xf]
    %v459 = vld [vmem:[#allocation7 + $0x2bc] sm:$0xff]
    %v460 = vld [vmem:[#allocation7 + $0x2c4] sm:$0xff]
    %v461 = vld [vmem:[#allocation7 + $0x2cc] sm:$0xf]
    %v462 = vld [vmem:[#allocation7 + $0x2d0] sm:$0xff]
    %v463 = vld [vmem:[#allocation7 + $0x2d8] sm:$0xff]
    %v464 = vld [vmem:[#allocation7 + $0x2e0] sm:$0xf]
    %v465 = vld [vmem:[#allocation7 + $0x2e4] sm:$0xff]
    %v466 = vld [vmem:[#allocation7 + $0x2ec] sm:$0xff]
    %v467 = vld [vmem:[#allocation7 + $0x2f4] sm:$0xf]
    %v468 = vld [vmem:[#allocation7 + $0x2f8] sm:$0xff]
    %v469 = vld [vmem:[#allocation7 + $0x300] sm:$0xff]
    %v470 = vld [vmem:[#allocation7 + $0x308] sm:$0xf]
    %v471 = vld [vmem:[#allocation7 + $0x30c] sm:$0xff]
    %v472 = vld [vmem:[#allocation7 + $0x314] sm:$0xff]
    %v473 = vld [vmem:[#allocation7 + $0x31c] sm:$0xf]
    %v474 = vld [vmem:[#allocation7 + $0x320] sm:$0xff]
    %v475 = vld [vmem:[#allocation7 + $0x328] sm:$0xff]
    %v476 = vld [vmem:[#allocation7 + $0x330] sm:$0xf]
    %v477 = vld [vmem:[#allocation7 + $0x334] sm:$0xff]
    %v478 = vld [vmem:[#allocation7 + $0x33c] sm:$0xff]
    %v479 = vld [vmem:[#allocation7 + $0x344] sm:$0xf]
    %v480 = vld [vmem:[#allocation7 + $0x348] sm:$0xff]
    %v481 = vld [vmem:[#allocation7 + $0x350] sm:$0xff]
    %v482 = vld [vmem:[#allocation7 + $0x358] sm:$0xf]
    %v483 = vld [vmem:[#allocation7 + $0x35c] sm:$0xff]
    %v484 = vld [vmem:[#allocation7 + $0x364] sm:$0xff]
    %v485 = vld [vmem:[#allocation7 + $0x36c] sm:$0xf]
    %v486 = vld [vmem:[#allocation7 + $0x370] sm:$0xff]
    %v487 = vld [vmem:[#allocation7 + $0x378] sm:$0xff]
    %v488 = vld [vmem:[#allocation7 + $0x380] sm:$0xf]
    %v489 = vld [vmem:[#allocation7 + $0x384] sm:$0xff]
    %v490 = vld [vmem:[#allocation7 + $0x38c] sm:$0xff]
    %v491 = vld [vmem:[#allocation7 + $0x394] sm:$0xf]
    %v492 = vld [vmem:[#allocation7 + $0x398] sm:$0xff]
    %v493 = vld [vmem:[#allocation7 + $0x3a0] sm:$0xff]
    %v494 = vld [vmem:[#allocation7 + $0x3a8] sm:$0xf]
    %v495 = vld [vmem:[#allocation7 + $0x3ac] sm:$0xff]
    %v496 = vld [vmem:[#allocation7 + $0x3b4] sm:$0xff]
    %v497 = vld [vmem:[#allocation7 + $0x3bc] sm:$0xf]
    %v498 = vld [vmem:[#allocation7 + $0x3c0] sm:$0xff]
    %v499 = vld [vmem:[#allocation7 + $0x3c8] sm:$0xff]
    %v500 = vld [vmem:[#allocation7 + $0x3d0] sm:$0xf]
    %v501 = vld [vmem:[#allocation7 + $0x3d4] sm:$0xff]
    %v502 = vld [vmem:[#allocation7 + $0x3dc] sm:$0xff]
    %v503 = vld [vmem:[#allocation7 + $0x3e4] sm:$0xf]
    %v504 = vld [vmem:[#allocation7 + $0x3e8] sm:$0xff]
    %v505 = vld [vmem:[#allocation7 + $0x3f0] sm:$0xff]
    %v506 = vld [vmem:[#allocation7 + $0x3f8] sm:$0xf]
    %v507 = vld [vmem:[#allocation7 + $0x3fc] sm:$0xff]
    %v508 = vld [vmem:[#allocation7 + $0x404] sm:$0xff]
    %v509 = vld [vmem:[#allocation7 + $0x40c] sm:$0xf]
    %v510 = vld [vmem:[#allocation7 + $0x410] sm:$0xff]
    %v511 = vld [vmem:[#allocation7 + $0x418] sm:$0xff]
    %v512 = vld [vmem:[#allocation7 + $0x420] sm:$0xf]
    %v513 = vld [vmem:[#allocation7 + $0x424] sm:$0xff]
    %v514 = vld [vmem:[#allocation7 + $0x42c] sm:$0xff]
    %v515 = vld [vmem:[#allocation7 + $0x434] sm:$0xf]
    %v516 = vld [vmem:[#allocation7 + $0x438] sm:$0xff]
    %v517 = vld [vmem:[#allocation7 + $0x440] sm:$0xff]
    %v518 = vld [vmem:[#allocation7 + $0x448] sm:$0xf]
    %v519 = vld [vmem:[#allocation7 + $0x44c] sm:$0xff]
    %v520 = vld [vmem:[#allocation7 + $0x454] sm:$0xff]
    %v521 = vld [vmem:[#allocation7 + $0x45c] sm:$0xf]
    %v522 = vld [vmem:[#allocation7 + $0x460] sm:$0xff]
    %v523 = vld [vmem:[#allocation7 + $0x468] sm:$0xff]
    %v524 = vld [vmem:[#allocation7 + $0x470] sm:$0xf]
    %v525 = vld [vmem:[#allocation7 + $0x474] sm:$0xff]
    %v526 = vld [vmem:[#allocation7 + $0x47c] sm:$0xff]
    %v527 = vld [vmem:[#allocation7 + $0x484] sm:$0xf]
    %v528 = vld [vmem:[#allocation7 + $0x488] sm:$0xff]
    %v529 = vld [vmem:[#allocation7 + $0x490] sm:$0xff]
    %v530 = vld [vmem:[#allocation7 + $0x498] sm:$0xf]
    %v531 = vld [vmem:[#allocation7 + $0x49c] sm:$0xff]
    %v532 = vld [vmem:[#allocation7 + $0x4a4] sm:$0xff]
    %v533 = vld [vmem:[#allocation7 + $0x4ac] sm:$0xf]
    %v534 = vld [vmem:[#allocation7 + $0x4b0] sm:$0xff]
    %v535 = vld [vmem:[#allocation7 + $0x4b8] sm:$0xff]
    %v536 = vld [vmem:[#allocation7 + $0x4c0] sm:$0xf]
    %v537 = vld [vmem:[#allocation7 + $0x4c4] sm:$0xff]
    %v538 = vld [vmem:[#allocation7 + $0x4cc] sm:$0xff]
    %v539 = vld [vmem:[#allocation7 + $0x4d4] sm:$0xf]
    %v540 = vld [vmem:[#allocation7 + $0x4d8] sm:$0xff]
    %v541 = vld [vmem:[#allocation7 + $0x4e0] sm:$0xff]
    %v542 = vld [vmem:[#allocation7 + $0x4e8] sm:$0xf]
    %v543 = vld [vmem:[#allocation7 + $0x4ec] sm:$0xff]
    %v544 = vld [vmem:[#allocation7 + $0x4f4] sm:$0xff]
    %v545 = vld [vmem:[#allocation7 + $0x4fc] sm:$0xf]
    %v546 = vld [vmem:[#allocation7 + $0x500] sm:$0xff]
    %v547 = vld [vmem:[#allocation7 + $0x508] sm:$0xff]
    %v548 = vld [vmem:[#allocation7 + $0x510] sm:$0xf]
    %v549 = vld [vmem:[#allocation7 + $0x514] sm:$0xff]
    %v550 = vld [vmem:[#allocation7 + $0x51c] sm:$0xff]
    %v551 = vld [vmem:[#allocation7 + $0x524] sm:$0xf]
    %v552 = vld [vmem:[#allocation7 + $0x528] sm:$0xff]
    %v553 = vld [vmem:[#allocation7 + $0x530] sm:$0xff]
    %v554 = vld [vmem:[#allocation7 + $0x538] sm:$0xf]
    %v555 = vld [vmem:[#allocation7 + $0x53c] sm:$0xff]
    %v556 = vld [vmem:[#allocation7 + $0x544] sm:$0xff]
    %v557 = vld [vmem:[#allocation7 + $0x54c] sm:$0xf]
    %v558 = vld [vmem:[#allocation7 + $0x550] sm:$0xff]
    %v559 = vld [vmem:[#allocation7 + $0x558] sm:$0xff]
    %v560 = vld [vmem:[#allocation7 + $0x560] sm:$0xf]
    %v561 = vld [vmem:[#allocation7 + $0x564] sm:$0xff]
    %v562 = vld [vmem:[#allocation7 + $0x56c] sm:$0xff]
    %v563 = vld [vmem:[#allocation7 + $0x574] sm:$0xf]
    %v564 = vld [vmem:[#allocation7 + $0x578] sm:$0xff]
    %v565 = vld [vmem:[#allocation7 + $0x580] sm:$0xff]
    %v566 = vld [vmem:[#allocation7 + $0x588] sm:$0xf]
    %v567 = vld [vmem:[#allocation7 + $0x58c] sm:$0xff]
    %v568 = vld [vmem:[#allocation7 + $0x594] sm:$0xff]
    %v569 = vld [vmem:[#allocation7 + $0x59c] sm:$0xf]
    %v570 = vld [vmem:[#allocation7 + $0x5a0] sm:$0xff]
    %v571 = vld [vmem:[#allocation7 + $0x5a8] sm:$0xff]
    %v572 = vld [vmem:[#allocation7 + $0x5b0] sm:$0xf]
    %v573 = vld [vmem:[#allocation7 + $0x5b4] sm:$0xff]
    %v574 = vld [vmem:[#allocation7 + $0x5bc] sm:$0xff]
    %v575 = vld [vmem:[#allocation7 + $0x5c4] sm:$0xf]
    %v576 = vld [vmem:[#allocation7 + $0x5c8] sm:$0xff]
    %v577 = vld [vmem:[#allocation7 + $0x5d0] sm:$0xff]
    %v578 = vld [vmem:[#allocation7 + $0x5d8] sm:$0xf]
    %v579 = vld [vmem:[#allocation7 + $0x5dc] sm:$0xff]
    %v580 = vld [vmem:[#allocation7 + $0x5e4] sm:$0xff]
    %v581 = vld [vmem:[#allocation7 + $0x5ec] sm:$0xf]
    %v582 = vld [vmem:[#allocation7 + $0x5f0] sm:$0xff]
    %v583 = vld [vmem:[#allocation7 + $0x5f8] sm:$0xff]
    %v584 = vld [vmem:[#allocation7 + $0x600] sm:$0xf]
    %v585 = vld [vmem:[#allocation7 + $0x604] sm:$0xff]
    %v586 = vld [vmem:[#allocation7 + $0x60c] sm:$0xff]
    %v587 = vld [vmem:[#allocation7 + $0x614] sm:$0xf]
    %v588 = vld [vmem:[#allocation7 + $0x618] sm:$0xff]
    %v589 = vld [vmem:[#allocation7 + $0x620] sm:$0xff]
    %v590 = vld [vmem:[#allocation7 + $0x628] sm:$0xf]
    %v591 = vld [vmem:[#allocation7 + $0x62c] sm:$0xff]
    %v592 = vld [vmem:[#allocation7 + $0x634] sm:$0xff]
    %v593 = vld [vmem:[#allocation7 + $0x63c] sm:$0xf]
    %v594 = vld [vmem:[#allocation8] sm:$0x1f]
    %v596 = vlaneseq
    %v597 = vshrl.u32 %v596, 7
    %v598 = vsub.s32 0, %v597
    %v599 = vrot.slane %v594, %v598
    %v600 = vlaneseq
    %v601 = vshrl.u32 %v600, 7
    %v602 = vsub.s32 1, %v601
    %v603 = vrot.slane %v594, %v602
    %v604 = vlaneseq
    %v605 = vshrl.u32 %v604, 7
    %v606 = vsub.s32 2, %v605
    %v607 = vrot.slane %v594, %v606
    %v608 = vlaneseq
    %v609 = vshrl.u32 %v608, 7
    %v610 = vsub.s32 3, %v609
    %v611 = vrot.slane %v594, %v610
    %v612 = vlaneseq
    %v613 = vshrl.u32 %v612, 7
    %v614 = vsub.s32 4, %v613
    %v615 = vrot.slane %v594, %v614
    %v861 = vunpack.c.l.b16 %v354
    %v862 = vunpack.c.h.b16 %v354
    %v863 = vunpack.c.l.b16 %v355
    %v864 = vunpack.c.h.b16 %v355
    %v865 = vunpack.c.l.b16 %v356
    %v866 = vunpack.c.l.b16 %v357
    %v867 = vunpack.c.h.b16 %v357
    %v868 = vunpack.c.l.b16 %v358
    %v869 = vunpack.c.h.b16 %v358
    %v870 = vunpack.c.l.b16 %v359
    %v871 = vunpack.c.l.b16 %v360
    %v872 = vunpack.c.h.b16 %v360
    %v873 = vunpack.c.l.b16 %v361
    %v874 = vunpack.c.h.b16 %v361
    %v875 = vunpack.c.l.b16 %v362
    %v876 = vunpack.c.l.b16 %v363
    %v877 = vunpack.c.h.b16 %v363
    %v878 = vunpack.c.l.b16 %v364
    %v879 = vunpack.c.h.b16 %v364
    %v880 = vunpack.c.l.b16 %v365
    %v881 = vunpack.c.l.b16 %v366
    %v882 = vunpack.c.h.b16 %v366
    %v883 = vunpack.c.l.b16 %v367
    %v884 = vunpack.c.h.b16 %v367
    %v885 = vunpack.c.l.b16 %v368
    %v886 = vunpack.c.l.b16 %v369
    %v887 = vunpack.c.h.b16 %v369
    %v888 = vunpack.c.l.b16 %v370
    %v889 = vunpack.c.h.b16 %v370
    %v890 = vunpack.c.l.b16 %v371
    %v891 = vunpack.c.l.b16 %v372
    %v892 = vunpack.c.h.b16 %v372
    %v893 = vunpack.c.l.b16 %v373
    %v894 = vunpack.c.h.b16 %v373
    %v895 = vunpack.c.l.b16 %v374
    %v896 = vunpack.c.l.b16 %v375
    %v897 = vunpack.c.h.b16 %v375
    %v898 = vunpack.c.l.b16 %v376
    %v899 = vunpack.c.h.b16 %v376
    %v900 = vunpack.c.l.b16 %v377
    %v901 = vunpack.c.l.b16 %v378
    %v902 = vunpack.c.h.b16 %v378
    %v903 = vunpack.c.l.b16 %v379
    %v904 = vunpack.c.h.b16 %v379
    %v905 = vunpack.c.l.b16 %v380
    %v906 = vunpack.c.l.b16 %v381
    %v907 = vunpack.c.h.b16 %v381
    %v908 = vunpack.c.l.b16 %v382
    %v909 = vunpack.c.h.b16 %v382
    %v910 = vunpack.c.l.b16 %v383
    %v911 = vunpack.c.l.b16 %v384
    %v912 = vunpack.c.h.b16 %v384
    %v913 = vunpack.c.l.b16 %v385
    %v914 = vunpack.c.h.b16 %v385
    %v915 = vunpack.c.l.b16 %v386
    %v916 = vunpack.c.l.b16 %v387
    %v917 = vunpack.c.h.b16 %v387
    %v918 = vunpack.c.l.b16 %v388
    %v919 = vunpack.c.h.b16 %v388
    %v920 = vunpack.c.l.b16 %v389
    %v921 = vunpack.c.l.b16 %v390
    %v922 = vunpack.c.h.b16 %v390
    %v923 = vunpack.c.l.b16 %v391
    %v924 = vunpack.c.h.b16 %v391
    %v925 = vunpack.c.l.b16 %v392
    %v926 = vunpack.c.l.b16 %v393
    %v927 = vunpack.c.h.b16 %v393
    %v928 = vunpack.c.l.b16 %v394
    %v929 = vunpack.c.h.b16 %v394
    %v930 = vunpack.c.l.b16 %v395
    %v931 = vunpack.c.l.b16 %v396
    %v932 = vunpack.c.h.b16 %v396
    %v933 = vunpack.c.l.b16 %v397
    %v934 = vunpack.c.h.b16 %v397
    %v935 = vunpack.c.l.b16 %v398
    %v936 = vunpack.c.l.b16 %v399
    %v937 = vunpack.c.h.b16 %v399
    %v938 = vunpack.c.l.b16 %v400
    %v939 = vunpack.c.h.b16 %v400
    %v940 = vunpack.c.l.b16 %v401
    %v941 = vunpack.c.l.b16 %v402
    %v942 = vunpack.c.h.b16 %v402
    %v943 = vunpack.c.l.b16 %v403
    %v944 = vunpack.c.h.b16 %v403
    %v945 = vunpack.c.l.b16 %v404
    %v946 = vunpack.c.l.b16 %v405
    %v947 = vunpack.c.h.b16 %v405
    %v948 = vunpack.c.l.b16 %v406
    %v949 = vunpack.c.h.b16 %v406
    %v950 = vunpack.c.l.b16 %v407
    %v951 = vunpack.c.l.b16 %v408
    %v952 = vunpack.c.h.b16 %v408
    %v953 = vunpack.c.l.b16 %v409
    %v954 = vunpack.c.h.b16 %v409
    %v955 = vunpack.c.l.b16 %v410
    %v956 = vunpack.c.l.b16 %v411
    %v957 = vunpack.c.h.b16 %v411
    %v958 = vunpack.c.l.b16 %v412
    %v959 = vunpack.c.h.b16 %v412
    %v960 = vunpack.c.l.b16 %v413
    %v961 = vunpack.c.l.b16 %v414
    %v962 = vunpack.c.h.b16 %v414
    %v963 = vunpack.c.l.b16 %v415
    %v964 = vunpack.c.h.b16 %v415
    %v965 = vunpack.c.l.b16 %v416
    %v966 = vunpack.c.l.b16 %v417
    %v967 = vunpack.c.h.b16 %v417
    %v968 = vunpack.c.l.b16 %v418
    %v969 = vunpack.c.h.b16 %v418
    %v970 = vunpack.c.l.b16 %v419
    %v971 = vunpack.c.l.b16 %v420
    %v972 = vunpack.c.h.b16 %v420
    %v973 = vunpack.c.l.b16 %v421
    %v974 = vunpack.c.h.b16 %v421
    %v975 = vunpack.c.l.b16 %v422
    %v976 = vunpack.c.l.b16 %v423
    %v977 = vunpack.c.h.b16 %v423
    %v978 = vunpack.c.l.b16 %v424
    %v979 = vunpack.c.h.b16 %v424
    %v980 = vunpack.c.l.b16 %v425
    %v981 = vunpack.c.l.b16 %v426
    %v982 = vunpack.c.h.b16 %v426
    %v983 = vunpack.c.l.b16 %v427
    %v984 = vunpack.c.h.b16 %v427
    %v985 = vunpack.c.l.b16 %v428
    %v986 = vunpack.c.l.b16 %v429
    %v987 = vunpack.c.h.b16 %v429
    %v988 = vunpack.c.l.b16 %v430
    %v989 = vunpack.c.h.b16 %v430
    %v990 = vunpack.c.l.b16 %v431
    %v991 = vunpack.c.l.b16 %v432
    %v992 = vunpack.c.h.b16 %v432
    %v993 = vunpack.c.l.b16 %v433
    %v994 = vunpack.c.h.b16 %v433
    %v995 = vunpack.c.l.b16 %v434
    %v996 = vunpack.c.l.b16 %v435
    %v997 = vunpack.c.h.b16 %v435
    %v998 = vunpack.c.l.b16 %v436
    %v999 = vunpack.c.h.b16 %v436
    %v1000 = vunpack.c.l.b16 %v437
    %v1001 = vunpack.c.l.b16 %v438
    %v1002 = vunpack.c.h.b16 %v438
    %v1003 = vunpack.c.l.b16 %v439
    %v1004 = vunpack.c.h.b16 %v439
    %v1005 = vunpack.c.l.b16 %v440
    %v1006 = vunpack.c.l.b16 %v441
    %v1007 = vunpack.c.h.b16 %v441
    %v1008 = vunpack.c.l.b16 %v442
    %v1009 = vunpack.c.h.b16 %v442
    %v1010 = vunpack.c.l.b16 %v443
    %v1011 = vunpack.c.l.b16 %v444
    %v1012 = vunpack.c.h.b16 %v444
    %v1013 = vunpack.c.l.b16 %v445
    %v1014 = vunpack.c.h.b16 %v445
    %v1015 = vunpack.c.l.b16 %v446
    %v1016 = vunpack.c.l.b16 %v447
    %v1017 = vunpack.c.h.b16 %v447
    %v1018 = vunpack.c.l.b16 %v448
    %v1019 = vunpack.c.h.b16 %v448
    %v1020 = vunpack.c.l.b16 %v449
    %v1021 = vunpack.c.l.b16 %v450
    %v1022 = vunpack.c.h.b16 %v450
    %v1023 = vunpack.c.l.b16 %v451
    %v1024 = vunpack.c.h.b16 %v451
    %v1025 = vunpack.c.l.b16 %v452
    %v1026 = vunpack.c.l.b16 %v453
    %v1027 = vunpack.c.h.b16 %v453
    %v1028 = vunpack.c.l.b16 %v454
    %v1029 = vunpack.c.h.b16 %v454
    %v1030 = vunpack.c.l.b16 %v455
    %v1031 = vunpack.c.l.b16 %v456
    %v1032 = vunpack.c.h.b16 %v456
    %v1033 = vunpack.c.l.b16 %v457
    %v1034 = vunpack.c.h.b16 %v457
    %v1035 = vunpack.c.l.b16 %v458
    %v1036 = vunpack.c.l.b16 %v459
    %v1037 = vunpack.c.h.b16 %v459
    %v1038 = vunpack.c.l.b16 %v460
    %v1039 = vunpack.c.h.b16 %v460
    %v1040 = vunpack.c.l.b16 %v461
    %v1041 = vunpack.c.l.b16 %v462
    %v1042 = vunpack.c.h.b16 %v462
    %v1043 = vunpack.c.l.b16 %v463
    %v1044 = vunpack.c.h.b16 %v463
    %v1045 = vunpack.c.l.b16 %v464
    %v1046 = vunpack.c.l.b16 %v465
    %v1047 = vunpack.c.h.b16 %v465
    %v1048 = vunpack.c.l.b16 %v466
    %v1049 = vunpack.c.h.b16 %v466
    %v1050 = vunpack.c.l.b16 %v467
    %v1051 = vunpack.c.l.b16 %v468
    %v1052 = vunpack.c.h.b16 %v468
    %v1053 = vunpack.c.l.b16 %v469
    %v1054 = vunpack.c.h.b16 %v469
    %v1055 = vunpack.c.l.b16 %v470
    %v1056 = vunpack.c.l.b16 %v471
    %v1057 = vunpack.c.h.b16 %v471
    %v1058 = vunpack.c.l.b16 %v472
    %v1059 = vunpack.c.h.b16 %v472
    %v1060 = vunpack.c.l.b16 %v473
    %v1061 = vunpack.c.l.b16 %v474
    %v1062 = vunpack.c.h.b16 %v474
    %v1063 = vunpack.c.l.b16 %v475
    %v1064 = vunpack.c.h.b16 %v475
    %v1065 = vunpack.c.l.b16 %v476
    %v1066 = vunpack.c.l.b16 %v477
    %v1067 = vunpack.c.h.b16 %v477
    %v1068 = vunpack.c.l.b16 %v478
    %v1069 = vunpack.c.h.b16 %v478
    %v1070 = vunpack.c.l.b16 %v479
    %v1071 = vunpack.c.l.b16 %v480
    %v1072 = vunpack.c.h.b16 %v480
    %v1073 = vunpack.c.l.b16 %v481
    %v1074 = vunpack.c.h.b16 %v481
    %v1075 = vunpack.c.l.b16 %v482
    %v1076 = vunpack.c.l.b16 %v483
    %v1077 = vunpack.c.h.b16 %v483
    %v1078 = vunpack.c.l.b16 %v484
    %v1079 = vunpack.c.h.b16 %v484
    %v1080 = vunpack.c.l.b16 %v485
    %v1081 = vunpack.c.l.b16 %v486
    %v1082 = vunpack.c.h.b16 %v486
    %v1083 = vunpack.c.l.b16 %v487
    %v1084 = vunpack.c.h.b16 %v487
    %v1085 = vunpack.c.l.b16 %v488
    %v1086 = vunpack.c.l.b16 %v489
    %v1087 = vunpack.c.h.b16 %v489
    %v1088 = vunpack.c.l.b16 %v490
    %v1089 = vunpack.c.h.b16 %v490
    %v1090 = vunpack.c.l.b16 %v491
    %v1091 = vunpack.c.l.b16 %v492
    %v1092 = vunpack.c.h.b16 %v492
    %v1093 = vunpack.c.l.b16 %v493
    %v1094 = vunpack.c.h.b16 %v493
    %v1095 = vunpack.c.l.b16 %v494
    %v1096 = vunpack.c.l.b16 %v495
    %v1097 = vunpack.c.h.b16 %v495
    %v1098 = vunpack.c.l.b16 %v496
    %v1099 = vunpack.c.h.b16 %v496
    %v1100 = vunpack.c.l.b16 %v497
    %v1101 = vunpack.c.l.b16 %v498
    %v1102 = vunpack.c.h.b16 %v498
    %v1103 = vunpack.c.l.b16 %v499
    %v1104 = vunpack.c.h.b16 %v499
    %v1105 = vunpack.c.l.b16 %v500
    %v1106 = vunpack.c.l.b16 %v501
    %v1107 = vunpack.c.h.b16 %v501
    %v1108 = vunpack.c.l.b16 %v502
    %v1109 = vunpack.c.h.b16 %v502
    %v1110 = vunpack.c.l.b16 %v503
    %v1111 = vunpack.c.l.b16 %v504
    %v1112 = vunpack.c.h.b16 %v504
    %v1113 = vunpack.c.l.b16 %v505
    %v1114 = vunpack.c.h.b16 %v505
    %v1115 = vunpack.c.l.b16 %v506
    %v1116 = vunpack.c.l.b16 %v507
    %v1117 = vunpack.c.h.b16 %v507
    %v1118 = vunpack.c.l.b16 %v508
    %v1119 = vunpack.c.h.b16 %v508
    %v1120 = vunpack.c.l.b16 %v509
    %v1121 = vunpack.c.l.b16 %v510
    %v1122 = vunpack.c.h.b16 %v510
    %v1123 = vunpack.c.l.b16 %v511
    %v1124 = vunpack.c.h.b16 %v511
    %v1125 = vunpack.c.l.b16 %v512
    %v1126 = vunpack.c.l.b16 %v513
    %v1127 = vunpack.c.h.b16 %v513
    %v1128 = vunpack.c.l.b16 %v514
    %v1129 = vunpack.c.h.b16 %v514
    %v1130 = vunpack.c.l.b16 %v515
    %v1131 = vunpack.c.l.b16 %v516
    %v1132 = vunpack.c.h.b16 %v516
    %v1133 = vunpack.c.l.b16 %v517
    %v1134 = vunpack.c.h.b16 %v517
    %v1135 = vunpack.c.l.b16 %v518
    %v1136 = vunpack.c.l.b16 %v519
    %v1137 = vunpack.c.h.b16 %v519
    %v1138 = vunpack.c.l.b16 %v520
    %v1139 = vunpack.c.h.b16 %v520
    %v1140 = vunpack.c.l.b16 %v521
    %v1141 = vunpack.c.l.b16 %v522
    %v1142 = vunpack.c.h.b16 %v522
    %v1143 = vunpack.c.l.b16 %v523
    %v1144 = vunpack.c.h.b16 %v523
    %v1145 = vunpack.c.l.b16 %v524
    %v1146 = vunpack.c.l.b16 %v525
    %v1147 = vunpack.c.h.b16 %v525
    %v1148 = vunpack.c.l.b16 %v526
    %v1149 = vunpack.c.h.b16 %v526
    %v1150 = vunpack.c.l.b16 %v527
    %v1151 = vunpack.c.l.b16 %v528
    %v1152 = vunpack.c.h.b16 %v528
    %v1153 = vunpack.c.l.b16 %v529
    %v1154 = vunpack.c.h.b16 %v529
    %v1155 = vunpack.c.l.b16 %v530
    %v1156 = vunpack.c.l.b16 %v531
    %v1157 = vunpack.c.h.b16 %v531
    %v1158 = vunpack.c.l.b16 %v532
    %v1159 = vunpack.c.h.b16 %v532
    %v1160 = vunpack.c.l.b16 %v533
    %v1161 = vunpack.c.l.b16 %v534
    %v1162 = vunpack.c.h.b16 %v534
    %v1163 = vunpack.c.l.b16 %v535
    %v1164 = vunpack.c.h.b16 %v535
    %v1165 = vunpack.c.l.b16 %v536
    %v1166 = vunpack.c.l.b16 %v537
    %v1167 = vunpack.c.h.b16 %v537
    %v1168 = vunpack.c.l.b16 %v538
    %v1169 = vunpack.c.h.b16 %v538
    %v1170 = vunpack.c.l.b16 %v539
    %v1171 = vunpack.c.l.b16 %v540
    %v1172 = vunpack.c.h.b16 %v540
    %v1173 = vunpack.c.l.b16 %v541
    %v1174 = vunpack.c.h.b16 %v541
    %v1175 = vunpack.c.l.b16 %v542
    %v1176 = vunpack.c.l.b16 %v543
    %v1177 = vunpack.c.h.b16 %v543
    %v1178 = vunpack.c.l.b16 %v544
    %v1179 = vunpack.c.h.b16 %v544
    %v1180 = vunpack.c.l.b16 %v545
    %v1181 = vunpack.c.l.b16 %v546
    %v1182 = vunpack.c.h.b16 %v546
    %v1183 = vunpack.c.l.b16 %v547
    %v1184 = vunpack.c.h.b16 %v547
    %v1185 = vunpack.c.l.b16 %v548
    %v1186 = vunpack.c.l.b16 %v549
    %v1187 = vunpack.c.h.b16 %v549
    %v1188 = vunpack.c.l.b16 %v550
    %v1189 = vunpack.c.h.b16 %v550
    %v1190 = vunpack.c.l.b16 %v551
    %v1191 = vunpack.c.l.b16 %v552
    %v1192 = vunpack.c.h.b16 %v552
    %v1193 = vunpack.c.l.b16 %v553
    %v1194 = vunpack.c.h.b16 %v553
    %v1195 = vunpack.c.l.b16 %v554
    %v1196 = vunpack.c.l.b16 %v555
    %v1197 = vunpack.c.h.b16 %v555
    %v1198 = vunpack.c.l.b16 %v556
    %v1199 = vunpack.c.h.b16 %v556
    %v1200 = vunpack.c.l.b16 %v557
    %v1201 = vunpack.c.l.b16 %v558
    %v1202 = vunpack.c.h.b16 %v558
    %v1203 = vunpack.c.l.b16 %v559
    %v1204 = vunpack.c.h.b16 %v559
    %v1205 = vunpack.c.l.b16 %v560
    %v1206 = vunpack.c.l.b16 %v561
    %v1207 = vunpack.c.h.b16 %v561
    %v1208 = vunpack.c.l.b16 %v562
    %v1209 = vunpack.c.h.b16 %v562
    %v1210 = vunpack.c.l.b16 %v563
    %v1211 = vunpack.c.l.b16 %v564
    %v1212 = vunpack.c.h.b16 %v564
    %v1213 = vunpack.c.l.b16 %v565
    %v1214 = vunpack.c.h.b16 %v565
    %v1215 = vunpack.c.l.b16 %v566
    %v1216 = vunpack.c.l.b16 %v567
    %v1217 = vunpack.c.h.b16 %v567
    %v1218 = vunpack.c.l.b16 %v568
    %v1219 = vunpack.c.h.b16 %v568
    %v1220 = vunpack.c.l.b16 %v569
    %v1221 = vunpack.c.l.b16 %v570
    %v1222 = vunpack.c.h.b16 %v570
    %v1223 = vunpack.c.l.b16 %v571
    %v1224 = vunpack.c.h.b16 %v571
    %v1225 = vunpack.c.l.b16 %v572
    %v1226 = vunpack.c.l.b16 %v573
    %v1227 = vunpack.c.h.b16 %v573
    %v1228 = vunpack.c.l.b16 %v574
    %v1229 = vunpack.c.h.b16 %v574
    %v1230 = vunpack.c.l.b16 %v575
    %v1231 = vunpack.c.l.b16 %v576
    %v1232 = vunpack.c.h.b16 %v576
    %v1233 = vunpack.c.l.b16 %v577
    %v1234 = vunpack.c.h.b16 %v577
    %v1235 = vunpack.c.l.b16 %v578
    %v1236 = vunpack.c.l.b16 %v579
    %v1237 = vunpack.c.h.b16 %v579
    %v1238 = vunpack.c.l.b16 %v580
    %v1239 = vunpack.c.h.b16 %v580
    %v1240 = vunpack.c.l.b16 %v581
    %v1241 = vunpack.c.l.b16 %v582
    %v1242 = vunpack.c.h.b16 %v582
    %v1243 = vunpack.c.l.b16 %v583
    %v1244 = vunpack.c.h.b16 %v583
    %v1245 = vunpack.c.l.b16 %v584
    %v1246 = vunpack.c.l.b16 %v585
    %v1247 = vunpack.c.h.b16 %v585
    %v1248 = vunpack.c.l.b16 %v586
    %v1249 = vunpack.c.h.b16 %v586
    %v1250 = vunpack.c.l.b16 %v587
    %v1251 = vunpack.c.l.b16 %v588
    %v1252 = vunpack.c.h.b16 %v588
    %v1253 = vunpack.c.l.b16 %v589
    %v1254 = vunpack.c.h.b16 %v589
    %v1255 = vunpack.c.l.b16 %v590
    %v1256 = vunpack.c.l.b16 %v591
    %v1257 = vunpack.c.h.b16 %v591
    %v1258 = vunpack.c.l.b16 %v592
    %v1259 = vunpack.c.h.b16 %v592
    %v1260 = vunpack.c.l.b16 %v593
    %v1261 = vpack.c.b16 %v866, %v861
    %v1262 = vpack.c.b16 %v867, %v862
    %v1263 = vpack.c.b16 %v868, %v863
    %v1264 = vpack.c.b16 %v869, %v864
    %v1265 = vpack.c.b16 %v870, %v865
    %v1266 = vpack.c.b16 %v876, %v871
    %v1267 = vpack.c.b16 %v877, %v872
    %v1268 = vpack.c.b16 %v878, %v873
    %v1269 = vpack.c.b16 %v879, %v874
    %v1270 = vpack.c.b16 %v880, %v875
    %v1271 = vpack.c.b16 %v886, %v881
    %v1272 = vpack.c.b16 %v887, %v882
    %v1273 = vpack.c.b16 %v888, %v883
    %v1274 = vpack.c.b16 %v889, %v884
    %v1275 = vpack.c.b16 %v890, %v885
    %v1276 = vpack.c.b16 %v896, %v891
    %v1277 = vpack.c.b16 %v897, %v892
    %v1278 = vpack.c.b16 %v898, %v893
    %v1279 = vpack.c.b16 %v899, %v894
    %v1280 = vpack.c.b16 %v900, %v895
    %v1281 = vpack.c.b16 %v906, %v901
    %v1282 = vpack.c.b16 %v907, %v902
    %v1283 = vpack.c.b16 %v908, %v903
    %v1284 = vpack.c.b16 %v909, %v904
    %v1285 = vpack.c.b16 %v910, %v905
    %v1286 = vpack.c.b16 %v916, %v911
    %v1287 = vpack.c.b16 %v917, %v912
    %v1288 = vpack.c.b16 %v918, %v913
    %v1289 = vpack.c.b16 %v919, %v914
    %v1290 = vpack.c.b16 %v920, %v915
    %v1291 = vpack.c.b16 %v926, %v921
    %v1292 = vpack.c.b16 %v927, %v922
    %v1293 = vpack.c.b16 %v928, %v923
    %v1294 = vpack.c.b16 %v929, %v924
    %v1295 = vpack.c.b16 %v930, %v925
    %v1296 = vpack.c.b16 %v936, %v931
    %v1297 = vpack.c.b16 %v937, %v932
    %v1298 = vpack.c.b16 %v938, %v933
    %v1299 = vpack.c.b16 %v939, %v934
    %v1300 = vpack.c.b16 %v940, %v935
    %v1301 = vpack.c.b16 %v946, %v941
    %v1302 = vpack.c.b16 %v947, %v942
    %v1303 = vpack.c.b16 %v948, %v943
    %v1304 = vpack.c.b16 %v949, %v944
    %v1305 = vpack.c.b16 %v950, %v945
    %v1306 = vpack.c.b16 %v956, %v951
    %v1307 = vpack.c.b16 %v957, %v952
    %v1308 = vpack.c.b16 %v958, %v953
    %v1309 = vpack.c.b16 %v959, %v954
    %v1310 = vpack.c.b16 %v960, %v955
    %v1311 = vpack.c.b16 %v966, %v961
    %v1312 = vpack.c.b16 %v967, %v962
    %v1313 = vpack.c.b16 %v968, %v963
    %v1314 = vpack.c.b16 %v969, %v964
    %v1315 = vpack.c.b16 %v970, %v965
    %v1316 = vpack.c.b16 %v976, %v971
    %v1317 = vpack.c.b16 %v977, %v972
    %v1318 = vpack.c.b16 %v978, %v973
    %v1319 = vpack.c.b16 %v979, %v974
    %v1320 = vpack.c.b16 %v980, %v975
    %v1321 = vpack.c.b16 %v986, %v981
    %v1322 = vpack.c.b16 %v987, %v982
    %v1323 = vpack.c.b16 %v988, %v983
    %v1324 = vpack.c.b16 %v989, %v984
    %v1325 = vpack.c.b16 %v990, %v985
    %v1326 = vpack.c.b16 %v996, %v991
    %v1327 = vpack.c.b16 %v997, %v992
    %v1328 = vpack.c.b16 %v998, %v993
    %v1329 = vpack.c.b16 %v999, %v994
    %v1330 = vpack.c.b16 %v1000, %v995
    %v1331 = vpack.c.b16 %v1006, %v1001
    %v1332 = vpack.c.b16 %v1007, %v1002
    %v1333 = vpack.c.b16 %v1008, %v1003
    %v1334 = vpack.c.b16 %v1009, %v1004
    %v1335 = vpack.c.b16 %v1010, %v1005
    %v1336 = vpack.c.b16 %v1016, %v1011
    %v1337 = vpack.c.b16 %v1017, %v1012
    %v1338 = vpack.c.b16 %v1018, %v1013
    %v1339 = vpack.c.b16 %v1019, %v1014
    %v1340 = vpack.c.b16 %v1020, %v1015
    %v1341 = vpack.c.b16 %v1026, %v1021
    %v1342 = vpack.c.b16 %v1027, %v1022
    %v1343 = vpack.c.b16 %v1028, %v1023
    %v1344 = vpack.c.b16 %v1029, %v1024
    %v1345 = vpack.c.b16 %v1030, %v1025
    %v1346 = vpack.c.b16 %v1036, %v1031
    %v1347 = vpack.c.b16 %v1037, %v1032
    %v1348 = vpack.c.b16 %v1038, %v1033
    %v1349 = vpack.c.b16 %v1039, %v1034
    %v1350 = vpack.c.b16 %v1040, %v1035
    %v1351 = vpack.c.b16 %v1046, %v1041
    %v1352 = vpack.c.b16 %v1047, %v1042
    %v1353 = vpack.c.b16 %v1048, %v1043
    %v1354 = vpack.c.b16 %v1049, %v1044
    %v1355 = vpack.c.b16 %v1050, %v1045
    %v1356 = vpack.c.b16 %v1056, %v1051
    %v1357 = vpack.c.b16 %v1057, %v1052
    %v1358 = vpack.c.b16 %v1058, %v1053
    %v1359 = vpack.c.b16 %v1059, %v1054
    %v1360 = vpack.c.b16 %v1060, %v1055
    %v1361 = vpack.c.b16 %v1066, %v1061
    %v1362 = vpack.c.b16 %v1067, %v1062
    %v1363 = vpack.c.b16 %v1068, %v1063
    %v1364 = vpack.c.b16 %v1069, %v1064
    %v1365 = vpack.c.b16 %v1070, %v1065
    %v1366 = vpack.c.b16 %v1076, %v1071
    %v1367 = vpack.c.b16 %v1077, %v1072
    %v1368 = vpack.c.b16 %v1078, %v1073
    %v1369 = vpack.c.b16 %v1079, %v1074
    %v1370 = vpack.c.b16 %v1080, %v1075
    %v1371 = vpack.c.b16 %v1086, %v1081
    %v1372 = vpack.c.b16 %v1087, %v1082
    %v1373 = vpack.c.b16 %v1088, %v1083
    %v1374 = vpack.c.b16 %v1089, %v1084
    %v1375 = vpack.c.b16 %v1090, %v1085
    %v1376 = vpack.c.b16 %v1096, %v1091
    %v1377 = vpack.c.b16 %v1097, %v1092
    %v1378 = vpack.c.b16 %v1098, %v1093
    %v1379 = vpack.c.b16 %v1099, %v1094
    %v1380 = vpack.c.b16 %v1100, %v1095
    %v1381 = vpack.c.b16 %v1106, %v1101
    %v1382 = vpack.c.b16 %v1107, %v1102
    %v1383 = vpack.c.b16 %v1108, %v1103
    %v1384 = vpack.c.b16 %v1109, %v1104
    %v1385 = vpack.c.b16 %v1110, %v1105
    %v1386 = vpack.c.b16 %v1116, %v1111
    %v1387 = vpack.c.b16 %v1117, %v1112
    %v1388 = vpack.c.b16 %v1118, %v1113
    %v1389 = vpack.c.b16 %v1119, %v1114
    %v1390 = vpack.c.b16 %v1120, %v1115
    %v1391 = vpack.c.b16 %v1126, %v1121
    %v1392 = vpack.c.b16 %v1127, %v1122
    %v1393 = vpack.c.b16 %v1128, %v1123
    %v1394 = vpack.c.b16 %v1129, %v1124
    %v1395 = vpack.c.b16 %v1130, %v1125
    %v1396 = vpack.c.b16 %v1136, %v1131
    %v1397 = vpack.c.b16 %v1137, %v1132
    %v1398 = vpack.c.b16 %v1138, %v1133
    %v1399 = vpack.c.b16 %v1139, %v1134
    %v1400 = vpack.c.b16 %v1140, %v1135
    %v1401 = vpack.c.b16 %v1146, %v1141
    %v1402 = vpack.c.b16 %v1147, %v1142
    %v1403 = vpack.c.b16 %v1148, %v1143
    %v1404 = vpack.c.b16 %v1149, %v1144
    %v1405 = vpack.c.b16 %v1150, %v1145
    %v1406 = vpack.c.b16 %v1156, %v1151
    %v1407 = vpack.c.b16 %v1157, %v1152
    %v1408 = vpack.c.b16 %v1158, %v1153
    %v1409 = vpack.c.b16 %v1159, %v1154
    %v1410 = vpack.c.b16 %v1160, %v1155
    %v1411 = vpack.c.b16 %v1166, %v1161
    %v1412 = vpack.c.b16 %v1167, %v1162
    %v1413 = vpack.c.b16 %v1168, %v1163
    %v1414 = vpack.c.b16 %v1169, %v1164
    %v1415 = vpack.c.b16 %v1170, %v1165
    %v1416 = vpack.c.b16 %v1176, %v1171
    %v1417 = vpack.c.b16 %v1177, %v1172
    %v1418 = vpack.c.b16 %v1178, %v1173
    %v1419 = vpack.c.b16 %v1179, %v1174
    %v1420 = vpack.c.b16 %v1180, %v1175
    %v1421 = vpack.c.b16 %v1186, %v1181
    %v1422 = vpack.c.b16 %v1187, %v1182
    %v1423 = vpack.c.b16 %v1188, %v1183
    %v1424 = vpack.c.b16 %v1189, %v1184
    %v1425 = vpack.c.b16 %v1190, %v1185
    %v1426 = vpack.c.b16 %v1196, %v1191
    %v1427 = vpack.c.b16 %v1197, %v1192
    %v1428 = vpack.c.b16 %v1198, %v1193
    %v1429 = vpack.c.b16 %v1199, %v1194
    %v1430 = vpack.c.b16 %v1200, %v1195
    %v1431 = vpack.c.b16 %v1206, %v1201
    %v1432 = vpack.c.b16 %v1207, %v1202
    %v1433 = vpack.c.b16 %v1208, %v1203
    %v1434 = vpack.c.b16 %v1209, %v1204
    %v1435 = vpack.c.b16 %v1210, %v1205
    %v1436 = vpack.c.b16 %v1216, %v1211
    %v1437 = vpack.c.b16 %v1217, %v1212
    %v1438 = vpack.c.b16 %v1218, %v1213
    %v1439 = vpack.c.b16 %v1219, %v1214
    %v1440 = vpack.c.b16 %v1220, %v1215
    %v1441 = vpack.c.b16 %v1226, %v1221
    %v1442 = vpack.c.b16 %v1227, %v1222
    %v1443 = vpack.c.b16 %v1228, %v1223
    %v1444 = vpack.c.b16 %v1229, %v1224
    %v1445 = vpack.c.b16 %v1230, %v1225
    %v1446 = vpack.c.b16 %v1236, %v1231
    %v1447 = vpack.c.b16 %v1237, %v1232
    %v1448 = vpack.c.b16 %v1238, %v1233
    %v1449 = vpack.c.b16 %v1239, %v1234
    %v1450 = vpack.c.b16 %v1240, %v1235
    %v1451 = vpack.c.b16 %v1246, %v1241
    %v1452 = vpack.c.b16 %v1247, %v1242
    %v1453 = vpack.c.b16 %v1248, %v1243
    %v1454 = vpack.c.b16 %v1249, %v1244
    %v1455 = vpack.c.b16 %v1250, %v1245
    %v1456 = vpack.c.b16 %v1256, %v1251
    %v1457 = vpack.c.b16 %v1257, %v1252
    %v1458 = vpack.c.b16 %v1258, %v1253
    %v1459 = vpack.c.b16 %v1259, %v1254
    %v1460 = vpack.c.b16 %v1260, %v1255
    %1661 = vmatprep.subr.bf16.mxu0 %v1297
    %1662 = vmatpush1.bf16.msra.mxu0 %v1296
    %1663 = vmatprep.subr.bf16.mxu0 %v1292
    %1664 = vmatpush1.bf16.msra.mxu0 %v1291
    %1665 = vmatprep.subr.bf16.mxu0 %v1287
    %1666 = vmatpush1.bf16.msra.mxu0 %v1286
    %1667 = vmatprep.subr.bf16.mxu0 %v1282
    %1668 = vmatpush1.bf16.msra.mxu0 %v1281
    %1669 = vmatprep.subr.bf16.mxu0 %v1277
    %1670 = vmatpush1.bf16.msra.mxu0 %v1276
    %1671 = vmatprep.subr.bf16.mxu0 %v1272
    %1672 = vmatpush1.bf16.msra.mxu0 %v1271
    %1673 = vmatprep.subr.bf16.mxu0 %v1267
    %1674 = vmatpush1.bf16.msra.mxu0 %v1266
    %1675 = vmatprep.subr.bf16.mxu0 %v1262
    %1676 = vmatpush1.bf16.msra.mxu0 %v1261
    %1677 = vmatprep.subr.bf16.mxu0 %v1337
    %1678 = vmatpush2.bf16.msra.mxu0 %v1336
    %1679 = vmatprep.subr.bf16.mxu0 %v1332
    %1680 = vmatpush2.bf16.msra.mxu0 %v1331
    %1681 = vmatprep.subr.bf16.mxu0 %v1327
    %1682 = vmatpush2.bf16.msra.mxu0 %v1326
    %1683 = vmatprep.subr.bf16.mxu0 %v1322
    %1684 = vmatpush2.bf16.msra.mxu0 %v1321
    %1685 = vmatprep.subr.bf16.mxu0 %v1317
    %1686 = vmatpush2.bf16.msra.mxu0 %v1316
    %1687 = vmatprep.subr.bf16.mxu0 %v1312
    %1688 = vmatpush2.bf16.msra.mxu0 %v1311
    %1689 = vmatprep.subr.bf16.mxu0 %v1307
    %1690 = vmatpush2.bf16.msra.mxu0 %v1306
    %1691 = vmatprep.subr.bf16.mxu0 %v1302
    %1692 = vmatpush2.bf16.msra.mxu0 %v1301
    %1693 = vmatprep.mubr.bf16.mxu0 %v350
    %1694 = vmatmul.mubr.bf16.gmra.mxu0 %v349
    %v1695 = vpop.f32.mrf.mxu0
    %v1696 = vadd.f32 %v599, %v1695
    %v1697 = vpop.f32.mrf.mxu0
    %v1698 = vadd.f32 %v603, %v1697
    %v1699 = vpop.f32.mrf.mxu0
    %v1700 = vpop.f32.mrf.mxu0
    %1701 = vdwg.mxu0
    %1702 = vmatprep.subr.bf16.mxu0 %v1377
    %1703 = vmatpush1.bf16.msra.mxu0 %v1376
    %1704 = vmatprep.subr.bf16.mxu0 %v1372
    %1705 = vmatpush1.bf16.msra.mxu0 %v1371
    %1706 = vmatprep.subr.bf16.mxu0 %v1367
    %1707 = vmatpush1.bf16.msra.mxu0 %v1366
    %1708 = vmatprep.subr.bf16.mxu0 %v1362
    %1709 = vmatpush1.bf16.msra.mxu0 %v1361
    %1710 = vmatprep.subr.bf16.mxu0 %v1357
    %1711 = vmatpush1.bf16.msra.mxu0 %v1356
    %1712 = vmatprep.subr.bf16.mxu0 %v1352
    %1713 = vmatpush1.bf16.msra.mxu0 %v1351
    %1714 = vmatprep.subr.bf16.mxu0 %v1347
    %1715 = vmatpush1.bf16.msra.mxu0 %v1346
    %1716 = vmatprep.subr.bf16.mxu0 %v1342
    %1717 = vmatpush1.bf16.msra.mxu0 %v1341
    %1718 = vmatprep.subr.bf16.mxu0 %v1417
    %1719 = vmatpush2.bf16.msra.mxu0 %v1416
    %1720 = vmatprep.subr.bf16.mxu0 %v1412
    %1721 = vmatpush2.bf16.msra.mxu0 %v1411
    %1722 = vmatprep.subr.bf16.mxu0 %v1407
    %1723 = vmatpush2.bf16.msra.mxu0 %v1406
    %1724 = vmatprep.subr.bf16.mxu0 %v1402
    %1725 = vmatpush2.bf16.msra.mxu0 %v1401
    %1726 = vmatprep.subr.bf16.mxu0 %v1397
    %1727 = vmatpush2.bf16.msra.mxu0 %v1396
    %1728 = vmatprep.subr.bf16.mxu0 %v1392
    %1729 = vmatpush2.bf16.msra.mxu0 %v1391
    %1730 = vmatprep.subr.bf16.mxu0 %v1387
    %1731 = vmatpush2.bf16.msra.mxu0 %v1386
    %1732 = vmatprep.subr.bf16.mxu0 %v1382
    %1733 = vmatpush2.bf16.msra.mxu0 %v1381
    %1734 = vmatprep.mubr.bf16.mxu0 %v352
    %1735 = vmatmul.mubr.bf16.gmra.mxu0 %v351
    %v1736 = vpop.f32.mrf.mxu0
    %v1737 = vadd.f32 %v1696, %v1736
    %v1738 = vpop.f32.mrf.mxu0
    %v1739 = vadd.f32 %v1698, %v1738
    %v1740 = vpop.f32.mrf.mxu0
    %v1741 = vpop.f32.mrf.mxu0
    %1742 = vdwg.mxu0
    %1743 = vmatprep.subr.bf16.mxu0 %v1457
    %1744 = vmatpush1.bf16.msra.mxu0 %v1456
    %1745 = vmatprep.subr.bf16.mxu0 %v1452
    %1746 = vmatpush1.bf16.msra.mxu0 %v1451
    %1747 = vmatprep.subr.bf16.mxu0 %v1447
    %1748 = vmatpush1.bf16.msra.mxu0 %v1446
    %1749 = vmatprep.subr.bf16.mxu0 %v1442
    %1750 = vmatpush1.bf16.msra.mxu0 %v1441
    %1751 = vmatprep.subr.bf16.mxu0 %v1437
    %1752 = vmatpush1.bf16.msra.mxu0 %v1436
    %1753 = vmatprep.subr.bf16.mxu0 %v1432
    %1754 = vmatpush1.bf16.msra.mxu0 %v1431
    %1755 = vmatprep.subr.bf16.mxu0 %v1427
    %1756 = vmatpush1.bf16.msra.mxu0 %v1426
    %1757 = vmatprep.subr.bf16.mxu0 %v1422
    %1758 = vmatpush1.bf16.msra.mxu0 %v1421
    %1759 = vmatprep.subr.bf16.mxu0 0
    %1760 = vmatpush2.bf16.msra.mxu0 0
    %1761 = vmatprep.subr.bf16.mxu0 0
    %1762 = vmatpush2.bf16.msra.mxu0 0
    %1763 = vmatprep.subr.bf16.mxu0 0
    %1764 = vmatpush2.bf16.msra.mxu0 0
    %1765 = vmatprep.subr.bf16.mxu0 0
    %1766 = vmatpush2.bf16.msra.mxu0 0
    %1767 = vmatprep.subr.bf16.mxu0 0
    %1768 = vmatpush2.bf16.msra.mxu0 0
    %1769 = vmatprep.subr.bf16.mxu0 0
    %1770 = vmatpush2.bf16.msra.mxu0 0
    %1771 = vmatprep.subr.bf16.mxu0 0
    %1772 = vmatpush2.bf16.msra.mxu0 0
    %1773 = vmatprep.subr.bf16.mxu0 0
    %1774 = vmatpush2.bf16.msra.mxu0 0
    %1775 = vmatprep.mubr.bf16.mxu0 0
    %1776 = vmatmul.mubr.bf16.gmra.mxu0 %v353
    %v1777 = vpop.f32.mrf.mxu0
    %v1778 = vadd.f32 %v1737, %v1777
    %v1779 = vpop.f32.mrf.mxu0
    %v1780 = vadd.f32 %v1739, %v1779
    %v1781 = vpop.f32.mrf.mxu0
    %v1782 = vpop.f32.mrf.mxu0
    %1783 = vdwg.mxu0
    %1784 = vmatprep.subr.bf16.mxu0 %v1299
    %1785 = vmatpush1.bf16.msra.mxu0 %v1298
    %1786 = vmatprep.subr.bf16.mxu0 %v1294
    %1787 = vmatpush1.bf16.msra.mxu0 %v1293
    %1788 = vmatprep.subr.bf16.mxu0 %v1289
    %1789 = vmatpush1.bf16.msra.mxu0 %v1288
    %1790 = vmatprep.subr.bf16.mxu0 %v1284
    %1791 = vmatpush1.bf16.msra.mxu0 %v1283
    %1792 = vmatprep.subr.bf16.mxu0 %v1279
    %1793 = vmatpush1.bf16.msra.mxu0 %v1278
    %1794 = vmatprep.subr.bf16.mxu0 %v1274
    %1795 = vmatpush1.bf16.msra.mxu0 %v1273
    %1796 = vmatprep.subr.bf16.mxu0 %v1269
    %1797 = vmatpush1.bf16.msra.mxu0 %v1268
    %1798 = vmatprep.subr.bf16.mxu0 %v1264
    %1799 = vmatpush1.bf16.msra.mxu0 %v1263
    %1800 = vmatprep.subr.bf16.mxu0 %v1339
    %1801 = vmatpush2.bf16.msra.mxu0 %v1338
    %1802 = vmatprep.subr.bf16.mxu0 %v1334
    %1803 = vmatpush2.bf16.msra.mxu0 %v1333
    %1804 = vmatprep.subr.bf16.mxu0 %v1329
    %1805 = vmatpush2.bf16.msra.mxu0 %v1328
    %1806 = vmatprep.subr.bf16.mxu0 %v1324
    %1807 = vmatpush2.bf16.msra.mxu0 %v1323
    %1808 = vmatprep.subr.bf16.mxu0 %v1319
    %1809 = vmatpush2.bf16.msra.mxu0 %v1318
    %1810 = vmatprep.subr.bf16.mxu0 %v1314
    %1811 = vmatpush2.bf16.msra.mxu0 %v1313
    %1812 = vmatprep.subr.bf16.mxu0 %v1309
    %1813 = vmatpush2.bf16.msra.mxu0 %v1308
    %1814 = vmatprep.subr.bf16.mxu0 %v1304
    %1815 = vmatpush2.bf16.msra.mxu0 %v1303
    %1816 = vmatprep.mubr.bf16.mxu0 %v350
    %1817 = vmatmul.mubr.bf16.gmra.mxu0 %v349
    %v1818 = vpop.f32.mrf.mxu0
    %v1819 = vadd.f32 %v607, %v1818
    %v1820 = vpop.f32.mrf.mxu0
    %v1821 = vadd.f32 %v611, %v1820
    %v1822 = vpop.f32.mrf.mxu0
    %v1823 = vpop.f32.mrf.mxu0
    %1824 = vdwg.mxu0
    %1825 = vmatprep.subr.bf16.mxu0 %v1379
    %1826 = vmatpush1.bf16.msra.mxu0 %v1378
    %1827 = vmatprep.subr.bf16.mxu0 %v1374
    %1828 = vmatpush1.bf16.msra.mxu0 %v1373
    %1829 = vmatprep.subr.bf16.mxu0 %v1369
    %1830 = vmatpush1.bf16.msra.mxu0 %v1368
    %1831 = vmatprep.subr.bf16.mxu0 %v1364
    %1832 = vmatpush1.bf16.msra.mxu0 %v1363
    %1833 = vmatprep.subr.bf16.mxu0 %v1359
    %1834 = vmatpush1.bf16.msra.mxu0 %v1358
    %1835 = vmatprep.subr.bf16.mxu0 %v1354
    %1836 = vmatpush1.bf16.msra.mxu0 %v1353
    %1837 = vmatprep.subr.bf16.mxu0 %v1349
    %1838 = vmatpush1.bf16.msra.mxu0 %v1348
    %1839 = vmatprep.subr.bf16.mxu0 %v1344
    %1840 = vmatpush1.bf16.msra.mxu0 %v1343
    %1841 = vmatprep.subr.bf16.mxu0 %v1419
    %1842 = vmatpush2.bf16.msra.mxu0 %v1418
    %1843 = vmatprep.subr.bf16.mxu0 %v1414
    %1844 = vmatpush2.bf16.msra.mxu0 %v1413
    %1845 = vmatprep.subr.bf16.mxu0 %v1409
    %1846 = vmatpush2.bf16.msra.mxu0 %v1408
    %1847 = vmatprep.subr.bf16.mxu0 %v1404
    %1848 = vmatpush2.bf16.msra.mxu0 %v1403
    %1849 = vmatprep.subr.bf16.mxu0 %v1399
    %1850 = vmatpush2.bf16.msra.mxu0 %v1398
    %1851 = vmatprep.subr.bf16.mxu0 %v1394
    %1852 = vmatpush2.bf16.msra.mxu0 %v1393
    %1853 = vmatprep.subr.bf16.mxu0 %v1389
    %1854 = vmatpush2.bf16.msra.mxu0 %v1388
    %1855 = vmatprep.subr.bf16.mxu0 %v1384
    %1856 = vmatpush2.bf16.msra.mxu0 %v1383
    %1857 = vmatprep.mubr.bf16.mxu0 %v352
    %1858 = vmatmul.mubr.bf16.gmra.mxu0 %v351
    %v1859 = vpop.f32.mrf.mxu0
    %v1860 = vadd.f32 %v1819, %v1859
    %v1861 = vpop.f32.mrf.mxu0
    %v1862 = vadd.f32 %v1821, %v1861
    %v1863 = vpop.f32.mrf.mxu0
    %v1864 = vpop.f32.mrf.mxu0
    %1865 = vdwg.mxu0
    %1866 = vmatprep.subr.bf16.mxu0 %v1459
    %1867 = vmatpush1.bf16.msra.mxu0 %v1458
    %1868 = vmatprep.subr.bf16.mxu0 %v1454
    %1869 = vmatpush1.bf16.msra.mxu0 %v1453
    %1870 = vmatprep.subr.bf16.mxu0 %v1449
    %1871 = vmatpush1.bf16.msra.mxu0 %v1448
    %1872 = vmatprep.subr.bf16.mxu0 %v1444
    %1873 = vmatpush1.bf16.msra.mxu0 %v1443
    %1874 = vmatprep.subr.bf16.mxu0 %v1439
    %1875 = vmatpush1.bf16.msra.mxu0 %v1438
    %1876 = vmatprep.subr.bf16.mxu0 %v1434
    %1877 = vmatpush1.bf16.msra.mxu0 %v1433
    %1878 = vmatprep.subr.bf16.mxu0 %v1429
    %1879 = vmatpush1.bf16.msra.mxu0 %v1428
    %1880 = vmatprep.subr.bf16.mxu0 %v1424
    %1881 = vmatpush1.bf16.msra.mxu0 %v1423
    %1882 = vmatprep.subr.bf16.mxu0 0
    %1883 = vmatpush2.bf16.msra.mxu0 0
    %1884 = vmatprep.subr.bf16.mxu0 0
    %1885 = vmatpush2.bf16.msra.mxu0 0
    %1886 = vmatprep.subr.bf16.mxu0 0
    %1887 = vmatpush2.bf16.msra.mxu0 0
    %1888 = vmatprep.subr.bf16.mxu0 0
    %1889 = vmatpush2.bf16.msra.mxu0 0
    %1890 = vmatprep.subr.bf16.mxu0 0
    %1891 = vmatpush2.bf16.msra.mxu0 0
    %1892 = vmatprep.subr.bf16.mxu0 0
    %1893 = vmatpush2.bf16.msra.mxu0 0
    %1894 = vmatprep.subr.bf16.mxu0 0
    %1895 = vmatpush2.bf16.msra.mxu0 0
    %1896 = vmatprep.subr.bf16.mxu0 0
    %1897 = vmatpush2.bf16.msra.mxu0 0
    %1898 = vmatprep.mubr.bf16.mxu0 0
    %1899 = vmatmul.mubr.bf16.gmra.mxu0 %v353
    %v1900 = vpop.f32.mrf.mxu0
    %v1901 = vadd.f32 %v1860, %v1900
    %v1902 = vpop.f32.mrf.mxu0
    %v1903 = vadd.f32 %v1862, %v1902
    %v1904 = vpop.f32.mrf.mxu0
    %v1905 = vpop.f32.mrf.mxu0
    %1906 = vdwg.mxu0
    %1907 = vmatprep.subr.bf16.mxu0 0
    %1908 = vmatpush1.bf16.msra.mxu0 %v1300
    %1909 = vmatprep.subr.bf16.mxu0 0
    %1910 = vmatpush1.bf16.msra.mxu0 %v1295
    %1911 = vmatprep.subr.bf16.mxu0 0
    %1912 = vmatpush1.bf16.msra.mxu0 %v1290
    %1913 = vmatprep.subr.bf16.mxu0 0
    %1914 = vmatpush1.bf16.msra.mxu0 %v1285
    %1915 = vmatprep.subr.bf16.mxu0 0
    %1916 = vmatpush1.bf16.msra.mxu0 %v1280
    %1917 = vmatprep.subr.bf16.mxu0 0
    %1918 = vmatpush1.bf16.msra.mxu0 %v1275
    %1919 = vmatprep.subr.bf16.mxu0 0
    %1920 = vmatpush1.bf16.msra.mxu0 %v1270
    %1921 = vmatprep.subr.bf16.mxu0 0
    %1922 = vmatpush1.bf16.msra.mxu0 %v1265
    %1923 = vmatprep.subr.bf16.mxu0 0
    %1924 = vmatpush2.bf16.msra.mxu0 %v1340
    %1925 = vmatprep.subr.bf16.mxu0 0
    %1926 = vmatpush2.bf16.msra.mxu0 %v1335
    %1927 = vmatprep.subr.bf16.mxu0 0
    %1928 = vmatpush2.bf16.msra.mxu0 %v1330
    %1929 = vmatprep.subr.bf16.mxu0 0
    %1930 = vmatpush2.bf16.msra.mxu0 %v1325
    %1931 = vmatprep.subr.bf16.mxu0 0
    %1932 = vmatpush2.bf16.msra.mxu0 %v1320
    %1933 = vmatprep.subr.bf16.mxu0 0
    %1934 = vmatpush2.bf16.msra.mxu0 %v1315
    %1935 = vmatprep.subr.bf16.mxu0 0
    %1936 = vmatpush2.bf16.msra.mxu0 %v1310
    %1937 = vmatprep.subr.bf16.mxu0 0
    %1938 = vmatpush2.bf16.msra.mxu0 %v1305
    %1939 = vmatprep.mubr.bf16.mxu0 %v350
    %1940 = vmatmul.mubr.bf16.gmra.mxu0 %v349
    %v1941 = vpop.f32.mrf.mxu0
    %v1942 = vadd.f32 %v615, %v1941
    %v1943 = vpop.f32.mrf.mxu0
    %v1944 = vpop.f32.mrf.mxu0
    %v1945 = vpop.f32.mrf.mxu0
    %1946 = vdwg.mxu0
    %1947 = vmatprep.subr.bf16.mxu0 0
    %1948 = vmatpush1.bf16.msra.mxu0 %v1380
    %1949 = vmatprep.subr.bf16.mxu0 0
    %1950 = vmatpush1.bf16.msra.mxu0 %v1375
    %1951 = vmatprep.subr.bf16.mxu0 0
    %1952 = vmatpush1.bf16.msra.mxu0 %v1370
    %1953 = vmatprep.subr.bf16.mxu0 0
    %1954 = vmatpush1.bf16.msra.mxu0 %v1365
    %1955 = vmatprep.subr.bf16.mxu0 0
    %1956 = vmatpush1.bf16.msra.mxu0 %v1360
    %1957 = vmatprep.subr.bf16.mxu0 0
    %1958 = vmatpush1.bf16.msra.mxu0 %v1355
    %1959 = vmatprep.subr.bf16.mxu0 0
    %1960 = vmatpush1.bf16.msra.mxu0 %v1350
    %1961 = vmatprep.subr.bf16.mxu0 0
    %1962 = vmatpush1.bf16.msra.mxu0 %v1345
    %1963 = vmatprep.subr.bf16.mxu0 0
    %1964 = vmatpush2.bf16.msra.mxu0 %v1420
    %1965 = vmatprep.subr.bf16.mxu0 0
    %1966 = vmatpush2.bf16.msra.mxu0 %v1415
    %1967 = vmatprep.subr.bf16.mxu0 0
    %1968 = vmatpush2.bf16.msra.mxu0 %v1410
    %1969 = vmatprep.subr.bf16.mxu0 0
    %1970 = vmatpush2.bf16.msra.mxu0 %v1405
    %1971 = vmatprep.subr.bf16.mxu0 0
    %1972 = vmatpush2.bf16.msra.mxu0 %v1400
    %1973 = vmatprep.subr.bf16.mxu0 0
    %1974 = vmatpush2.bf16.msra.mxu0 %v1395
    %1975 = vmatprep.subr.bf16.mxu0 0
    %1976 = vmatpush2.bf16.msra.mxu0 %v1390
    %1977 = vmatprep.subr.bf16.mxu0 0
    %1978 = vmatpush2.bf16.msra.mxu0 %v1385
    %1979 = vmatprep.mubr.bf16.mxu0 %v352
    %1980 = vmatmul.mubr.bf16.gmra.mxu0 %v351
    %v1981 = vpop.f32.mrf.mxu0
    %v1982 = vadd.f32 %v1942, %v1981
    %v1983 = vpop.f32.mrf.mxu0
    %v1984 = vpop.f32.mrf.mxu0
    %v1985 = vpop.f32.mrf.mxu0
    %1986 = vdwg.mxu0
    %1987 = vmatprep.subr.bf16.mxu0 0
    %1988 = vmatpush1.bf16.msra.mxu0 %v1460
    %1989 = vmatprep.subr.bf16.mxu0 0
    %1990 = vmatpush1.bf16.msra.mxu0 %v1455
    %1991 = vmatprep.subr.bf16.mxu0 0
    %1992 = vmatpush1.bf16.msra.mxu0 %v1450
    %1993 = vmatprep.subr.bf16.mxu0 0
    %1994 = vmatpush1.bf16.msra.mxu0 %v1445
    %1995 = vmatprep.subr.bf16.mxu0 0
    %1996 = vmatpush1.bf16.msra.mxu0 %v1440
    %1997 = vmatprep.subr.bf16.mxu0 0
    %1998 = vmatpush1.bf16.msra.mxu0 %v1435
    %1999 = vmatprep.subr.bf16.mxu0 0
    %2000 = vmatpush1.bf16.msra.mxu0 %v1430
    %2001 = vmatprep.subr.bf16.mxu0 0
    %2002 = vmatpush1.bf16.msra.mxu0 %v1425
    %2003 = vmatprep.subr.bf16.mxu0 0
    %2004 = vmatpush2.bf16.msra.mxu0 0
    %2005 = vmatprep.subr.bf16.mxu0 0
    %2006 = vmatpush2.bf16.msra.mxu0 0
    %2007 = vmatprep.subr.bf16.mxu0 0
    %2008 = vmatpush2.bf16.msra.mxu0 0
    %2009 = vmatprep.subr.bf16.mxu0 0
    %2010 = vmatpush2.bf16.msra.mxu0 0
    %2011 = vmatprep.subr.bf16.mxu0 0
    %2012 = vmatpush2.bf16.msra.mxu0 0
    %2013 = vmatprep.subr.bf16.mxu0 0
    %2014 = vmatpush2.bf16.msra.mxu0 0
    %2015 = vmatprep.subr.bf16.mxu0 0
    %2016 = vmatpush2.bf16.msra.mxu0 0
    %2017 = vmatprep.subr.bf16.mxu0 0
    %2018 = vmatpush2.bf16.msra.mxu0 0
    %2019 = vmatprep.mubr.bf16.mxu0 0
    %2020 = vmatmul.mubr.bf16.gmra.mxu0 %v353
    %v2021 = vpop.f32.mrf.mxu0
    %v2022 = vadd.f32 %v1982, %v2021
    %v2023 = vpop.f32.mrf.mxu0
    %v2024 = vpop.f32.mrf.mxu0
    %v2025 = vpop.f32.mrf.mxu0
    %2026 = vdwg.mxu0
    %v2027 = vmax.f32 %v1778, 0.0
    %v2028 = vmax.f32 %v1780, 0.0
    %v2029 = vmax.f32 %v1901, 0.0
    %v2030 = vmax.f32 %v1903, 0.0
    %v2031 = vmax.f32 %v2022, 0.0
    %v2032 = vpack.c.bf16 %v2027, %v2027
    %v2033 = vpack.c.bf16 %v2028, %v2028
    %v2034 = vpack.c.bf16 %v2029, %v2029
    %v2035 = vpack.c.bf16 %v2030, %v2030
    %v2036 = vpack.c.bf16 %v2031, %v2031
    %v2037 = vld [vmem:[#allocation10] sm:$0xff]
    %v2038 = vld [vmem:[#allocation10 + $0x8] sm:$0xff]
    %v2039 = vld [vmem:[#allocation10 + $0x10] sm:$0xf]
    %v2040 = vld [vmem:[#allocation10 + $0x14] sm:$0xff]
    %v2041 = vld [vmem:[#allocation10 + $0x1c] sm:$0xff]
    %v2042 = vld [vmem:[#allocation10 + $0x24] sm:$0xf]
    %v2043 = vld [vmem:[#allocation10 + $0x28] sm:$0xff]
    %v2044 = vld [vmem:[#allocation10 + $0x30] sm:$0xff]
    %v2045 = vld [vmem:[#allocation10 + $0x38] sm:$0xf]
    %v2046 = vld [vmem:[#allocation10 + $0x3c] sm:$0xff]
    %v2047 = vld [vmem:[#allocation10 + $0x44] sm:$0xff]
    %v2048 = vld [vmem:[#allocation10 + $0x4c] sm:$0xf]
    %v2049 = vld [vmem:[#allocation10 + $0x50] sm:$0xff]
    %v2050 = vld [vmem:[#allocation10 + $0x58] sm:$0xff]
    %v2051 = vld [vmem:[#allocation10 + $0x60] sm:$0xf]
    %v2052 = vld [vmem:[#allocation10 + $0x64] sm:$0xff]
    %v2053 = vld [vmem:[#allocation10 + $0x6c] sm:$0xff]
    %v2054 = vld [vmem:[#allocation10 + $0x74] sm:$0xf]
    %v2055 = vld [vmem:[#allocation10 + $0x78] sm:$0xff]
    %v2056 = vld [vmem:[#allocation10 + $0x80] sm:$0xff]
    %v2057 = vld [vmem:[#allocation10 + $0x88] sm:$0xf]
    %v2058 = vld [vmem:[#allocation10 + $0x8c] sm:$0xff]
    %v2059 = vld [vmem:[#allocation10 + $0x94] sm:$0xff]
    %v2060 = vld [vmem:[#allocation10 + $0x9c] sm:$0xf]
    %v2061 = vld [vmem:[#allocation10 + $0xa0] sm:$0xff]
    %v2062 = vld [vmem:[#allocation10 + $0xa8] sm:$0xff]
    %v2063 = vld [vmem:[#allocation10 + $0xb0] sm:$0xf]
    %v2064 = vld [vmem:[#allocation10 + $0xb4] sm:$0xff]
    %v2065 = vld [vmem:[#allocation10 + $0xbc] sm:$0xff]
    %v2066 = vld [vmem:[#allocation10 + $0xc4] sm:$0xf]
    %v2067 = vld [vmem:[#allocation10 + $0xc8] sm:$0xff]
    %v2068 = vld [vmem:[#allocation10 + $0xd0] sm:$0xff]
    %v2069 = vld [vmem:[#allocation10 + $0xd8] sm:$0xf]
    %v2070 = vld [vmem:[#allocation10 + $0xdc] sm:$0xff]
    %v2071 = vld [vmem:[#allocation10 + $0xe4] sm:$0xff]
    %v2072 = vld [vmem:[#allocation10 + $0xec] sm:$0xf]
    %v2073 = vld [vmem:[#allocation10 + $0xf0] sm:$0xff]
    %v2074 = vld [vmem:[#allocation10 + $0xf8] sm:$0xff]
    %v2075 = vld [vmem:[#allocation10 + $0x100] sm:$0xf]
    %v2076 = vld [vmem:[#allocation10 + $0x104] sm:$0xff]
    %v2077 = vld [vmem:[#allocation10 + $0x10c] sm:$0xff]
    %v2078 = vld [vmem:[#allocation10 + $0x114] sm:$0xf]
    %v2079 = vld [vmem:[#allocation10 + $0x118] sm:$0xff]
    %v2080 = vld [vmem:[#allocation10 + $0x120] sm:$0xff]
    %v2081 = vld [vmem:[#allocation10 + $0x128] sm:$0xf]
    %v2082 = vld [vmem:[#allocation10 + $0x12c] sm:$0xff]
    %v2083 = vld [vmem:[#allocation10 + $0x134] sm:$0xff]
    %v2084 = vld [vmem:[#allocation10 + $0x13c] sm:$0xf]
    %v2085 = vld [vmem:[#allocation10 + $0x140] sm:$0xff]
    %v2086 = vld [vmem:[#allocation10 + $0x148] sm:$0xff]
    %v2087 = vld [vmem:[#allocation10 + $0x150] sm:$0xf]
    %v2088 = vld [vmem:[#allocation10 + $0x154] sm:$0xff]
    %v2089 = vld [vmem:[#allocation10 + $0x15c] sm:$0xff]
    %v2090 = vld [vmem:[#allocation10 + $0x164] sm:$0xf]
    %v2091 = vld [vmem:[#allocation10 + $0x168] sm:$0xff]
    %v2092 = vld [vmem:[#allocation10 + $0x170] sm:$0xff]
    %v2093 = vld [vmem:[#allocation10 + $0x178] sm:$0xf]
    %v2094 = vld [vmem:[#allocation10 + $0x17c] sm:$0xff]
    %v2095 = vld [vmem:[#allocation10 + $0x184] sm:$0xff]
    %v2096 = vld [vmem:[#allocation10 + $0x18c] sm:$0xf]
    %v2097 = vld [vmem:[#allocation10 + $0x190] sm:$0xff]
    %v2098 = vld [vmem:[#allocation10 + $0x198] sm:$0xff]
    %v2099 = vld [vmem:[#allocation10 + $0x1a0] sm:$0xf]
    %v2100 = vld [vmem:[#allocation10 + $0x1a4] sm:$0xff]
    %v2101 = vld [vmem:[#allocation10 + $0x1ac] sm:$0xff]
    %v2102 = vld [vmem:[#allocation10 + $0x1b4] sm:$0xf]
    %v2103 = vld [vmem:[#allocation10 + $0x1b8] sm:$0xff]
    %v2104 = vld [vmem:[#allocation10 + $0x1c0] sm:$0xff]
    %v2105 = vld [vmem:[#allocation10 + $0x1c8] sm:$0xf]
    %v2106 = vld [vmem:[#allocation10 + $0x1cc] sm:$0xff]
    %v2107 = vld [vmem:[#allocation10 + $0x1d4] sm:$0xff]
    %v2108 = vld [vmem:[#allocation10 + $0x1dc] sm:$0xf]
    %v2109 = vld [vmem:[#allocation10 + $0x1e0] sm:$0xff]
    %v2110 = vld [vmem:[#allocation10 + $0x1e8] sm:$0xff]
    %v2111 = vld [vmem:[#allocation10 + $0x1f0] sm:$0xf]
    %v2112 = vld [vmem:[#allocation10 + $0x1f4] sm:$0xff]
    %v2113 = vld [vmem:[#allocation10 + $0x1fc] sm:$0xff]
    %v2114 = vld [vmem:[#allocation10 + $0x204] sm:$0xf]
    %v2115 = vld [vmem:[#allocation10 + $0x208] sm:$0xff]
    %v2116 = vld [vmem:[#allocation10 + $0x210] sm:$0xff]
    %v2117 = vld [vmem:[#allocation10 + $0x218] sm:$0xf]
    %v2118 = vld [vmem:[#allocation10 + $0x21c] sm:$0xff]
    %v2119 = vld [vmem:[#allocation10 + $0x224] sm:$0xff]
    %v2120 = vld [vmem:[#allocation10 + $0x22c] sm:$0xf]
    %v2121 = vld [vmem:[#allocation10 + $0x230] sm:$0xff]
    %v2122 = vld [vmem:[#allocation10 + $0x238] sm:$0xff]
    %v2123 = vld [vmem:[#allocation10 + $0x240] sm:$0xf]
    %v2124 = vld [vmem:[#allocation10 + $0x244] sm:$0xff]
    %v2125 = vld [vmem:[#allocation10 + $0x24c] sm:$0xff]
    %v2126 = vld [vmem:[#allocation10 + $0x254] sm:$0xf]
    %v2127 = vld [vmem:[#allocation10 + $0x258] sm:$0xff]
    %v2128 = vld [vmem:[#allocation10 + $0x260] sm:$0xff]
    %v2129 = vld [vmem:[#allocation10 + $0x268] sm:$0xf]
    %v2130 = vld [vmem:[#allocation10 + $0x26c] sm:$0xff]
    %v2131 = vld [vmem:[#allocation10 + $0x274] sm:$0xff]
    %v2132 = vld [vmem:[#allocation10 + $0x27c] sm:$0xf]
    %v2133 = vld [vmem:[#allocation10 + $0x280] sm:$0xff]
    %v2134 = vld [vmem:[#allocation10 + $0x288] sm:$0xff]
    %v2135 = vld [vmem:[#allocation10 + $0x290] sm:$0xf]
    %v2136 = vld [vmem:[#allocation10 + $0x294] sm:$0xff]
    %v2137 = vld [vmem:[#allocation10 + $0x29c] sm:$0xff]
    %v2138 = vld [vmem:[#allocation10 + $0x2a4] sm:$0xf]
    %v2139 = vld [vmem:[#allocation10 + $0x2a8] sm:$0xff]
    %v2140 = vld [vmem:[#allocation10 + $0x2b0] sm:$0xff]
    %v2141 = vld [vmem:[#allocation10 + $0x2b8] sm:$0xf]
    %v2142 = vld [vmem:[#allocation10 + $0x2bc] sm:$0xff]
    %v2143 = vld [vmem:[#allocation10 + $0x2c4] sm:$0xff]
    %v2144 = vld [vmem:[#allocation10 + $0x2cc] sm:$0xf]
    %v2145 = vld [vmem:[#allocation10 + $0x2d0] sm:$0xff]
    %v2146 = vld [vmem:[#allocation10 + $0x2d8] sm:$0xff]
    %v2147 = vld [vmem:[#allocation10 + $0x2e0] sm:$0xf]
    %v2148 = vld [vmem:[#allocation10 + $0x2e4] sm:$0xff]
    %v2149 = vld [vmem:[#allocation10 + $0x2ec] sm:$0xff]
    %v2150 = vld [vmem:[#allocation10 + $0x2f4] sm:$0xf]
    %v2151 = vld [vmem:[#allocation10 + $0x2f8] sm:$0xff]
    %v2152 = vld [vmem:[#allocation10 + $0x300] sm:$0xff]
    %v2153 = vld [vmem:[#allocation10 + $0x308] sm:$0xf]
    %v2154 = vld [vmem:[#allocation10 + $0x30c] sm:$0xff]
    %v2155 = vld [vmem:[#allocation10 + $0x314] sm:$0xff]
    %v2156 = vld [vmem:[#allocation10 + $0x31c] sm:$0xf]
    %v2157 = vld [vmem:[#allocation10 + $0x320] sm:$0xff]
    %v2158 = vld [vmem:[#allocation10 + $0x328] sm:$0xff]
    %v2159 = vld [vmem:[#allocation10 + $0x330] sm:$0xf]
    %v2160 = vld [vmem:[#allocation10 + $0x334] sm:$0xff]
    %v2161 = vld [vmem:[#allocation10 + $0x33c] sm:$0xff]
    %v2162 = vld [vmem:[#allocation10 + $0x344] sm:$0xf]
    %v2163 = vld [vmem:[#allocation10 + $0x348] sm:$0xff]
    %v2164 = vld [vmem:[#allocation10 + $0x350] sm:$0xff]
    %v2165 = vld [vmem:[#allocation10 + $0x358] sm:$0xf]
    %v2166 = vld [vmem:[#allocation10 + $0x35c] sm:$0xff]
    %v2167 = vld [vmem:[#allocation10 + $0x364] sm:$0xff]
    %v2168 = vld [vmem:[#allocation10 + $0x36c] sm:$0xf]
    %v2169 = vld [vmem:[#allocation10 + $0x370] sm:$0xff]
    %v2170 = vld [vmem:[#allocation10 + $0x378] sm:$0xff]
    %v2171 = vld [vmem:[#allocation10 + $0x380] sm:$0xf]
    %v2172 = vld [vmem:[#allocation10 + $0x384] sm:$0xff]
    %v2173 = vld [vmem:[#allocation10 + $0x38c] sm:$0xff]
    %v2174 = vld [vmem:[#allocation10 + $0x394] sm:$0xf]
    %v2175 = vld [vmem:[#allocation10 + $0x398] sm:$0xff]
    %v2176 = vld [vmem:[#allocation10 + $0x3a0] sm:$0xff]
    %v2177 = vld [vmem:[#allocation10 + $0x3a8] sm:$0xf]
    %v2178 = vld [vmem:[#allocation10 + $0x3ac] sm:$0xff]
    %v2179 = vld [vmem:[#allocation10 + $0x3b4] sm:$0xff]
    %v2180 = vld [vmem:[#allocation10 + $0x3bc] sm:$0xf]
    %v2181 = vld [vmem:[#allocation10 + $0x3c0] sm:$0xff]
    %v2182 = vld [vmem:[#allocation10 + $0x3c8] sm:$0xff]
    %v2183 = vld [vmem:[#allocation10 + $0x3d0] sm:$0xf]
    %v2184 = vld [vmem:[#allocation10 + $0x3d4] sm:$0xff]
    %v2185 = vld [vmem:[#allocation10 + $0x3dc] sm:$0xff]
    %v2186 = vld [vmem:[#allocation10 + $0x3e4] sm:$0xf]
    %v2187 = vld [vmem:[#allocation10 + $0x3e8] sm:$0xff]
    %v2188 = vld [vmem:[#allocation10 + $0x3f0] sm:$0xff]
    %v2189 = vld [vmem:[#allocation10 + $0x3f8] sm:$0xf]
    %v2190 = vld [vmem:[#allocation10 + $0x3fc] sm:$0xff]
    %v2191 = vld [vmem:[#allocation10 + $0x404] sm:$0xff]
    %v2192 = vld [vmem:[#allocation10 + $0x40c] sm:$0xf]
    %v2193 = vld [vmem:[#allocation10 + $0x410] sm:$0xff]
    %v2194 = vld [vmem:[#allocation10 + $0x418] sm:$0xff]
    %v2195 = vld [vmem:[#allocation10 + $0x420] sm:$0xf]
    %v2196 = vld [vmem:[#allocation10 + $0x424] sm:$0xff]
    %v2197 = vld [vmem:[#allocation10 + $0x42c] sm:$0xff]
    %v2198 = vld [vmem:[#allocation10 + $0x434] sm:$0xf]
    %v2199 = vld [vmem:[#allocation10 + $0x438] sm:$0xff]
    %v2200 = vld [vmem:[#allocation10 + $0x440] sm:$0xff]
    %v2201 = vld [vmem:[#allocation10 + $0x448] sm:$0xf]
    %v2202 = vld [vmem:[#allocation10 + $0x44c] sm:$0xff]
    %v2203 = vld [vmem:[#allocation10 + $0x454] sm:$0xff]
    %v2204 = vld [vmem:[#allocation10 + $0x45c] sm:$0xf]
    %v2205 = vld [vmem:[#allocation10 + $0x460] sm:$0xff]
    %v2206 = vld [vmem:[#allocation10 + $0x468] sm:$0xff]
    %v2207 = vld [vmem:[#allocation10 + $0x470] sm:$0xf]
    %v2208 = vld [vmem:[#allocation10 + $0x474] sm:$0xff]
    %v2209 = vld [vmem:[#allocation10 + $0x47c] sm:$0xff]
    %v2210 = vld [vmem:[#allocation10 + $0x484] sm:$0xf]
    %v2211 = vld [vmem:[#allocation10 + $0x488] sm:$0xff]
    %v2212 = vld [vmem:[#allocation10 + $0x490] sm:$0xff]
    %v2213 = vld [vmem:[#allocation10 + $0x498] sm:$0xf]
    %v2214 = vld [vmem:[#allocation10 + $0x49c] sm:$0xff]
    %v2215 = vld [vmem:[#allocation10 + $0x4a4] sm:$0xff]
    %v2216 = vld [vmem:[#allocation10 + $0x4ac] sm:$0xf]
    %v2217 = vld [vmem:[#allocation10 + $0x4b0] sm:$0xff]
    %v2218 = vld [vmem:[#allocation10 + $0x4b8] sm:$0xff]
    %v2219 = vld [vmem:[#allocation10 + $0x4c0] sm:$0xf]
    %v2220 = vld [vmem:[#allocation10 + $0x4c4] sm:$0xff]
    %v2221 = vld [vmem:[#allocation10 + $0x4cc] sm:$0xff]
    %v2222 = vld [vmem:[#allocation10 + $0x4d4] sm:$0xf]
    %v2223 = vld [vmem:[#allocation10 + $0x4d8] sm:$0xff]
    %v2224 = vld [vmem:[#allocation10 + $0x4e0] sm:$0xff]
    %v2225 = vld [vmem:[#allocation10 + $0x4e8] sm:$0xf]
    %v2226 = vld [vmem:[#allocation10 + $0x4ec] sm:$0xff]
    %v2227 = vld [vmem:[#allocation10 + $0x4f4] sm:$0xff]
    %v2228 = vld [vmem:[#allocation10 + $0x4fc] sm:$0xf]
    %v2229 = vld [vmem:[#allocation10 + $0x500] sm:$0xff]
    %v2230 = vld [vmem:[#allocation10 + $0x508] sm:$0xff]
    %v2231 = vld [vmem:[#allocation10 + $0x510] sm:$0xf]
    %v2232 = vld [vmem:[#allocation10 + $0x514] sm:$0xff]
    %v2233 = vld [vmem:[#allocation10 + $0x51c] sm:$0xff]
    %v2234 = vld [vmem:[#allocation10 + $0x524] sm:$0xf]
    %v2235 = vld [vmem:[#allocation10 + $0x528] sm:$0xff]
    %v2236 = vld [vmem:[#allocation10 + $0x530] sm:$0xff]
    %v2237 = vld [vmem:[#allocation10 + $0x538] sm:$0xf]
    %v2238 = vld [vmem:[#allocation10 + $0x53c] sm:$0xff]
    %v2239 = vld [vmem:[#allocation10 + $0x544] sm:$0xff]
    %v2240 = vld [vmem:[#allocation10 + $0x54c] sm:$0xf]
    %v2241 = vld [vmem:[#allocation10 + $0x550] sm:$0xff]
    %v2242 = vld [vmem:[#allocation10 + $0x558] sm:$0xff]
    %v2243 = vld [vmem:[#allocation10 + $0x560] sm:$0xf]
    %v2244 = vld [vmem:[#allocation10 + $0x564] sm:$0xff]
    %v2245 = vld [vmem:[#allocation10 + $0x56c] sm:$0xff]
    %v2246 = vld [vmem:[#allocation10 + $0x574] sm:$0xf]
    %v2247 = vld [vmem:[#allocation10 + $0x578] sm:$0xff]
    %v2248 = vld [vmem:[#allocation10 + $0x580] sm:$0xff]
    %v2249 = vld [vmem:[#allocation10 + $0x588] sm:$0xf]
    %v2250 = vld [vmem:[#allocation10 + $0x58c] sm:$0xff]
    %v2251 = vld [vmem:[#allocation10 + $0x594] sm:$0xff]
    %v2252 = vld [vmem:[#allocation10 + $0x59c] sm:$0xf]
    %v2253 = vld [vmem:[#allocation10 + $0x5a0] sm:$0xff]
    %v2254 = vld [vmem:[#allocation10 + $0x5a8] sm:$0xff]
    %v2255 = vld [vmem:[#allocation10 + $0x5b0] sm:$0xf]
    %v2256 = vld [vmem:[#allocation10 + $0x5b4] sm:$0xff]
    %v2257 = vld [vmem:[#allocation10 + $0x5bc] sm:$0xff]
    %v2258 = vld [vmem:[#allocation10 + $0x5c4] sm:$0xf]
    %v2259 = vld [vmem:[#allocation10 + $0x5c8] sm:$0xff]
    %v2260 = vld [vmem:[#allocation10 + $0x5d0] sm:$0xff]
    %v2261 = vld [vmem:[#allocation10 + $0x5d8] sm:$0xf]
    %v2262 = vld [vmem:[#allocation10 + $0x5dc] sm:$0xff]
    %v2263 = vld [vmem:[#allocation10 + $0x5e4] sm:$0xff]
    %v2264 = vld [vmem:[#allocation10 + $0x5ec] sm:$0xf]
    %v2265 = vld [vmem:[#allocation10 + $0x5f0] sm:$0xff]
    %v2266 = vld [vmem:[#allocation10 + $0x5f8] sm:$0xff]
    %v2267 = vld [vmem:[#allocation10 + $0x600] sm:$0xf]
    %v2268 = vld [vmem:[#allocation10 + $0x604] sm:$0xff]
    %v2269 = vld [vmem:[#allocation10 + $0x60c] sm:$0xff]
    %v2270 = vld [vmem:[#allocation10 + $0x614] sm:$0xf]
    %v2271 = vld [vmem:[#allocation10 + $0x618] sm:$0xff]
    %v2272 = vld [vmem:[#allocation10 + $0x620] sm:$0xff]
    %v2273 = vld [vmem:[#allocation10 + $0x628] sm:$0xf]
    %v2274 = vld [vmem:[#allocation10 + $0x62c] sm:$0xff]
    %v2275 = vld [vmem:[#allocation10 + $0x634] sm:$0xff]
    %v2276 = vld [vmem:[#allocation10 + $0x63c] sm:$0xf]
    %v2277 = vld [vmem:[%s7] sm:$0x1f]
    %v2279 = vlaneseq
    %v2280 = vshrl.u32 %v2279, 7
    %v2281 = vsub.s32 0, %v2280
    %v2282 = vrot.slane %v2277, %v2281
    %v2283 = vlaneseq
    %v2284 = vshrl.u32 %v2283, 7
    %v2285 = vsub.s32 1, %v2284
    %v2286 = vrot.slane %v2277, %v2285
    %v2287 = vlaneseq
    %v2288 = vshrl.u32 %v2287, 7
    %v2289 = vsub.s32 2, %v2288
    %v2290 = vrot.slane %v2277, %v2289
    %v2291 = vlaneseq
    %v2292 = vshrl.u32 %v2291, 7
    %v2293 = vsub.s32 3, %v2292
    %v2294 = vrot.slane %v2277, %v2293
    %v2295 = vlaneseq
    %v2296 = vshrl.u32 %v2295, 7
    %v2297 = vsub.s32 4, %v2296
    %v2298 = vrot.slane %v2277, %v2297
    %v2544 = vunpack.c.l.b16 %v2037
    %v2545 = vunpack.c.h.b16 %v2037
    %v2546 = vunpack.c.l.b16 %v2038
    %v2547 = vunpack.c.h.b16 %v2038
    %v2548 = vunpack.c.l.b16 %v2039
    %v2549 = vunpack.c.l.b16 %v2040
    %v2550 = vunpack.c.h.b16 %v2040
    %v2551 = vunpack.c.l.b16 %v2041
    %v2552 = vunpack.c.h.b16 %v2041
    %v2553 = vunpack.c.l.b16 %v2042
    %v2554 = vunpack.c.l.b16 %v2043
    %v2555 = vunpack.c.h.b16 %v2043
    %v2556 = vunpack.c.l.b16 %v2044
    %v2557 = vunpack.c.h.b16 %v2044
    %v2558 = vunpack.c.l.b16 %v2045
    %v2559 = vunpack.c.l.b16 %v2046
    %v2560 = vunpack.c.h.b16 %v2046
    %v2561 = vunpack.c.l.b16 %v2047
    %v2562 = vunpack.c.h.b16 %v2047
    %v2563 = vunpack.c.l.b16 %v2048
    %v2564 = vunpack.c.l.b16 %v2049
    %v2565 = vunpack.c.h.b16 %v2049
    %v2566 = vunpack.c.l.b16 %v2050
    %v2567 = vunpack.c.h.b16 %v2050
    %v2568 = vunpack.c.l.b16 %v2051
    %v2569 = vunpack.c.l.b16 %v2052
    %v2570 = vunpack.c.h.b16 %v2052
    %v2571 = vunpack.c.l.b16 %v2053
    %v2572 = vunpack.c.h.b16 %v2053
    %v2573 = vunpack.c.l.b16 %v2054
    %v2574 = vunpack.c.l.b16 %v2055
    %v2575 = vunpack.c.h.b16 %v2055
    %v2576 = vunpack.c.l.b16 %v2056
    %v2577 = vunpack.c.h.b16 %v2056
    %v2578 = vunpack.c.l.b16 %v2057
    %v2579 = vunpack.c.l.b16 %v2058
    %v2580 = vunpack.c.h.b16 %v2058
    %v2581 = vunpack.c.l.b16 %v2059
    %v2582 = vunpack.c.h.b16 %v2059
    %v2583 = vunpack.c.l.b16 %v2060
    %v2584 = vunpack.c.l.b16 %v2061
    %v2585 = vunpack.c.h.b16 %v2061
    %v2586 = vunpack.c.l.b16 %v2062
    %v2587 = vunpack.c.h.b16 %v2062
    %v2588 = vunpack.c.l.b16 %v2063
    %v2589 = vunpack.c.l.b16 %v2064
    %v2590 = vunpack.c.h.b16 %v2064
    %v2591 = vunpack.c.l.b16 %v2065
    %v2592 = vunpack.c.h.b16 %v2065
    %v2593 = vunpack.c.l.b16 %v2066
    %v2594 = vunpack.c.l.b16 %v2067
    %v2595 = vunpack.c.h.b16 %v2067
    %v2596 = vunpack.c.l.b16 %v2068
    %v2597 = vunpack.c.h.b16 %v2068
    %v2598 = vunpack.c.l.b16 %v2069
    %v2599 = vunpack.c.l.b16 %v2070
    %v2600 = vunpack.c.h.b16 %v2070
    %v2601 = vunpack.c.l.b16 %v2071
    %v2602 = vunpack.c.h.b16 %v2071
    %v2603 = vunpack.c.l.b16 %v2072
    %v2604 = vunpack.c.l.b16 %v2073
    %v2605 = vunpack.c.h.b16 %v2073
    %v2606 = vunpack.c.l.b16 %v2074
    %v2607 = vunpack.c.h.b16 %v2074
    %v2608 = vunpack.c.l.b16 %v2075
    %v2609 = vunpack.c.l.b16 %v2076
    %v2610 = vunpack.c.h.b16 %v2076
    %v2611 = vunpack.c.l.b16 %v2077
    %v2612 = vunpack.c.h.b16 %v2077
    %v2613 = vunpack.c.l.b16 %v2078
    %v2614 = vunpack.c.l.b16 %v2079
    %v2615 = vunpack.c.h.b16 %v2079
    %v2616 = vunpack.c.l.b16 %v2080
    %v2617 = vunpack.c.h.b16 %v2080
    %v2618 = vunpack.c.l.b16 %v2081
    %v2619 = vunpack.c.l.b16 %v2082
    %v2620 = vunpack.c.h.b16 %v2082
    %v2621 = vunpack.c.l.b16 %v2083
    %v2622 = vunpack.c.h.b16 %v2083
    %v2623 = vunpack.c.l.b16 %v2084
    %v2624 = vunpack.c.l.b16 %v2085
    %v2625 = vunpack.c.h.b16 %v2085
    %v2626 = vunpack.c.l.b16 %v2086
    %v2627 = vunpack.c.h.b16 %v2086
    %v2628 = vunpack.c.l.b16 %v2087
    %v2629 = vunpack.c.l.b16 %v2088
    %v2630 = vunpack.c.h.b16 %v2088
    %v2631 = vunpack.c.l.b16 %v2089
    %v2632 = vunpack.c.h.b16 %v2089
    %v2633 = vunpack.c.l.b16 %v2090
    %v2634 = vunpack.c.l.b16 %v2091
    %v2635 = vunpack.c.h.b16 %v2091
    %v2636 = vunpack.c.l.b16 %v2092
    %v2637 = vunpack.c.h.b16 %v2092
    %v2638 = vunpack.c.l.b16 %v2093
    %v2639 = vunpack.c.l.b16 %v2094
    %v2640 = vunpack.c.h.b16 %v2094
    %v2641 = vunpack.c.l.b16 %v2095
    %v2642 = vunpack.c.h.b16 %v2095
    %v2643 = vunpack.c.l.b16 %v2096
    %v2644 = vunpack.c.l.b16 %v2097
    %v2645 = vunpack.c.h.b16 %v2097
    %v2646 = vunpack.c.l.b16 %v2098
    %v2647 = vunpack.c.h.b16 %v2098
    %v2648 = vunpack.c.l.b16 %v2099
    %v2649 = vunpack.c.l.b16 %v2100
    %v2650 = vunpack.c.h.b16 %v2100
    %v2651 = vunpack.c.l.b16 %v2101
    %v2652 = vunpack.c.h.b16 %v2101
    %v2653 = vunpack.c.l.b16 %v2102
    %v2654 = vunpack.c.l.b16 %v2103
    %v2655 = vunpack.c.h.b16 %v2103
    %v2656 = vunpack.c.l.b16 %v2104
    %v2657 = vunpack.c.h.b16 %v2104
    %v2658 = vunpack.c.l.b16 %v2105
    %v2659 = vunpack.c.l.b16 %v2106
    %v2660 = vunpack.c.h.b16 %v2106
    %v2661 = vunpack.c.l.b16 %v2107
    %v2662 = vunpack.c.h.b16 %v2107
    %v2663 = vunpack.c.l.b16 %v2108
    %v2664 = vunpack.c.l.b16 %v2109
    %v2665 = vunpack.c.h.b16 %v2109
    %v2666 = vunpack.c.l.b16 %v2110
    %v2667 = vunpack.c.h.b16 %v2110
    %v2668 = vunpack.c.l.b16 %v2111
    %v2669 = vunpack.c.l.b16 %v2112
    %v2670 = vunpack.c.h.b16 %v2112
    %v2671 = vunpack.c.l.b16 %v2113
    %v2672 = vunpack.c.h.b16 %v2113
    %v2673 = vunpack.c.l.b16 %v2114
    %v2674 = vunpack.c.l.b16 %v2115
    %v2675 = vunpack.c.h.b16 %v2115
    %v2676 = vunpack.c.l.b16 %v2116
    %v2677 = vunpack.c.h.b16 %v2116
    %v2678 = vunpack.c.l.b16 %v2117
    %v2679 = vunpack.c.l.b16 %v2118
    %v2680 = vunpack.c.h.b16 %v2118
    %v2681 = vunpack.c.l.b16 %v2119
    %v2682 = vunpack.c.h.b16 %v2119
    %v2683 = vunpack.c.l.b16 %v2120
    %v2684 = vunpack.c.l.b16 %v2121
    %v2685 = vunpack.c.h.b16 %v2121
    %v2686 = vunpack.c.l.b16 %v2122
    %v2687 = vunpack.c.h.b16 %v2122
    %v2688 = vunpack.c.l.b16 %v2123
    %v2689 = vunpack.c.l.b16 %v2124
    %v2690 = vunpack.c.h.b16 %v2124
    %v2691 = vunpack.c.l.b16 %v2125
    %v2692 = vunpack.c.h.b16 %v2125
    %v2693 = vunpack.c.l.b16 %v2126
    %v2694 = vunpack.c.l.b16 %v2127
    %v2695 = vunpack.c.h.b16 %v2127
    %v2696 = vunpack.c.l.b16 %v2128
    %v2697 = vunpack.c.h.b16 %v2128
    %v2698 = vunpack.c.l.b16 %v2129
    %v2699 = vunpack.c.l.b16 %v2130
    %v2700 = vunpack.c.h.b16 %v2130
    %v2701 = vunpack.c.l.b16 %v2131
    %v2702 = vunpack.c.h.b16 %v2131
    %v2703 = vunpack.c.l.b16 %v2132
    %v2704 = vunpack.c.l.b16 %v2133
    %v2705 = vunpack.c.h.b16 %v2133
    %v2706 = vunpack.c.l.b16 %v2134
    %v2707 = vunpack.c.h.b16 %v2134
    %v2708 = vunpack.c.l.b16 %v2135
    %v2709 = vunpack.c.l.b16 %v2136
    %v2710 = vunpack.c.h.b16 %v2136
    %v2711 = vunpack.c.l.b16 %v2137
    %v2712 = vunpack.c.h.b16 %v2137
    %v2713 = vunpack.c.l.b16 %v2138
    %v2714 = vunpack.c.l.b16 %v2139
    %v2715 = vunpack.c.h.b16 %v2139
    %v2716 = vunpack.c.l.b16 %v2140
    %v2717 = vunpack.c.h.b16 %v2140
    %v2718 = vunpack.c.l.b16 %v2141
    %v2719 = vunpack.c.l.b16 %v2142
    %v2720 = vunpack.c.h.b16 %v2142
    %v2721 = vunpack.c.l.b16 %v2143
    %v2722 = vunpack.c.h.b16 %v2143
    %v2723 = vunpack.c.l.b16 %v2144
    %v2724 = vunpack.c.l.b16 %v2145
    %v2725 = vunpack.c.h.b16 %v2145
    %v2726 = vunpack.c.l.b16 %v2146
    %v2727 = vunpack.c.h.b16 %v2146
    %v2728 = vunpack.c.l.b16 %v2147
    %v2729 = vunpack.c.l.b16 %v2148
    %v2730 = vunpack.c.h.b16 %v2148
    %v2731 = vunpack.c.l.b16 %v2149
    %v2732 = vunpack.c.h.b16 %v2149
    %v2733 = vunpack.c.l.b16 %v2150
    %v2734 = vunpack.c.l.b16 %v2151
    %v2735 = vunpack.c.h.b16 %v2151
    %v2736 = vunpack.c.l.b16 %v2152
    %v2737 = vunpack.c.h.b16 %v2152
    %v2738 = vunpack.c.l.b16 %v2153
    %v2739 = vunpack.c.l.b16 %v2154
    %v2740 = vunpack.c.h.b16 %v2154
    %v2741 = vunpack.c.l.b16 %v2155
    %v2742 = vunpack.c.h.b16 %v2155
    %v2743 = vunpack.c.l.b16 %v2156
    %v2744 = vunpack.c.l.b16 %v2157
    %v2745 = vunpack.c.h.b16 %v2157
    %v2746 = vunpack.c.l.b16 %v2158
    %v2747 = vunpack.c.h.b16 %v2158
    %v2748 = vunpack.c.l.b16 %v2159
    %v2749 = vunpack.c.l.b16 %v2160
    %v2750 = vunpack.c.h.b16 %v2160
    %v2751 = vunpack.c.l.b16 %v2161
    %v2752 = vunpack.c.h.b16 %v2161
    %v2753 = vunpack.c.l.b16 %v2162
    %v2754 = vunpack.c.l.b16 %v2163
    %v2755 = vunpack.c.h.b16 %v2163
    %v2756 = vunpack.c.l.b16 %v2164
    %v2757 = vunpack.c.h.b16 %v2164
    %v2758 = vunpack.c.l.b16 %v2165
    %v2759 = vunpack.c.l.b16 %v2166
    %v2760 = vunpack.c.h.b16 %v2166
    %v2761 = vunpack.c.l.b16 %v2167
    %v2762 = vunpack.c.h.b16 %v2167
    %v2763 = vunpack.c.l.b16 %v2168
    %v2764 = vunpack.c.l.b16 %v2169
    %v2765 = vunpack.c.h.b16 %v2169
    %v2766 = vunpack.c.l.b16 %v2170
    %v2767 = vunpack.c.h.b16 %v2170
    %v2768 = vunpack.c.l.b16 %v2171
    %v2769 = vunpack.c.l.b16 %v2172
    %v2770 = vunpack.c.h.b16 %v2172
    %v2771 = vunpack.c.l.b16 %v2173
    %v2772 = vunpack.c.h.b16 %v2173
    %v2773 = vunpack.c.l.b16 %v2174
    %v2774 = vunpack.c.l.b16 %v2175
    %v2775 = vunpack.c.h.b16 %v2175
    %v2776 = vunpack.c.l.b16 %v2176
    %v2777 = vunpack.c.h.b16 %v2176
    %v2778 = vunpack.c.l.b16 %v2177
    %v2779 = vunpack.c.l.b16 %v2178
    %v2780 = vunpack.c.h.b16 %v2178
    %v2781 = vunpack.c.l.b16 %v2179
    %v2782 = vunpack.c.h.b16 %v2179
    %v2783 = vunpack.c.l.b16 %v2180
    %v2784 = vunpack.c.l.b16 %v2181
    %v2785 = vunpack.c.h.b16 %v2181
    %v2786 = vunpack.c.l.b16 %v2182
    %v2787 = vunpack.c.h.b16 %v2182
    %v2788 = vunpack.c.l.b16 %v2183
    %v2789 = vunpack.c.l.b16 %v2184
    %v2790 = vunpack.c.h.b16 %v2184
    %v2791 = vunpack.c.l.b16 %v2185
    %v2792 = vunpack.c.h.b16 %v2185
    %v2793 = vunpack.c.l.b16 %v2186
    %v2794 = vunpack.c.l.b16 %v2187
    %v2795 = vunpack.c.h.b16 %v2187
    %v2796 = vunpack.c.l.b16 %v2188
    %v2797 = vunpack.c.h.b16 %v2188
    %v2798 = vunpack.c.l.b16 %v2189
    %v2799 = vunpack.c.l.b16 %v2190
    %v2800 = vunpack.c.h.b16 %v2190
    %v2801 = vunpack.c.l.b16 %v2191
    %v2802 = vunpack.c.h.b16 %v2191
    %v2803 = vunpack.c.l.b16 %v2192
    %v2804 = vunpack.c.l.b16 %v2193
    %v2805 = vunpack.c.h.b16 %v2193
    %v2806 = vunpack.c.l.b16 %v2194
    %v2807 = vunpack.c.h.b16 %v2194
    %v2808 = vunpack.c.l.b16 %v2195
    %v2809 = vunpack.c.l.b16 %v2196
    %v2810 = vunpack.c.h.b16 %v2196
    %v2811 = vunpack.c.l.b16 %v2197
    %v2812 = vunpack.c.h.b16 %v2197
    %v2813 = vunpack.c.l.b16 %v2198
    %v2814 = vunpack.c.l.b16 %v2199
    %v2815 = vunpack.c.h.b16 %v2199
    %v2816 = vunpack.c.l.b16 %v2200
    %v2817 = vunpack.c.h.b16 %v2200
    %v2818 = vunpack.c.l.b16 %v2201
    %v2819 = vunpack.c.l.b16 %v2202
    %v2820 = vunpack.c.h.b16 %v2202
    %v2821 = vunpack.c.l.b16 %v2203
    %v2822 = vunpack.c.h.b16 %v2203
    %v2823 = vunpack.c.l.b16 %v2204
    %v2824 = vunpack.c.l.b16 %v2205
    %v2825 = vunpack.c.h.b16 %v2205
    %v2826 = vunpack.c.l.b16 %v2206
    %v2827 = vunpack.c.h.b16 %v2206
    %v2828 = vunpack.c.l.b16 %v2207
    %v2829 = vunpack.c.l.b16 %v2208
    %v2830 = vunpack.c.h.b16 %v2208
    %v2831 = vunpack.c.l.b16 %v2209
    %v2832 = vunpack.c.h.b16 %v2209
    %v2833 = vunpack.c.l.b16 %v2210
    %v2834 = vunpack.c.l.b16 %v2211
    %v2835 = vunpack.c.h.b16 %v2211
    %v2836 = vunpack.c.l.b16 %v2212
    %v2837 = vunpack.c.h.b16 %v2212
    %v2838 = vunpack.c.l.b16 %v2213
    %v2839 = vunpack.c.l.b16 %v2214
    %v2840 = vunpack.c.h.b16 %v2214
    %v2841 = vunpack.c.l.b16 %v2215
    %v2842 = vunpack.c.h.b16 %v2215
    %v2843 = vunpack.c.l.b16 %v2216
    %v2844 = vunpack.c.l.b16 %v2217
    %v2845 = vunpack.c.h.b16 %v2217
    %v2846 = vunpack.c.l.b16 %v2218
    %v2847 = vunpack.c.h.b16 %v2218
    %v2848 = vunpack.c.l.b16 %v2219
    %v2849 = vunpack.c.l.b16 %v2220
    %v2850 = vunpack.c.h.b16 %v2220
    %v2851 = vunpack.c.l.b16 %v2221
    %v2852 = vunpack.c.h.b16 %v2221
    %v2853 = vunpack.c.l.b16 %v2222
    %v2854 = vunpack.c.l.b16 %v2223
    %v2855 = vunpack.c.h.b16 %v2223
    %v2856 = vunpack.c.l.b16 %v2224
    %v2857 = vunpack.c.h.b16 %v2224
    %v2858 = vunpack.c.l.b16 %v2225
    %v2859 = vunpack.c.l.b16 %v2226
    %v2860 = vunpack.c.h.b16 %v2226
    %v2861 = vunpack.c.l.b16 %v2227
    %v2862 = vunpack.c.h.b16 %v2227
    %v2863 = vunpack.c.l.b16 %v2228
    %v2864 = vunpack.c.l.b16 %v2229
    %v2865 = vunpack.c.h.b16 %v2229
    %v2866 = vunpack.c.l.b16 %v2230
    %v2867 = vunpack.c.h.b16 %v2230
    %v2868 = vunpack.c.l.b16 %v2231
    %v2869 = vunpack.c.l.b16 %v2232
    %v2870 = vunpack.c.h.b16 %v2232
    %v2871 = vunpack.c.l.b16 %v2233
    %v2872 = vunpack.c.h.b16 %v2233
    %v2873 = vunpack.c.l.b16 %v2234
    %v2874 = vunpack.c.l.b16 %v2235
    %v2875 = vunpack.c.h.b16 %v2235
    %v2876 = vunpack.c.l.b16 %v2236
    %v2877 = vunpack.c.h.b16 %v2236
    %v2878 = vunpack.c.l.b16 %v2237
    %v2879 = vunpack.c.l.b16 %v2238
    %v2880 = vunpack.c.h.b16 %v2238
    %v2881 = vunpack.c.l.b16 %v2239
    %v2882 = vunpack.c.h.b16 %v2239
    %v2883 = vunpack.c.l.b16 %v2240
    %v2884 = vunpack.c.l.b16 %v2241
    %v2885 = vunpack.c.h.b16 %v2241
    %v2886 = vunpack.c.l.b16 %v2242
    %v2887 = vunpack.c.h.b16 %v2242
    %v2888 = vunpack.c.l.b16 %v2243
    %v2889 = vunpack.c.l.b16 %v2244
    %v2890 = vunpack.c.h.b16 %v2244
    %v2891 = vunpack.c.l.b16 %v2245
    %v2892 = vunpack.c.h.b16 %v2245
    %v2893 = vunpack.c.l.b16 %v2246
    %v2894 = vunpack.c.l.b16 %v2247
    %v2895 = vunpack.c.h.b16 %v2247
    %v2896 = vunpack.c.l.b16 %v2248
    %v2897 = vunpack.c.h.b16 %v2248
    %v2898 = vunpack.c.l.b16 %v2249
    %v2899 = vunpack.c.l.b16 %v2250
    %v2900 = vunpack.c.h.b16 %v2250
    %v2901 = vunpack.c.l.b16 %v2251
    %v2902 = vunpack.c.h.b16 %v2251
    %v2903 = vunpack.c.l.b16 %v2252
    %v2904 = vunpack.c.l.b16 %v2253
    %v2905 = vunpack.c.h.b16 %v2253
    %v2906 = vunpack.c.l.b16 %v2254
    %v2907 = vunpack.c.h.b16 %v2254
    %v2908 = vunpack.c.l.b16 %v2255
    %v2909 = vunpack.c.l.b16 %v2256
    %v2910 = vunpack.c.h.b16 %v2256
    %v2911 = vunpack.c.l.b16 %v2257
    %v2912 = vunpack.c.h.b16 %v2257
    %v2913 = vunpack.c.l.b16 %v2258
    %v2914 = vunpack.c.l.b16 %v2259
    %v2915 = vunpack.c.h.b16 %v2259
    %v2916 = vunpack.c.l.b16 %v2260
    %v2917 = vunpack.c.h.b16 %v2260
    %v2918 = vunpack.c.l.b16 %v2261
    %v2919 = vunpack.c.l.b16 %v2262
    %v2920 = vunpack.c.h.b16 %v2262
    %v2921 = vunpack.c.l.b16 %v2263
    %v2922 = vunpack.c.h.b16 %v2263
    %v2923 = vunpack.c.l.b16 %v2264
    %v2924 = vunpack.c.l.b16 %v2265
    %v2925 = vunpack.c.h.b16 %v2265
    %v2926 = vunpack.c.l.b16 %v2266
    %v2927 = vunpack.c.h.b16 %v2266
    %v2928 = vunpack.c.l.b16 %v2267
    %v2929 = vunpack.c.l.b16 %v2268
    %v2930 = vunpack.c.h.b16 %v2268
    %v2931 = vunpack.c.l.b16 %v2269
    %v2932 = vunpack.c.h.b16 %v2269
    %v2933 = vunpack.c.l.b16 %v2270
    %v2934 = vunpack.c.l.b16 %v2271
    %v2935 = vunpack.c.h.b16 %v2271
    %v2936 = vunpack.c.l.b16 %v2272
    %v2937 = vunpack.c.h.b16 %v2272
    %v2938 = vunpack.c.l.b16 %v2273
    %v2939 = vunpack.c.l.b16 %v2274
    %v2940 = vunpack.c.h.b16 %v2274
    %v2941 = vunpack.c.l.b16 %v2275
    %v2942 = vunpack.c.h.b16 %v2275
    %v2943 = vunpack.c.l.b16 %v2276
    %v2944 = vpack.c.b16 %v2549, %v2544
    %v2945 = vpack.c.b16 %v2550, %v2545
    %v2946 = vpack.c.b16 %v2551, %v2546
    %v2947 = vpack.c.b16 %v2552, %v2547
    %v2948 = vpack.c.b16 %v2553, %v2548
    %v2949 = vpack.c.b16 %v2559, %v2554
    %v2950 = vpack.c.b16 %v2560, %v2555
    %v2951 = vpack.c.b16 %v2561, %v2556
    %v2952 = vpack.c.b16 %v2562, %v2557
    %v2953 = vpack.c.b16 %v2563, %v2558
    %v2954 = vpack.c.b16 %v2569, %v2564
    %v2955 = vpack.c.b16 %v2570, %v2565
    %v2956 = vpack.c.b16 %v2571, %v2566
    %v2957 = vpack.c.b16 %v2572, %v2567
    %v2958 = vpack.c.b16 %v2573, %v2568
    %v2959 = vpack.c.b16 %v2579, %v2574
    %v2960 = vpack.c.b16 %v2580, %v2575
    %v2961 = vpack.c.b16 %v2581, %v2576
    %v2962 = vpack.c.b16 %v2582, %v2577
    %v2963 = vpack.c.b16 %v2583, %v2578
    %v2964 = vpack.c.b16 %v2589, %v2584
    %v2965 = vpack.c.b16 %v2590, %v2585
    %v2966 = vpack.c.b16 %v2591, %v2586
    %v2967 = vpack.c.b16 %v2592, %v2587
    %v2968 = vpack.c.b16 %v2593, %v2588
    %v2969 = vpack.c.b16 %v2599, %v2594
    %v2970 = vpack.c.b16 %v2600, %v2595
    %v2971 = vpack.c.b16 %v2601, %v2596
    %v2972 = vpack.c.b16 %v2602, %v2597
    %v2973 = vpack.c.b16 %v2603, %v2598
    %v2974 = vpack.c.b16 %v2609, %v2604
    %v2975 = vpack.c.b16 %v2610, %v2605
    %v2976 = vpack.c.b16 %v2611, %v2606
    %v2977 = vpack.c.b16 %v2612, %v2607
    %v2978 = vpack.c.b16 %v2613, %v2608
    %v2979 = vpack.c.b16 %v2619, %v2614
    %v2980 = vpack.c.b16 %v2620, %v2615
    %v2981 = vpack.c.b16 %v2621, %v2616
    %v2982 = vpack.c.b16 %v2622, %v2617
    %v2983 = vpack.c.b16 %v2623, %v2618
    %v2984 = vpack.c.b16 %v2629, %v2624
    %v2985 = vpack.c.b16 %v2630, %v2625
    %v2986 = vpack.c.b16 %v2631, %v2626
    %v2987 = vpack.c.b16 %v2632, %v2627
    %v2988 = vpack.c.b16 %v2633, %v2628
    %v2989 = vpack.c.b16 %v2639, %v2634
    %v2990 = vpack.c.b16 %v2640, %v2635
    %v2991 = vpack.c.b16 %v2641, %v2636
    %v2992 = vpack.c.b16 %v2642, %v2637
    %v2993 = vpack.c.b16 %v2643, %v2638
    %v2994 = vpack.c.b16 %v2649, %v2644
    %v2995 = vpack.c.b16 %v2650, %v2645
    %v2996 = vpack.c.b16 %v2651, %v2646
    %v2997 = vpack.c.b16 %v2652, %v2647
    %v2998 = vpack.c.b16 %v2653, %v2648
    %v2999 = vpack.c.b16 %v2659, %v2654
    %v3000 = vpack.c.b16 %v2660, %v2655
    %v3001 = vpack.c.b16 %v2661, %v2656
    %v3002 = vpack.c.b16 %v2662, %v2657
    %v3003 = vpack.c.b16 %v2663, %v2658
    %v3004 = vpack.c.b16 %v2669, %v2664
    %v3005 = vpack.c.b16 %v2670, %v2665
    %v3006 = vpack.c.b16 %v2671, %v2666
    %v3007 = vpack.c.b16 %v2672, %v2667
    %v3008 = vpack.c.b16 %v2673, %v2668
    %v3009 = vpack.c.b16 %v2679, %v2674
    %v3010 = vpack.c.b16 %v2680, %v2675
    %v3011 = vpack.c.b16 %v2681, %v2676
    %v3012 = vpack.c.b16 %v2682, %v2677
    %v3013 = vpack.c.b16 %v2683, %v2678
    %v3014 = vpack.c.b16 %v2689, %v2684
    %v3015 = vpack.c.b16 %v2690, %v2685
    %v3016 = vpack.c.b16 %v2691, %v2686
    %v3017 = vpack.c.b16 %v2692, %v2687
    %v3018 = vpack.c.b16 %v2693, %v2688
    %v3019 = vpack.c.b16 %v2699, %v2694
    %v3020 = vpack.c.b16 %v2700, %v2695
    %v3021 = vpack.c.b16 %v2701, %v2696
    %v3022 = vpack.c.b16 %v2702, %v2697
    %v3023 = vpack.c.b16 %v2703, %v2698
    %v3024 = vpack.c.b16 %v2709, %v2704
    %v3025 = vpack.c.b16 %v2710, %v2705
    %v3026 = vpack.c.b16 %v2711, %v2706
    %v3027 = vpack.c.b16 %v2712, %v2707
    %v3028 = vpack.c.b16 %v2713, %v2708
    %v3029 = vpack.c.b16 %v2719, %v2714
    %v3030 = vpack.c.b16 %v2720, %v2715
    %v3031 = vpack.c.b16 %v2721, %v2716
    %v3032 = vpack.c.b16 %v2722, %v2717
    %v3033 = vpack.c.b16 %v2723, %v2718
    %v3034 = vpack.c.b16 %v2729, %v2724
    %v3035 = vpack.c.b16 %v2730, %v2725
    %v3036 = vpack.c.b16 %v2731, %v2726
    %v3037 = vpack.c.b16 %v2732, %v2727
    %v3038 = vpack.c.b16 %v2733, %v2728
    %v3039 = vpack.c.b16 %v2739, %v2734
    %v3040 = vpack.c.b16 %v2740, %v2735
    %v3041 = vpack.c.b16 %v2741, %v2736
    %v3042 = vpack.c.b16 %v2742, %v2737
    %v3043 = vpack.c.b16 %v2743, %v2738
    %v3044 = vpack.c.b16 %v2749, %v2744
    %v3045 = vpack.c.b16 %v2750, %v2745
    %v3046 = vpack.c.b16 %v2751, %v2746
    %v3047 = vpack.c.b16 %v2752, %v2747
    %v3048 = vpack.c.b16 %v2753, %v2748
    %v3049 = vpack.c.b16 %v2759, %v2754
    %v3050 = vpack.c.b16 %v2760, %v2755
    %v3051 = vpack.c.b16 %v2761, %v2756
    %v3052 = vpack.c.b16 %v2762, %v2757
    %v3053 = vpack.c.b16 %v2763, %v2758
    %v3054 = vpack.c.b16 %v2769, %v2764
    %v3055 = vpack.c.b16 %v2770, %v2765
    %v3056 = vpack.c.b16 %v2771, %v2766
    %v3057 = vpack.c.b16 %v2772, %v2767
    %v3058 = vpack.c.b16 %v2773, %v2768
    %v3059 = vpack.c.b16 %v2779, %v2774
    %v3060 = vpack.c.b16 %v2780, %v2775
    %v3061 = vpack.c.b16 %v2781, %v2776
    %v3062 = vpack.c.b16 %v2782, %v2777
    %v3063 = vpack.c.b16 %v2783, %v2778
    %v3064 = vpack.c.b16 %v2789, %v2784
    %v3065 = vpack.c.b16 %v2790, %v2785
    %v3066 = vpack.c.b16 %v2791, %v2786
    %v3067 = vpack.c.b16 %v2792, %v2787
    %v3068 = vpack.c.b16 %v2793, %v2788
    %v3069 = vpack.c.b16 %v2799, %v2794
    %v3070 = vpack.c.b16 %v2800, %v2795
    %v3071 = vpack.c.b16 %v2801, %v2796
    %v3072 = vpack.c.b16 %v2802, %v2797
    %v3073 = vpack.c.b16 %v2803, %v2798
    %v3074 = vpack.c.b16 %v2809, %v2804
    %v3075 = vpack.c.b16 %v2810, %v2805
    %v3076 = vpack.c.b16 %v2811, %v2806
    %v3077 = vpack.c.b16 %v2812, %v2807
    %v3078 = vpack.c.b16 %v2813, %v2808
    %v3079 = vpack.c.b16 %v2819, %v2814
    %v3080 = vpack.c.b16 %v2820, %v2815
    %v3081 = vpack.c.b16 %v2821, %v2816
    %v3082 = vpack.c.b16 %v2822, %v2817
    %v3083 = vpack.c.b16 %v2823, %v2818
    %v3084 = vpack.c.b16 %v2829, %v2824
    %v3085 = vpack.c.b16 %v2830, %v2825
    %v3086 = vpack.c.b16 %v2831, %v2826
    %v3087 = vpack.c.b16 %v2832, %v2827
    %v3088 = vpack.c.b16 %v2833, %v2828
    %v3089 = vpack.c.b16 %v2839, %v2834
    %v3090 = vpack.c.b16 %v2840, %v2835
    %v3091 = vpack.c.b16 %v2841, %v2836
    %v3092 = vpack.c.b16 %v2842, %v2837
    %v3093 = vpack.c.b16 %v2843, %v2838
    %v3094 = vpack.c.b16 %v2849, %v2844
    %v3095 = vpack.c.b16 %v2850, %v2845
    %v3096 = vpack.c.b16 %v2851, %v2846
    %v3097 = vpack.c.b16 %v2852, %v2847
    %v3098 = vpack.c.b16 %v2853, %v2848
    %v3099 = vpack.c.b16 %v2859, %v2854
    %v3100 = vpack.c.b16 %v2860, %v2855
    %v3101 = vpack.c.b16 %v2861, %v2856
    %v3102 = vpack.c.b16 %v2862, %v2857
    %v3103 = vpack.c.b16 %v2863, %v2858
    %v3104 = vpack.c.b16 %v2869, %v2864
    %v3105 = vpack.c.b16 %v2870, %v2865
    %v3106 = vpack.c.b16 %v2871, %v2866
    %v3107 = vpack.c.b16 %v2872, %v2867
    %v3108 = vpack.c.b16 %v2873, %v2868
    %v3109 = vpack.c.b16 %v2879, %v2874
    %v3110 = vpack.c.b16 %v2880, %v2875
    %v3111 = vpack.c.b16 %v2881, %v2876
    %v3112 = vpack.c.b16 %v2882, %v2877
    %v3113 = vpack.c.b16 %v2883, %v2878
    %v3114 = vpack.c.b16 %v2889, %v2884
    %v3115 = vpack.c.b16 %v2890, %v2885
    %v3116 = vpack.c.b16 %v2891, %v2886
    %v3117 = vpack.c.b16 %v2892, %v2887
    %v3118 = vpack.c.b16 %v2893, %v2888
    %v3119 = vpack.c.b16 %v2899, %v2894
    %v3120 = vpack.c.b16 %v2900, %v2895
    %v3121 = vpack.c.b16 %v2901, %v2896
    %v3122 = vpack.c.b16 %v2902, %v2897
    %v3123 = vpack.c.b16 %v2903, %v2898
    %v3124 = vpack.c.b16 %v2909, %v2904
    %v3125 = vpack.c.b16 %v2910, %v2905
    %v3126 = vpack.c.b16 %v2911, %v2906
    %v3127 = vpack.c.b16 %v2912, %v2907
    %v3128 = vpack.c.b16 %v2913, %v2908
    %v3129 = vpack.c.b16 %v2919, %v2914
    %v3130 = vpack.c.b16 %v2920, %v2915
    %v3131 = vpack.c.b16 %v2921, %v2916
    %v3132 = vpack.c.b16 %v2922, %v2917
    %v3133 = vpack.c.b16 %v2923, %v2918
    %v3134 = vpack.c.b16 %v2929, %v2924
    %v3135 = vpack.c.b16 %v2930, %v2925
    %v3136 = vpack.c.b16 %v2931, %v2926
    %v3137 = vpack.c.b16 %v2932, %v2927
    %v3138 = vpack.c.b16 %v2933, %v2928
    %v3139 = vpack.c.b16 %v2939, %v2934
    %v3140 = vpack.c.b16 %v2940, %v2935
    %v3141 = vpack.c.b16 %v2941, %v2936
    %v3142 = vpack.c.b16 %v2942, %v2937
    %v3143 = vpack.c.b16 %v2943, %v2938
    %3344 = vmatprep.subr.bf16.mxu0 %v2980
    %3345 = vmatpush1.bf16.msra.mxu0 %v2979
    %3346 = vmatprep.subr.bf16.mxu0 %v2975
    %3347 = vmatpush1.bf16.msra.mxu0 %v2974
    %3348 = vmatprep.subr.bf16.mxu0 %v2970
    %3349 = vmatpush1.bf16.msra.mxu0 %v2969
    %3350 = vmatprep.subr.bf16.mxu0 %v2965
    %3351 = vmatpush1.bf16.msra.mxu0 %v2964
    %3352 = vmatprep.subr.bf16.mxu0 %v2960
    %3353 = vmatpush1.bf16.msra.mxu0 %v2959
    %3354 = vmatprep.subr.bf16.mxu0 %v2955
    %3355 = vmatpush1.bf16.msra.mxu0 %v2954
    %3356 = vmatprep.subr.bf16.mxu0 %v2950
    %3357 = vmatpush1.bf16.msra.mxu0 %v2949
    %3358 = vmatprep.subr.bf16.mxu0 %v2945
    %3359 = vmatpush1.bf16.msra.mxu0 %v2944
    %3360 = vmatprep.subr.bf16.mxu0 %v3020
    %3361 = vmatpush2.bf16.msra.mxu0 %v3019
    %3362 = vmatprep.subr.bf16.mxu0 %v3015
    %3363 = vmatpush2.bf16.msra.mxu0 %v3014
    %3364 = vmatprep.subr.bf16.mxu0 %v3010
    %3365 = vmatpush2.bf16.msra.mxu0 %v3009
    %3366 = vmatprep.subr.bf16.mxu0 %v3005
    %3367 = vmatpush2.bf16.msra.mxu0 %v3004
    %3368 = vmatprep.subr.bf16.mxu0 %v3000
    %3369 = vmatpush2.bf16.msra.mxu0 %v2999
    %3370 = vmatprep.subr.bf16.mxu0 %v2995
    %3371 = vmatpush2.bf16.msra.mxu0 %v2994
    %3372 = vmatprep.subr.bf16.mxu0 %v2990
    %3373 = vmatpush2.bf16.msra.mxu0 %v2989
    %3374 = vmatprep.subr.bf16.mxu0 %v2985
    %3375 = vmatpush2.bf16.msra.mxu0 %v2984
    %3376 = vmatprep.mubr.bf16.mxu0 %v2033
    %3377 = vmatmul.mubr.bf16.gmra.mxu0 %v2032
    %v3378 = vpop.f32.mrf.mxu0
    %v3379 = vadd.f32 %v2282, %v3378
    %v3380 = vpop.f32.mrf.mxu0
    %v3381 = vadd.f32 %v2286, %v3380
    %v3382 = vpop.f32.mrf.mxu0
    %v3383 = vpop.f32.mrf.mxu0
    %3384 = vdwg.mxu0
    %3385 = vmatprep.subr.bf16.mxu0 %v3060
    %3386 = vmatpush1.bf16.msra.mxu0 %v3059
    %3387 = vmatprep.subr.bf16.mxu0 %v3055
    %3388 = vmatpush1.bf16.msra.mxu0 %v3054
    %3389 = vmatprep.subr.bf16.mxu0 %v3050
    %3390 = vmatpush1.bf16.msra.mxu0 %v3049
    %3391 = vmatprep.subr.bf16.mxu0 %v3045
    %3392 = vmatpush1.bf16.msra.mxu0 %v3044
    %3393 = vmatprep.subr.bf16.mxu0 %v3040
    %3394 = vmatpush1.bf16.msra.mxu0 %v3039
    %3395 = vmatprep.subr.bf16.mxu0 %v3035
    %3396 = vmatpush1.bf16.msra.mxu0 %v3034
    %3397 = vmatprep.subr.bf16.mxu0 %v3030
    %3398 = vmatpush1.bf16.msra.mxu0 %v3029
    %3399 = vmatprep.subr.bf16.mxu0 %v3025
    %3400 = vmatpush1.bf16.msra.mxu0 %v3024
    %3401 = vmatprep.subr.bf16.mxu0 %v3100
    %3402 = vmatpush2.bf16.msra.mxu0 %v3099
    %3403 = vmatprep.subr.bf16.mxu0 %v3095
    %3404 = vmatpush2.bf16.msra.mxu0 %v3094
    %3405 = vmatprep.subr.bf16.mxu0 %v3090
    %3406 = vmatpush2.bf16.msra.mxu0 %v3089
    %3407 = vmatprep.subr.bf16.mxu0 %v3085
    %3408 = vmatpush2.bf16.msra.mxu0 %v3084
    %3409 = vmatprep.subr.bf16.mxu0 %v3080
    %3410 = vmatpush2.bf16.msra.mxu0 %v3079
    %3411 = vmatprep.subr.bf16.mxu0 %v3075
    %3412 = vmatpush2.bf16.msra.mxu0 %v3074
    %3413 = vmatprep.subr.bf16.mxu0 %v3070
    %3414 = vmatpush2.bf16.msra.mxu0 %v3069
    %3415 = vmatprep.subr.bf16.mxu0 %v3065
    %3416 = vmatpush2.bf16.msra.mxu0 %v3064
    %3417 = vmatprep.mubr.bf16.mxu0 %v2035
    %3418 = vmatmul.mubr.bf16.gmra.mxu0 %v2034
    %v3419 = vpop.f32.mrf.mxu0
    %v3420 = vadd.f32 %v3379, %v3419
    %v3421 = vpop.f32.mrf.mxu0
    %v3422 = vadd.f32 %v3381, %v3421
    %v3423 = vpop.f32.mrf.mxu0
    %v3424 = vpop.f32.mrf.mxu0
    %3425 = vdwg.mxu0
    %3426 = vmatprep.subr.bf16.mxu0 %v3140
    %3427 = vmatpush1.bf16.msra.mxu0 %v3139
    %3428 = vmatprep.subr.bf16.mxu0 %v3135
    %3429 = vmatpush1.bf16.msra.mxu0 %v3134
    %3430 = vmatprep.subr.bf16.mxu0 %v3130
    %3431 = vmatpush1.bf16.msra.mxu0 %v3129
    %3432 = vmatprep.subr.bf16.mxu0 %v3125
    %3433 = vmatpush1.bf16.msra.mxu0 %v3124
    %3434 = vmatprep.subr.bf16.mxu0 %v3120
    %3435 = vmatpush1.bf16.msra.mxu0 %v3119
    %3436 = vmatprep.subr.bf16.mxu0 %v3115
    %3437 = vmatpush1.bf16.msra.mxu0 %v3114
    %3438 = vmatprep.subr.bf16.mxu0 %v3110
    %3439 = vmatpush1.bf16.msra.mxu0 %v3109
    %3440 = vmatprep.subr.bf16.mxu0 %v3105
    %3441 = vmatpush1.bf16.msra.mxu0 %v3104
    %3442 = vmatprep.subr.bf16.mxu0 0
    %3443 = vmatpush2.bf16.msra.mxu0 0
    %3444 = vmatprep.subr.bf16.mxu0 0
    %3445 = vmatpush2.bf16.msra.mxu0 0
    %3446 = vmatprep.subr.bf16.mxu0 0
    %3447 = vmatpush2.bf16.msra.mxu0 0
    %3448 = vmatprep.subr.bf16.mxu0 0
    %3449 = vmatpush2.bf16.msra.mxu0 0
    %3450 = vmatprep.subr.bf16.mxu0 0
    %3451 = vmatpush2.bf16.msra.mxu0 0
    %3452 = vmatprep.subr.bf16.mxu0 0
    %3453 = vmatpush2.bf16.msra.mxu0 0
    %3454 = vmatprep.subr.bf16.mxu0 0
    %3455 = vmatpush2.bf16.msra.mxu0 0
    %3456 = vmatprep.subr.bf16.mxu0 0
    %3457 = vmatpush2.bf16.msra.mxu0 0
    %3458 = vmatprep.mubr.bf16.mxu0 0
    %3459 = vmatmul.mubr.bf16.gmra.mxu0 %v2036
    %v3460 = vpop.f32.mrf.mxu0
    %v3461 = vadd.f32 %v3420, %v3460
    %v3462 = vpop.f32.mrf.mxu0
    %v3463 = vadd.f32 %v3422, %v3462
    %v3464 = vpop.f32.mrf.mxu0
    %v3465 = vpop.f32.mrf.mxu0
    %3466 = vdwg.mxu0
    %3467 = vmatprep.subr.bf16.mxu0 %v2982
    %3468 = vmatpush1.bf16.msra.mxu0 %v2981
    %3469 = vmatprep.subr.bf16.mxu0 %v2977
    %3470 = vmatpush1.bf16.msra.mxu0 %v2976
    %3471 = vmatprep.subr.bf16.mxu0 %v2972
    %3472 = vmatpush1.bf16.msra.mxu0 %v2971
    %3473 = vmatprep.subr.bf16.mxu0 %v2967
    %3474 = vmatpush1.bf16.msra.mxu0 %v2966
    %3475 = vmatprep.subr.bf16.mxu0 %v2962
    %3476 = vmatpush1.bf16.msra.mxu0 %v2961
    %3477 = vmatprep.subr.bf16.mxu0 %v2957
    %3478 = vmatpush1.bf16.msra.mxu0 %v2956
    %3479 = vmatprep.subr.bf16.mxu0 %v2952
    %3480 = vmatpush1.bf16.msra.mxu0 %v2951
    %3481 = vmatprep.subr.bf16.mxu0 %v2947
    %3482 = vmatpush1.bf16.msra.mxu0 %v2946
    %3483 = vmatprep.subr.bf16.mxu0 %v3022
    %3484 = vmatpush2.bf16.msra.mxu0 %v3021
    %3485 = vmatprep.subr.bf16.mxu0 %v3017
    %3486 = vmatpush2.bf16.msra.mxu0 %v3016
    %3487 = vmatprep.subr.bf16.mxu0 %v3012
    %3488 = vmatpush2.bf16.msra.mxu0 %v3011
    %3489 = vmatprep.subr.bf16.mxu0 %v3007
    %3490 = vmatpush2.bf16.msra.mxu0 %v3006
    %3491 = vmatprep.subr.bf16.mxu0 %v3002
    %3492 = vmatpush2.bf16.msra.mxu0 %v3001
    %3493 = vmatprep.subr.bf16.mxu0 %v2997
    %3494 = vmatpush2.bf16.msra.mxu0 %v2996
    %3495 = vmatprep.subr.bf16.mxu0 %v2992
    %3496 = vmatpush2.bf16.msra.mxu0 %v2991
    %3497 = vmatprep.subr.bf16.mxu0 %v2987
    %3498 = vmatpush2.bf16.msra.mxu0 %v2986
    %3499 = vmatprep.mubr.bf16.mxu0 %v2033
    %3500 = vmatmul.mubr.bf16.gmra.mxu0 %v2032
    %v3501 = vpop.f32.mrf.mxu0
    %v3502 = vadd.f32 %v2290, %v3501
    %v3503 = vpop.f32.mrf.mxu0
    %v3504 = vadd.f32 %v2294, %v3503
    %v3505 = vpop.f32.mrf.mxu0
    %v3506 = vpop.f32.mrf.mxu0
    %3507 = vdwg.mxu0
    %3508 = vmatprep.subr.bf16.mxu0 %v3062
    %3509 = vmatpush1.bf16.msra.mxu0 %v3061
    %3510 = vmatprep.subr.bf16.mxu0 %v3057
    %3511 = vmatpush1.bf16.msra.mxu0 %v3056
    %3512 = vmatprep.subr.bf16.mxu0 %v3052
    %3513 = vmatpush1.bf16.msra.mxu0 %v3051
    %3514 = vmatprep.subr.bf16.mxu0 %v3047
    %3515 = vmatpush1.bf16.msra.mxu0 %v3046
    %3516 = vmatprep.subr.bf16.mxu0 %v3042
    %3517 = vmatpush1.bf16.msra.mxu0 %v3041
    %3518 = vmatprep.subr.bf16.mxu0 %v3037
    %3519 = vmatpush1.bf16.msra.mxu0 %v3036
    %3520 = vmatprep.subr.bf16.mxu0 %v3032
    %3521 = vmatpush1.bf16.msra.mxu0 %v3031
    %3522 = vmatprep.subr.bf16.mxu0 %v3027
    %3523 = vmatpush1.bf16.msra.mxu0 %v3026
    %3524 = vmatprep.subr.bf16.mxu0 %v3102
    %3525 = vmatpush2.bf16.msra.mxu0 %v3101
    %3526 = vmatprep.subr.bf16.mxu0 %v3097
    %3527 = vmatpush2.bf16.msra.mxu0 %v3096
    %3528 = vmatprep.subr.bf16.mxu0 %v3092
    %3529 = vmatpush2.bf16.msra.mxu0 %v3091
    %3530 = vmatprep.subr.bf16.mxu0 %v3087
    %3531 = vmatpush2.bf16.msra.mxu0 %v3086
    %3532 = vmatprep.subr.bf16.mxu0 %v3082
    %3533 = vmatpush2.bf16.msra.mxu0 %v3081
    %3534 = vmatprep.subr.bf16.mxu0 %v3077
    %3535 = vmatpush2.bf16.msra.mxu0 %v3076
    %3536 = vmatprep.subr.bf16.mxu0 %v3072
    %3537 = vmatpush2.bf16.msra.mxu0 %v3071
    %3538 = vmatprep.subr.bf16.mxu0 %v3067
    %3539 = vmatpush2.bf16.msra.mxu0 %v3066
    %3540 = vmatprep.mubr.bf16.mxu0 %v2035
    %3541 = vmatmul.mubr.bf16.gmra.mxu0 %v2034
    %v3542 = vpop.f32.mrf.mxu0
    %v3543 = vadd.f32 %v3502, %v3542
    %v3544 = vpop.f32.mrf.mxu0
    %v3545 = vadd.f32 %v3504, %v3544
    %v3546 = vpop.f32.mrf.mxu0
    %v3547 = vpop.f32.mrf.mxu0
    %3548 = vdwg.mxu0
    %3549 = vmatprep.subr.bf16.mxu0 %v3142
    %3550 = vmatpush1.bf16.msra.mxu0 %v3141
    %3551 = vmatprep.subr.bf16.mxu0 %v3137
    %3552 = vmatpush1.bf16.msra.mxu0 %v3136
    %3553 = vmatprep.subr.bf16.mxu0 %v3132
    %3554 = vmatpush1.bf16.msra.mxu0 %v3131
    %3555 = vmatprep.subr.bf16.mxu0 %v3127
    %3556 = vmatpush1.bf16.msra.mxu0 %v3126
    %3557 = vmatprep.subr.bf16.mxu0 %v3122
    %3558 = vmatpush1.bf16.msra.mxu0 %v3121
    %3559 = vmatprep.subr.bf16.mxu0 %v3117
    %3560 = vmatpush1.bf16.msra.mxu0 %v3116
    %3561 = vmatprep.subr.bf16.mxu0 %v3112
    %3562 = vmatpush1.bf16.msra.mxu0 %v3111
    %3563 = vmatprep.subr.bf16.mxu0 %v3107
    %3564 = vmatpush1.bf16.msra.mxu0 %v3106
    %3565 = vmatprep.subr.bf16.mxu0 0
    %3566 = vmatpush2.bf16.msra.mxu0 0
    %3567 = vmatprep.subr.bf16.mxu0 0
    %3568 = vmatpush2.bf16.msra.mxu0 0
    %3569 = vmatprep.subr.bf16.mxu0 0
    %3570 = vmatpush2.bf16.msra.mxu0 0
    %3571 = vmatprep.subr.bf16.mxu0 0
    %3572 = vmatpush2.bf16.msra.mxu0 0
    %3573 = vmatprep.subr.bf16.mxu0 0
    %3574 = vmatpush2.bf16.msra.mxu0 0
    %3575 = vmatprep.subr.bf16.mxu0 0
    %3576 = vmatpush2.bf16.msra.mxu0 0
    %3577 = vmatprep.subr.bf16.mxu0 0
    %3578 = vmatpush2.bf16.msra.mxu0 0
    %3579 = vmatprep.subr.bf16.mxu0 0
    %3580 = vmatpush2.bf16.msra.mxu0 0
    %3581 = vmatprep.mubr.bf16.mxu0 0
    %3582 = vmatmul.mubr.bf16.gmra.mxu0 %v2036
    %v3583 = vpop.f32.mrf.mxu0
    %v3584 = vadd.f32 %v3543, %v3583
    %v3585 = vpop.f32.mrf.mxu0
    %v3586 = vadd.f32 %v3545, %v3585
    %v3587 = vpop.f32.mrf.mxu0
    %v3588 = vpop.f32.mrf.mxu0
    %3589 = vdwg.mxu0
    %3590 = vmatprep.subr.bf16.mxu0 0
    %3591 = vmatpush1.bf16.msra.mxu0 %v2983
    %3592 = vmatprep.subr.bf16.mxu0 0
    %3593 = vmatpush1.bf16.msra.mxu0 %v2978
    %3594 = vmatprep.subr.bf16.mxu0 0
    %3595 = vmatpush1.bf16.msra.mxu0 %v2973
    %3596 = vmatprep.subr.bf16.mxu0 0
    %3597 = vmatpush1.bf16.msra.mxu0 %v2968
    %3598 = vmatprep.subr.bf16.mxu0 0
    %3599 = vmatpush1.bf16.msra.mxu0 %v2963
    %3600 = vmatprep.subr.bf16.mxu0 0
    %3601 = vmatpush1.bf16.msra.mxu0 %v2958
    %3602 = vmatprep.subr.bf16.mxu0 0
    %3603 = vmatpush1.bf16.msra.mxu0 %v2953
    %3604 = vmatprep.subr.bf16.mxu0 0
    %3605 = vmatpush1.bf16.msra.mxu0 %v2948
    %3606 = vmatprep.subr.bf16.mxu0 0
    %3607 = vmatpush2.bf16.msra.mxu0 %v3023
    %3608 = vmatprep.subr.bf16.mxu0 0
    %3609 = vmatpush2.bf16.msra.mxu0 %v3018
    %3610 = vmatprep.subr.bf16.mxu0 0
    %3611 = vmatpush2.bf16.msra.mxu0 %v3013
    %3612 = vmatprep.subr.bf16.mxu0 0
    %3613 = vmatpush2.bf16.msra.mxu0 %v3008
    %3614 = vmatprep.subr.bf16.mxu0 0
    %3615 = vmatpush2.bf16.msra.mxu0 %v3003
    %3616 = vmatprep.subr.bf16.mxu0 0
    %3617 = vmatpush2.bf16.msra.mxu0 %v2998
    %3618 = vmatprep.subr.bf16.mxu0 0
    %3619 = vmatpush2.bf16.msra.mxu0 %v2993
    %3620 = vmatprep.subr.bf16.mxu0 0
    %3621 = vmatpush2.bf16.msra.mxu0 %v2988
    %3622 = vmatprep.mubr.bf16.mxu0 %v2033
    %3623 = vmatmul.mubr.bf16.gmra.mxu0 %v2032
    %v3624 = vpop.f32.mrf.mxu0
    %v3625 = vadd.f32 %v2298, %v3624
    %v3626 = vpop.f32.mrf.mxu0
    %v3627 = vpop.f32.mrf.mxu0
    %v3628 = vpop.f32.mrf.mxu0
    %3629 = vdwg.mxu0
    %3630 = vmatprep.subr.bf16.mxu0 0
    %3631 = vmatpush1.bf16.msra.mxu0 %v3063
    %3632 = vmatprep.subr.bf16.mxu0 0
    %3633 = vmatpush1.bf16.msra.mxu0 %v3058
    %3634 = vmatprep.subr.bf16.mxu0 0
    %3635 = vmatpush1.bf16.msra.mxu0 %v3053
    %3636 = vmatprep.subr.bf16.mxu0 0
    %3637 = vmatpush1.bf16.msra.mxu0 %v3048
    %3638 = vmatprep.subr.bf16.mxu0 0
    %3639 = vmatpush1.bf16.msra.mxu0 %v3043
    %3640 = vmatprep.subr.bf16.mxu0 0
    %3641 = vmatpush1.bf16.msra.mxu0 %v3038
    %3642 = vmatprep.subr.bf16.mxu0 0
    %3643 = vmatpush1.bf16.msra.mxu0 %v3033
    %3644 = vmatprep.subr.bf16.mxu0 0
    %3645 = vmatpush1.bf16.msra.mxu0 %v3028
    %3646 = vmatprep.subr.bf16.mxu0 0
    %3647 = vmatpush2.bf16.msra.mxu0 %v3103
    %3648 = vmatprep.subr.bf16.mxu0 0
    %3649 = vmatpush2.bf16.msra.mxu0 %v3098
    %3650 = vmatprep.subr.bf16.mxu0 0
    %3651 = vmatpush2.bf16.msra.mxu0 %v3093
    %3652 = vmatprep.subr.bf16.mxu0 0
    %3653 = vmatpush2.bf16.msra.mxu0 %v3088
    %3654 = vmatprep.subr.bf16.mxu0 0
    %3655 = vmatpush2.bf16.msra.mxu0 %v3083
    %3656 = vmatprep.subr.bf16.mxu0 0
    %3657 = vmatpush2.bf16.msra.mxu0 %v3078
    %3658 = vmatprep.subr.bf16.mxu0 0
    %3659 = vmatpush2.bf16.msra.mxu0 %v3073
    %3660 = vmatprep.subr.bf16.mxu0 0
    %3661 = vmatpush2.bf16.msra.mxu0 %v3068
    %3662 = vmatprep.mubr.bf16.mxu0 %v2035
    %3663 = vmatmul.mubr.bf16.gmra.mxu0 %v2034
    %v3664 = vpop.f32.mrf.mxu0
    %v3665 = vadd.f32 %v3625, %v3664
    %v3666 = vpop.f32.mrf.mxu0
    %v3667 = vpop.f32.mrf.mxu0
    %v3668 = vpop.f32.mrf.mxu0
    %3669 = vdwg.mxu0
    %3670 = vmatprep.subr.bf16.mxu0 0
    %3671 = vmatpush1.bf16.msra.mxu0 %v3143
    %3672 = vmatprep.subr.bf16.mxu0 0
    %3673 = vmatpush1.bf16.msra.mxu0 %v3138
    %3674 = vmatprep.subr.bf16.mxu0 0
    %3675 = vmatpush1.bf16.msra.mxu0 %v3133
    %3676 = vmatprep.subr.bf16.mxu0 0
    %3677 = vmatpush1.bf16.msra.mxu0 %v3128
    %3678 = vmatprep.subr.bf16.mxu0 0
    %3679 = vmatpush1.bf16.msra.mxu0 %v3123
    %3680 = vmatprep.subr.bf16.mxu0 0
    %3681 = vmatpush1.bf16.msra.mxu0 %v3118
    %3682 = vmatprep.subr.bf16.mxu0 0
    %3683 = vmatpush1.bf16.msra.mxu0 %v3113
    %3684 = vmatprep.subr.bf16.mxu0 0
    %3685 = vmatpush1.bf16.msra.mxu0 %v3108
    %3686 = vmatprep.subr.bf16.mxu0 0
    %3687 = vmatpush2.bf16.msra.mxu0 0
    %3688 = vmatprep.subr.bf16.mxu0 0
    %3689 = vmatpush2.bf16.msra.mxu0 0
    %3690 = vmatprep.subr.bf16.mxu0 0
    %3691 = vmatpush2.bf16.msra.mxu0 0
    %3692 = vmatprep.subr.bf16.mxu0 0
    %3693 = vmatpush2.bf16.msra.mxu0 0
    %3694 = vmatprep.subr.bf16.mxu0 0
    %3695 = vmatpush2.bf16.msra.mxu0 0
    %3696 = vmatprep.subr.bf16.mxu0 0
    %3697 = vmatpush2.bf16.msra.mxu0 0
    %3698 = vmatprep.subr.bf16.mxu0 0
    %3699 = vmatpush2.bf16.msra.mxu0 0
    %3700 = vmatprep.subr.bf16.mxu0 0
    %3701 = vmatpush2.bf16.msra.mxu0 0
    %3702 = vmatprep.mubr.bf16.mxu0 0
    %3703 = vmatmul.mubr.bf16.gmra.mxu0 %v2036
    %v3704 = vpop.f32.mrf.mxu0
    %v3705 = vadd.f32 %v3665, %v3704
    %v3706 = vpop.f32.mrf.mxu0
    %v3707 = vpop.f32.mrf.mxu0
    %v3708 = vpop.f32.mrf.mxu0
    %3709 = vdwg.mxu0
    %v3710 = vmax.f32 %v3461, 0.0
    %v3711 = vmax.f32 %v3463, 0.0
    %v3712 = vmax.f32 %v3584, 0.0
    %v3713 = vmax.f32 %v3586, 0.0
    %v3714 = vmax.f32 %v3705, 0.0
    %v3715 = vpack.c.bf16 %v3710, %v3710
    %v3716 = vpack.c.bf16 %v3711, %v3711
    %v3717 = vpack.c.bf16 %v3712, %v3712
    %v3718 = vpack.c.bf16 %v3713, %v3713
    %v3719 = vpack.c.bf16 %v3714, %v3714
    %v3720 = vld [vmem:[#allocation11] sm:$0xff]
    %v3721 = vld [vmem:[#allocation11 + $0x8] sm:$0xff]
    %v3722 = vld [vmem:[#allocation11 + $0x10] sm:$0xf]
    %v3723 = vld [vmem:[#allocation11 + $0x14] sm:$0xff]
    %v3724 = vld [vmem:[#allocation11 + $0x1c] sm:$0xff]
    %v3725 = vld [vmem:[#allocation11 + $0x24] sm:$0xf]
    %v3726 = vld [vmem:[#allocation11 + $0x28] sm:$0xff]
    %v3727 = vld [vmem:[#allocation11 + $0x30] sm:$0xff]
    %v3728 = vld [vmem:[#allocation11 + $0x38] sm:$0xf]
    %v3729 = vld [vmem:[#allocation11 + $0x3c] sm:$0xff]
    %v3730 = vld [vmem:[#allocation11 + $0x44] sm:$0xff]
    %v3731 = vld [vmem:[#allocation11 + $0x4c] sm:$0xf]
    %v3732 = vld [vmem:[#allocation11 + $0x50] sm:$0xff]
    %v3733 = vld [vmem:[#allocation11 + $0x58] sm:$0xff]
    %v3734 = vld [vmem:[#allocation11 + $0x60] sm:$0xf]
    %v3735 = vld [vmem:[#allocation11 + $0x64] sm:$0xff]
    %v3736 = vld [vmem:[#allocation11 + $0x6c] sm:$0xff]
    %v3737 = vld [vmem:[#allocation11 + $0x74] sm:$0xf]
    %v3738 = vld [vmem:[#allocation11 + $0x78] sm:$0xff]
    %v3739 = vld [vmem:[#allocation11 + $0x80] sm:$0xff]
    %v3740 = vld [vmem:[#allocation11 + $0x88] sm:$0xf]
    %v3741 = vld [vmem:[#allocation11 + $0x8c] sm:$0xff]
    %v3742 = vld [vmem:[#allocation11 + $0x94] sm:$0xff]
    %v3743 = vld [vmem:[#allocation11 + $0x9c] sm:$0xf]
    %v3744 = vld [vmem:[#allocation11 + $0xa0] sm:$0xff]
    %v3745 = vld [vmem:[#allocation11 + $0xa8] sm:$0xff]
    %v3746 = vld [vmem:[#allocation11 + $0xb0] sm:$0xf]
    %v3747 = vld [vmem:[#allocation11 + $0xb4] sm:$0xff]
    %v3748 = vld [vmem:[#allocation11 + $0xbc] sm:$0xff]
    %v3749 = vld [vmem:[#allocation11 + $0xc4] sm:$0xf]
    %v3750 = vld [vmem:[#allocation11 + $0xc8] sm:$0xff]
    %v3751 = vld [vmem:[#allocation11 + $0xd0] sm:$0xff]
    %v3752 = vld [vmem:[#allocation11 + $0xd8] sm:$0xf]
    %v3753 = vld [vmem:[#allocation11 + $0xdc] sm:$0xff]
    %v3754 = vld [vmem:[#allocation11 + $0xe4] sm:$0xff]
    %v3755 = vld [vmem:[#allocation11 + $0xec] sm:$0xf]
    %v3756 = vld [vmem:[#allocation11 + $0xf0] sm:$0xff]
    %v3757 = vld [vmem:[#allocation11 + $0xf8] sm:$0xff]
    %v3758 = vld [vmem:[#allocation11 + $0x100] sm:$0xf]
    %v3759 = vld [vmem:[#allocation11 + $0x104] sm:$0xff]
    %v3760 = vld [vmem:[#allocation11 + $0x10c] sm:$0xff]
    %v3761 = vld [vmem:[#allocation11 + $0x114] sm:$0xf]
    %v3762 = vld [vmem:[#allocation11 + $0x118] sm:$0xff]
    %v3763 = vld [vmem:[#allocation11 + $0x120] sm:$0xff]
    %v3764 = vld [vmem:[#allocation11 + $0x128] sm:$0xf]
    %v3765 = vld [vmem:[#allocation11 + $0x12c] sm:$0xff]
    %v3766 = vld [vmem:[#allocation11 + $0x134] sm:$0xff]
    %v3767 = vld [vmem:[#allocation11 + $0x13c] sm:$0xf]
    %v3768 = vld [vmem:[#allocation11 + $0x140] sm:$0xff]
    %v3769 = vld [vmem:[#allocation11 + $0x148] sm:$0xff]
    %v3770 = vld [vmem:[#allocation11 + $0x150] sm:$0xf]
    %v3771 = vld [vmem:[#allocation11 + $0x154] sm:$0xff]
    %v3772 = vld [vmem:[#allocation11 + $0x15c] sm:$0xff]
    %v3773 = vld [vmem:[#allocation11 + $0x164] sm:$0xf]
    %v3774 = vld [vmem:[#allocation11 + $0x168] sm:$0xff]
    %v3775 = vld [vmem:[#allocation11 + $0x170] sm:$0xff]
    %v3776 = vld [vmem:[#allocation11 + $0x178] sm:$0xf]
    %v3777 = vld [vmem:[#allocation11 + $0x17c] sm:$0xff]
    %v3778 = vld [vmem:[#allocation11 + $0x184] sm:$0xff]
    %v3779 = vld [vmem:[#allocation11 + $0x18c] sm:$0xf]
    %v3780 = vld [vmem:[#allocation11 + $0x190] sm:$0xff]
    %v3781 = vld [vmem:[#allocation11 + $0x198] sm:$0xff]
    %v3782 = vld [vmem:[#allocation11 + $0x1a0] sm:$0xf]
    %v3783 = vld [vmem:[#allocation11 + $0x1a4] sm:$0xff]
    %v3784 = vld [vmem:[#allocation11 + $0x1ac] sm:$0xff]
    %v3785 = vld [vmem:[#allocation11 + $0x1b4] sm:$0xf]
    %v3786 = vld [vmem:[#allocation11 + $0x1b8] sm:$0xff]
    %v3787 = vld [vmem:[#allocation11 + $0x1c0] sm:$0xff]
    %v3788 = vld [vmem:[#allocation11 + $0x1c8] sm:$0xf]
    %v3789 = vld [vmem:[#allocation11 + $0x1cc] sm:$0xff]
    %v3790 = vld [vmem:[#allocation11 + $0x1d4] sm:$0xff]
    %v3791 = vld [vmem:[#allocation11 + $0x1dc] sm:$0xf]
    %v3792 = vld [vmem:[#allocation11 + $0x1e0] sm:$0xff]
    %v3793 = vld [vmem:[#allocation11 + $0x1e8] sm:$0xff]
    %v3794 = vld [vmem:[#allocation11 + $0x1f0] sm:$0xf]
    %v3795 = vld [vmem:[#allocation11 + $0x1f4] sm:$0xff]
    %v3796 = vld [vmem:[#allocation11 + $0x1fc] sm:$0xff]
    %v3797 = vld [vmem:[#allocation11 + $0x204] sm:$0xf]
    %v3798 = vld [vmem:[#allocation11 + $0x208] sm:$0xff]
    %v3799 = vld [vmem:[#allocation11 + $0x210] sm:$0xff]
    %v3800 = vld [vmem:[#allocation11 + $0x218] sm:$0xf]
    %v3801 = vld [vmem:[#allocation11 + $0x21c] sm:$0xff]
    %v3802 = vld [vmem:[#allocation11 + $0x224] sm:$0xff]
    %v3803 = vld [vmem:[#allocation11 + $0x22c] sm:$0xf]
    %v3804 = vld [vmem:[#allocation11 + $0x230] sm:$0xff]
    %v3805 = vld [vmem:[#allocation11 + $0x238] sm:$0xff]
    %v3806 = vld [vmem:[#allocation11 + $0x240] sm:$0xf]
    %v3807 = vld [vmem:[#allocation11 + $0x244] sm:$0xff]
    %v3808 = vld [vmem:[#allocation11 + $0x24c] sm:$0xff]
    %v3809 = vld [vmem:[#allocation11 + $0x254] sm:$0xf]
    %v3810 = vld [vmem:[#allocation11 + $0x258] sm:$0xff]
    %v3811 = vld [vmem:[#allocation11 + $0x260] sm:$0xff]
    %v3812 = vld [vmem:[#allocation11 + $0x268] sm:$0xf]
    %v3813 = vld [vmem:[#allocation11 + $0x26c] sm:$0xff]
    %v3814 = vld [vmem:[#allocation11 + $0x274] sm:$0xff]
    %v3815 = vld [vmem:[#allocation11 + $0x27c] sm:$0xf]
    %v3816 = vld [vmem:[#allocation11 + $0x280] sm:$0xff]
    %v3817 = vld [vmem:[#allocation11 + $0x288] sm:$0xff]
    %v3818 = vld [vmem:[#allocation11 + $0x290] sm:$0xf]
    %v3819 = vld [vmem:[#allocation11 + $0x294] sm:$0xff]
    %v3820 = vld [vmem:[#allocation11 + $0x29c] sm:$0xff]
    %v3821 = vld [vmem:[#allocation11 + $0x2a4] sm:$0xf]
    %v3822 = vld [vmem:[#allocation11 + $0x2a8] sm:$0xff]
    %v3823 = vld [vmem:[#allocation11 + $0x2b0] sm:$0xff]
    %v3824 = vld [vmem:[#allocation11 + $0x2b8] sm:$0xf]
    %v3825 = vld [vmem:[#allocation11 + $0x2bc] sm:$0xff]
    %v3826 = vld [vmem:[#allocation11 + $0x2c4] sm:$0xff]
    %v3827 = vld [vmem:[#allocation11 + $0x2cc] sm:$0xf]
    %v3828 = vld [vmem:[#allocation11 + $0x2d0] sm:$0xff]
    %v3829 = vld [vmem:[#allocation11 + $0x2d8] sm:$0xff]
    %v3830 = vld [vmem:[#allocation11 + $0x2e0] sm:$0xf]
    %v3831 = vld [vmem:[#allocation11 + $0x2e4] sm:$0xff]
    %v3832 = vld [vmem:[#allocation11 + $0x2ec] sm:$0xff]
    %v3833 = vld [vmem:[#allocation11 + $0x2f4] sm:$0xf]
    %v3834 = vld [vmem:[#allocation11 + $0x2f8] sm:$0xff]
    %v3835 = vld [vmem:[#allocation11 + $0x300] sm:$0xff]
    %v3836 = vld [vmem:[#allocation11 + $0x308] sm:$0xf]
    %v3837 = vld [vmem:[#allocation11 + $0x30c] sm:$0xff]
    %v3838 = vld [vmem:[#allocation11 + $0x314] sm:$0xff]
    %v3839 = vld [vmem:[#allocation11 + $0x31c] sm:$0xf]
    %v3840 = vld [vmem:[#allocation11 + $0x320] sm:$0xff]
    %v3841 = vld [vmem:[#allocation11 + $0x328] sm:$0xff]
    %v3842 = vld [vmem:[#allocation11 + $0x330] sm:$0xf]
    %v3843 = vld [vmem:[#allocation11 + $0x334] sm:$0xff]
    %v3844 = vld [vmem:[#allocation11 + $0x33c] sm:$0xff]
    %v3845 = vld [vmem:[#allocation11 + $0x344] sm:$0xf]
    %v3846 = vld [vmem:[#allocation11 + $0x348] sm:$0xff]
    %v3847 = vld [vmem:[#allocation11 + $0x350] sm:$0xff]
    %v3848 = vld [vmem:[#allocation11 + $0x358] sm:$0xf]
    %v3849 = vld [vmem:[#allocation11 + $0x35c] sm:$0xff]
    %v3850 = vld [vmem:[#allocation11 + $0x364] sm:$0xff]
    %v3851 = vld [vmem:[#allocation11 + $0x36c] sm:$0xf]
    %v3852 = vld [vmem:[#allocation11 + $0x370] sm:$0xff]
    %v3853 = vld [vmem:[#allocation11 + $0x378] sm:$0xff]
    %v3854 = vld [vmem:[#allocation11 + $0x380] sm:$0xf]
    %v3855 = vld [vmem:[#allocation11 + $0x384] sm:$0xff]
    %v3856 = vld [vmem:[#allocation11 + $0x38c] sm:$0xff]
    %v3857 = vld [vmem:[#allocation11 + $0x394] sm:$0xf]
    %v3858 = vld [vmem:[#allocation11 + $0x398] sm:$0xff]
    %v3859 = vld [vmem:[#allocation11 + $0x3a0] sm:$0xff]
    %v3860 = vld [vmem:[#allocation11 + $0x3a8] sm:$0xf]
    %v3861 = vld [vmem:[#allocation11 + $0x3ac] sm:$0xff]
    %v3862 = vld [vmem:[#allocation11 + $0x3b4] sm:$0xff]
    %v3863 = vld [vmem:[#allocation11 + $0x3bc] sm:$0xf]
    %v3864 = vld [vmem:[#allocation11 + $0x3c0] sm:$0xff]
    %v3865 = vld [vmem:[#allocation11 + $0x3c8] sm:$0xff]
    %v3866 = vld [vmem:[#allocation11 + $0x3d0] sm:$0xf]
    %v3867 = vld [vmem:[#allocation11 + $0x3d4] sm:$0xff]
    %v3868 = vld [vmem:[#allocation11 + $0x3dc] sm:$0xff]
    %v3869 = vld [vmem:[#allocation11 + $0x3e4] sm:$0xf]
    %v3870 = vld [vmem:[#allocation11 + $0x3e8] sm:$0xff]
    %v3871 = vld [vmem:[#allocation11 + $0x3f0] sm:$0xff]
    %v3872 = vld [vmem:[#allocation11 + $0x3f8] sm:$0xf]
    %v3873 = vld [vmem:[#allocation11 + $0x3fc] sm:$0xff]
    %v3874 = vld [vmem:[#allocation11 + $0x404] sm:$0xff]
    %v3875 = vld [vmem:[#allocation11 + $0x40c] sm:$0xf]
    %v3876 = vld [vmem:[#allocation11 + $0x410] sm:$0xff]
    %v3877 = vld [vmem:[#allocation11 + $0x418] sm:$0xff]
    %v3878 = vld [vmem:[#allocation11 + $0x420] sm:$0xf]
    %v3879 = vld [vmem:[#allocation11 + $0x424] sm:$0xff]
    %v3880 = vld [vmem:[#allocation11 + $0x42c] sm:$0xff]
    %v3881 = vld [vmem:[#allocation11 + $0x434] sm:$0xf]
    %v3882 = vld [vmem:[#allocation11 + $0x438] sm:$0xff]
    %v3883 = vld [vmem:[#allocation11 + $0x440] sm:$0xff]
    %v3884 = vld [vmem:[#allocation11 + $0x448] sm:$0xf]
    %v3885 = vld [vmem:[#allocation11 + $0x44c] sm:$0xff]
    %v3886 = vld [vmem:[#allocation11 + $0x454] sm:$0xff]
    %v3887 = vld [vmem:[#allocation11 + $0x45c] sm:$0xf]
    %v3888 = vld [vmem:[#allocation11 + $0x460] sm:$0xff]
    %v3889 = vld [vmem:[#allocation11 + $0x468] sm:$0xff]
    %v3890 = vld [vmem:[#allocation11 + $0x470] sm:$0xf]
    %v3891 = vld [vmem:[#allocation11 + $0x474] sm:$0xff]
    %v3892 = vld [vmem:[#allocation11 + $0x47c] sm:$0xff]
    %v3893 = vld [vmem:[#allocation11 + $0x484] sm:$0xf]
    %v3894 = vld [vmem:[#allocation11 + $0x488] sm:$0xff]
    %v3895 = vld [vmem:[#allocation11 + $0x490] sm:$0xff]
    %v3896 = vld [vmem:[#allocation11 + $0x498] sm:$0xf]
    %v3897 = vld [vmem:[#allocation11 + $0x49c] sm:$0xff]
    %v3898 = vld [vmem:[#allocation11 + $0x4a4] sm:$0xff]
    %v3899 = vld [vmem:[#allocation11 + $0x4ac] sm:$0xf]
    %v3900 = vld [vmem:[#allocation11 + $0x4b0] sm:$0xff]
    %v3901 = vld [vmem:[#allocation11 + $0x4b8] sm:$0xff]
    %v3902 = vld [vmem:[#allocation11 + $0x4c0] sm:$0xf]
    %v3903 = vld [vmem:[#allocation11 + $0x4c4] sm:$0xff]
    %v3904 = vld [vmem:[#allocation11 + $0x4cc] sm:$0xff]
    %v3905 = vld [vmem:[#allocation11 + $0x4d4] sm:$0xf]
    %v3906 = vld [vmem:[#allocation11 + $0x4d8] sm:$0xff]
    %v3907 = vld [vmem:[#allocation11 + $0x4e0] sm:$0xff]
    %v3908 = vld [vmem:[#allocation11 + $0x4e8] sm:$0xf]
    %v3909 = vld [vmem:[#allocation11 + $0x4ec] sm:$0xff]
    %v3910 = vld [vmem:[#allocation11 + $0x4f4] sm:$0xff]
    %v3911 = vld [vmem:[#allocation11 + $0x4fc] sm:$0xf]
    %v3912 = vld [vmem:[#allocation11 + $0x500] sm:$0xff]
    %v3913 = vld [vmem:[#allocation11 + $0x508] sm:$0xff]
    %v3914 = vld [vmem:[#allocation11 + $0x510] sm:$0xf]
    %v3915 = vld [vmem:[#allocation11 + $0x514] sm:$0xff]
    %v3916 = vld [vmem:[#allocation11 + $0x51c] sm:$0xff]
    %v3917 = vld [vmem:[#allocation11 + $0x524] sm:$0xf]
    %v3918 = vld [vmem:[#allocation11 + $0x528] sm:$0xff]
    %v3919 = vld [vmem:[#allocation11 + $0x530] sm:$0xff]
    %v3920 = vld [vmem:[#allocation11 + $0x538] sm:$0xf]
    %v3921 = vld [vmem:[#allocation11 + $0x53c] sm:$0xff]
    %v3922 = vld [vmem:[#allocation11 + $0x544] sm:$0xff]
    %v3923 = vld [vmem:[#allocation11 + $0x54c] sm:$0xf]
    %v3924 = vld [vmem:[#allocation11 + $0x550] sm:$0xff]
    %v3925 = vld [vmem:[#allocation11 + $0x558] sm:$0xff]
    %v3926 = vld [vmem:[#allocation11 + $0x560] sm:$0xf]
    %v3927 = vld [vmem:[#allocation11 + $0x564] sm:$0xff]
    %v3928 = vld [vmem:[#allocation11 + $0x56c] sm:$0xff]
    %v3929 = vld [vmem:[#allocation11 + $0x574] sm:$0xf]
    %v3930 = vld [vmem:[#allocation11 + $0x578] sm:$0xff]
    %v3931 = vld [vmem:[#allocation11 + $0x580] sm:$0xff]
    %v3932 = vld [vmem:[#allocation11 + $0x588] sm:$0xf]
    %v3933 = vld [vmem:[#allocation11 + $0x58c] sm:$0xff]
    %v3934 = vld [vmem:[#allocation11 + $0x594] sm:$0xff]
    %v3935 = vld [vmem:[#allocation11 + $0x59c] sm:$0xf]
    %v3936 = vld [vmem:[#allocation11 + $0x5a0] sm:$0xff]
    %v3937 = vld [vmem:[#allocation11 + $0x5a8] sm:$0xff]
    %v3938 = vld [vmem:[#allocation11 + $0x5b0] sm:$0xf]
    %v3939 = vld [vmem:[#allocation11 + $0x5b4] sm:$0xff]
    %v3940 = vld [vmem:[#allocation11 + $0x5bc] sm:$0xff]
    %v3941 = vld [vmem:[#allocation11 + $0x5c4] sm:$0xf]
    %v3942 = vld [vmem:[#allocation11 + $0x5c8] sm:$0xff]
    %v3943 = vld [vmem:[#allocation11 + $0x5d0] sm:$0xff]
    %v3944 = vld [vmem:[#allocation11 + $0x5d8] sm:$0xf]
    %v3945 = vld [vmem:[#allocation11 + $0x5dc] sm:$0xff]
    %v3946 = vld [vmem:[#allocation11 + $0x5e4] sm:$0xff]
    %v3947 = vld [vmem:[#allocation11 + $0x5ec] sm:$0xf]
    %v3948 = vld [vmem:[#allocation11 + $0x5f0] sm:$0xff]
    %v3949 = vld [vmem:[#allocation11 + $0x5f8] sm:$0xff]
    %v3950 = vld [vmem:[#allocation11 + $0x600] sm:$0xf]
    %v3951 = vld [vmem:[#allocation11 + $0x604] sm:$0xff]
    %v3952 = vld [vmem:[#allocation11 + $0x60c] sm:$0xff]
    %v3953 = vld [vmem:[#allocation11 + $0x614] sm:$0xf]
    %v3954 = vld [vmem:[#allocation11 + $0x618] sm:$0xff]
    %v3955 = vld [vmem:[#allocation11 + $0x620] sm:$0xff]
    %v3956 = vld [vmem:[#allocation11 + $0x628] sm:$0xf]
    %v3957 = vld [vmem:[#allocation11 + $0x62c] sm:$0xff]
    %v3958 = vld [vmem:[#allocation11 + $0x634] sm:$0xff]
    %v3959 = vld [vmem:[#allocation11 + $0x63c] sm:$0xf]
    %v3960 = vld [vmem:[%s1] sm:$0xff]
    %v3961 = vpack.c.bf16 %v3960, %v3960
    %v3962 = vld [vmem:[%s9] sm:$0xff]
    %v3963 = vld [vmem:[%s9 + $0x8] sm:$0x3]
    %v3966 = vcombine.high %v3962, %v3962
    %v3968 = vunpack.c.l.s4 1983009808
    %v3969 = vunpack.c.0.s8 %v3968
    %v3970 = vlaneseq
    %v3971 = vshrl.u32 %v3970, 7
    %v3972 = vsub.s32 %v3969, %v3971
    %v3973 = vrot.slane %v3962, %v3972
    %v3975 = vunpack.c.l.s4 1983009808
    %v3976 = vunpack.c.0.s8 %v3975
    %v3977 = vlaneseq
    %v3978 = vshrl.u32 %v3977, 7
    %v3979 = vsub.s32 %v3976, %v3978
    %v3980 = vrot.slane %v3966, %v3979
    %v3981 = vcombine.high %v3973, %v3973
    %v3982 = vcombine.high %v3980, %v3980
    %v3984 = vunpack.c.l.s4 1983009808
    %v3985 = vunpack.c.0.s8 %v3984
    %v3986 = vlaneseq
    %v3987 = vshrl.u32 %v3986, 7
    %v3988 = vsub.s32 %v3985, %v3987
    %v3989 = vrot.slane %v3963, %v3988
    %vm3990 = vcmask 31744
    %v3992 = vsel %vm3990, %v3961, 0
    %vm3994 = vcmask 1041408
    %v3996 = vsel %vm3994, %v3973, 0
    %v3999 = vsel %vm3994, %v3981, 0
    %v4002 = vsel %vm3994, %v3980, 0
    %v4005 = vsel %vm3994, %v3982, 0
    %v4008 = vsel %vm3994, %v3989, 0
    %4010 = vmatprep.subr.bf16.mxu0 0
    %4011 = vmatpush1.bf16.msra.mxu0 0
    %4012 = vmatprep.subr.bf16.mxu0 0
    %4013 = vmatpush1.bf16.msra.mxu0 0
    %4014 = vmatprep.subr.bf16.mxu0 0
    %4015 = vmatpush1.bf16.msra.mxu0 0
    %4016 = vmatprep.subr.bf16.mxu0 0
    %4017 = vmatpush1.bf16.msra.mxu0 0
    %4018 = vmatprep.subr.bf16.mxu0 0
    %4019 = vmatpush1.bf16.msra.mxu0 0
    %4020 = vmatprep.subr.bf16.mxu0 0
    %4021 = vmatpush1.bf16.msra.mxu0 0
    %4022 = vmatprep.subr.bf16.mxu0 0
    %4023 = vmatpush1.bf16.msra.mxu0 0
    %4024 = vmatprep.subr.bf16.mxu0 %v3999
    %4025 = vmatpush1.bf16.msra.mxu0 %v3996
    %4026 = vmatprep.subr.bf16.mxu0 0
    %4027 = vmatpush2.bf16.msra.mxu0 0
    %4028 = vmatprep.subr.bf16.mxu0 0
    %4029 = vmatpush2.bf16.msra.mxu0 0
    %4030 = vmatprep.subr.bf16.mxu0 0
    %4031 = vmatpush2.bf16.msra.mxu0 0
    %4032 = vmatprep.subr.bf16.mxu0 0
    %4033 = vmatpush2.bf16.msra.mxu0 0
    %4034 = vmatprep.subr.bf16.mxu0 0
    %4035 = vmatpush2.bf16.msra.mxu0 0
    %4036 = vmatprep.subr.bf16.mxu0 0
    %4037 = vmatpush2.bf16.msra.mxu0 0
    %4038 = vmatprep.subr.bf16.mxu0 0
    %4039 = vmatpush2.bf16.msra.mxu0 0
    %4040 = vmatprep.subr.bf16.mxu0 0
    %4041 = vmatpush2.bf16.msra.mxu0 0
    %4042 = vmatprep.mubr.bf16.mxu0 0
    %4043 = vmatmul.mubr.bf16.gmra.mxu0 %v3992
    %v4044 = vpop.f32.mrf.mxu0
    %v4045 = vadd.f32 0.0, %v4044
    %v4046 = vpop.f32.mrf.mxu0
    %v4047 = vadd.f32 0.0, %v4046
    %v4048 = vpop.f32.mrf.mxu0
    %v4049 = vpop.f32.mrf.mxu0
    %4050 = vdwg.mxu0
    %4051 = vmatprep.subr.bf16.mxu0 0
    %4052 = vmatpush1.bf16.msra.mxu0 0
    %4053 = vmatprep.subr.bf16.mxu0 0
    %4054 = vmatpush1.bf16.msra.mxu0 0
    %4055 = vmatprep.subr.bf16.mxu0 0
    %4056 = vmatpush1.bf16.msra.mxu0 0
    %4057 = vmatprep.subr.bf16.mxu0 0
    %4058 = vmatpush1.bf16.msra.mxu0 0
    %4059 = vmatprep.subr.bf16.mxu0 0
    %4060 = vmatpush1.bf16.msra.mxu0 0
    %4061 = vmatprep.subr.bf16.mxu0 0
    %4062 = vmatpush1.bf16.msra.mxu0 0
    %4063 = vmatprep.subr.bf16.mxu0 0
    %4064 = vmatpush1.bf16.msra.mxu0 0
    %4065 = vmatprep.subr.bf16.mxu0 %v4005
    %4066 = vmatpush1.bf16.msra.mxu0 %v4002
    %4067 = vmatprep.subr.bf16.mxu0 0
    %4068 = vmatpush2.bf16.msra.mxu0 0
    %4069 = vmatprep.subr.bf16.mxu0 0
    %4070 = vmatpush2.bf16.msra.mxu0 0
    %4071 = vmatprep.subr.bf16.mxu0 0
    %4072 = vmatpush2.bf16.msra.mxu0 0
    %4073 = vmatprep.subr.bf16.mxu0 0
    %4074 = vmatpush2.bf16.msra.mxu0 0
    %4075 = vmatprep.subr.bf16.mxu0 0
    %4076 = vmatpush2.bf16.msra.mxu0 0
    %4077 = vmatprep.subr.bf16.mxu0 0
    %4078 = vmatpush2.bf16.msra.mxu0 0
    %4079 = vmatprep.subr.bf16.mxu0 0
    %4080 = vmatpush2.bf16.msra.mxu0 0
    %4081 = vmatprep.subr.bf16.mxu0 0
    %4082 = vmatpush2.bf16.msra.mxu0 0
    %4083 = vmatprep.mubr.bf16.mxu0 0
    %4084 = vmatmul.mubr.bf16.gmra.mxu0 %v3992
    %v4085 = vpop.f32.mrf.mxu0
    %v4086 = vadd.f32 0.0, %v4085
    %v4087 = vpop.f32.mrf.mxu0
    %v4088 = vadd.f32 0.0, %v4087
    %v4089 = vpop.f32.mrf.mxu0
    %v4090 = vpop.f32.mrf.mxu0
    %4091 = vdwg.mxu0
    %4092 = vmatprep.subr.bf16.mxu0 0
    %4093 = vmatpush1.bf16.msra.mxu0 0
    %4094 = vmatprep.subr.bf16.mxu0 0
    %4095 = vmatpush1.bf16.msra.mxu0 0
    %4096 = vmatprep.subr.bf16.mxu0 0
    %4097 = vmatpush1.bf16.msra.mxu0 0
    %4098 = vmatprep.subr.bf16.mxu0 0
    %4099 = vmatpush1.bf16.msra.mxu0 0
    %4100 = vmatprep.subr.bf16.mxu0 0
    %4101 = vmatpush1.bf16.msra.mxu0 0
    %4102 = vmatprep.subr.bf16.mxu0 0
    %4103 = vmatpush1.bf16.msra.mxu0 0
    %4104 = vmatprep.subr.bf16.mxu0 0
    %4105 = vmatpush1.bf16.msra.mxu0 0
    %4106 = vmatprep.subr.bf16.mxu0 0
    %4107 = vmatpush1.bf16.msra.mxu0 %v4008
    %4108 = vmatprep.subr.bf16.mxu0 0
    %4109 = vmatpush2.bf16.msra.mxu0 0
    %4110 = vmatprep.subr.bf16.mxu0 0
    %4111 = vmatpush2.bf16.msra.mxu0 0
    %4112 = vmatprep.subr.bf16.mxu0 0
    %4113 = vmatpush2.bf16.msra.mxu0 0
    %4114 = vmatprep.subr.bf16.mxu0 0
    %4115 = vmatpush2.bf16.msra.mxu0 0
    %4116 = vmatprep.subr.bf16.mxu0 0
    %4117 = vmatpush2.bf16.msra.mxu0 0
    %4118 = vmatprep.subr.bf16.mxu0 0
    %4119 = vmatpush2.bf16.msra.mxu0 0
    %4120 = vmatprep.subr.bf16.mxu0 0
    %4121 = vmatpush2.bf16.msra.mxu0 0
    %4122 = vmatprep.subr.bf16.mxu0 0
    %4123 = vmatpush2.bf16.msra.mxu0 0
    %4124 = vmatprep.mubr.bf16.mxu0 0
    %4125 = vmatmul.mubr.bf16.gmra.mxu0 %v3992
    %v4126 = vpop.f32.mrf.mxu0
    %v4127 = vadd.f32 0.0, %v4126
    %v4128 = vpop.f32.mrf.mxu0
    %v4129 = vpop.f32.mrf.mxu0
    %v4130 = vpop.f32.mrf.mxu0
    %4131 = vdwg.mxu0
    %v4372 = vunpack.c.l.b16 %v3720
    %v4373 = vunpack.c.h.b16 %v3720
    %v4374 = vunpack.c.l.b16 %v3721
    %v4375 = vunpack.c.h.b16 %v3721
    %v4376 = vunpack.c.l.b16 %v3722
    %v4377 = vunpack.c.l.b16 %v3723
    %v4378 = vunpack.c.h.b16 %v3723
    %v4379 = vunpack.c.l.b16 %v3724
    %v4380 = vunpack.c.h.b16 %v3724
    %v4381 = vunpack.c.l.b16 %v3725
    %v4382 = vunpack.c.l.b16 %v3726
    %v4383 = vunpack.c.h.b16 %v3726
    %v4384 = vunpack.c.l.b16 %v3727
    %v4385 = vunpack.c.h.b16 %v3727
    %v4386 = vunpack.c.l.b16 %v3728
    %v4387 = vunpack.c.l.b16 %v3729
    %v4388 = vunpack.c.h.b16 %v3729
    %v4389 = vunpack.c.l.b16 %v3730
    %v4390 = vunpack.c.h.b16 %v3730
    %v4391 = vunpack.c.l.b16 %v3731
    %v4392 = vunpack.c.l.b16 %v3732
    %v4393 = vunpack.c.h.b16 %v3732
    %v4394 = vunpack.c.l.b16 %v3733
    %v4395 = vunpack.c.h.b16 %v3733
    %v4396 = vunpack.c.l.b16 %v3734
    %v4397 = vunpack.c.l.b16 %v3735
    %v4398 = vunpack.c.h.b16 %v3735
    %v4399 = vunpack.c.l.b16 %v3736
    %v4400 = vunpack.c.h.b16 %v3736
    %v4401 = vunpack.c.l.b16 %v3737
    %v4402 = vunpack.c.l.b16 %v3738
    %v4403 = vunpack.c.h.b16 %v3738
    %v4404 = vunpack.c.l.b16 %v3739
    %v4405 = vunpack.c.h.b16 %v3739
    %v4406 = vunpack.c.l.b16 %v3740
    %v4407 = vunpack.c.l.b16 %v3741
    %v4408 = vunpack.c.h.b16 %v3741
    %v4409 = vunpack.c.l.b16 %v3742
    %v4410 = vunpack.c.h.b16 %v3742
    %v4411 = vunpack.c.l.b16 %v3743
    %v4412 = vunpack.c.l.b16 %v3744
    %v4413 = vunpack.c.h.b16 %v3744
    %v4414 = vunpack.c.l.b16 %v3745
    %v4415 = vunpack.c.h.b16 %v3745
    %v4416 = vunpack.c.l.b16 %v3746
    %v4417 = vunpack.c.l.b16 %v3747
    %v4418 = vunpack.c.h.b16 %v3747
    %v4419 = vunpack.c.l.b16 %v3748
    %v4420 = vunpack.c.h.b16 %v3748
    %v4421 = vunpack.c.l.b16 %v3749
    %v4422 = vunpack.c.l.b16 %v3750
    %v4423 = vunpack.c.h.b16 %v3750
    %v4424 = vunpack.c.l.b16 %v3751
    %v4425 = vunpack.c.h.b16 %v3751
    %v4426 = vunpack.c.l.b16 %v3752
    %v4427 = vunpack.c.l.b16 %v3753
    %v4428 = vunpack.c.h.b16 %v3753
    %v4429 = vunpack.c.l.b16 %v3754
    %v4430 = vunpack.c.h.b16 %v3754
    %v4431 = vunpack.c.l.b16 %v3755
    %v4432 = vunpack.c.l.b16 %v3756
    %v4433 = vunpack.c.h.b16 %v3756
    %v4434 = vunpack.c.l.b16 %v3757
    %v4435 = vunpack.c.h.b16 %v3757
    %v4436 = vunpack.c.l.b16 %v3758
    %v4437 = vunpack.c.l.b16 %v3759
    %v4438 = vunpack.c.h.b16 %v3759
    %v4439 = vunpack.c.l.b16 %v3760
    %v4440 = vunpack.c.h.b16 %v3760
    %v4441 = vunpack.c.l.b16 %v3761
    %v4442 = vunpack.c.l.b16 %v3762
    %v4443 = vunpack.c.h.b16 %v3762
    %v4444 = vunpack.c.l.b16 %v3763
    %v4445 = vunpack.c.h.b16 %v3763
    %v4446 = vunpack.c.l.b16 %v3764
    %v4447 = vunpack.c.l.b16 %v3765
    %v4448 = vunpack.c.h.b16 %v3765
    %v4449 = vunpack.c.l.b16 %v3766
    %v4450 = vunpack.c.h.b16 %v3766
    %v4451 = vunpack.c.l.b16 %v3767
    %v4452 = vunpack.c.l.b16 %v3768
    %v4453 = vunpack.c.h.b16 %v3768
    %v4454 = vunpack.c.l.b16 %v3769
    %v4455 = vunpack.c.h.b16 %v3769
    %v4456 = vunpack.c.l.b16 %v3770
    %v4457 = vunpack.c.l.b16 %v3771
    %v4458 = vunpack.c.h.b16 %v3771
    %v4459 = vunpack.c.l.b16 %v3772
    %v4460 = vunpack.c.h.b16 %v3772
    %v4461 = vunpack.c.l.b16 %v3773
    %v4462 = vunpack.c.l.b16 %v3774
    %v4463 = vunpack.c.h.b16 %v3774
    %v4464 = vunpack.c.l.b16 %v3775
    %v4465 = vunpack.c.h.b16 %v3775
    %v4466 = vunpack.c.l.b16 %v3776
    %v4467 = vunpack.c.l.b16 %v3777
    %v4468 = vunpack.c.h.b16 %v3777
    %v4469 = vunpack.c.l.b16 %v3778
    %v4470 = vunpack.c.h.b16 %v3778
    %v4471 = vunpack.c.l.b16 %v3779
    %v4472 = vunpack.c.l.b16 %v3780
    %v4473 = vunpack.c.h.b16 %v3780
    %v4474 = vunpack.c.l.b16 %v3781
    %v4475 = vunpack.c.h.b16 %v3781
    %v4476 = vunpack.c.l.b16 %v3782
    %v4477 = vunpack.c.l.b16 %v3783
    %v4478 = vunpack.c.h.b16 %v3783
    %v4479 = vunpack.c.l.b16 %v3784
    %v4480 = vunpack.c.h.b16 %v3784
    %v4481 = vunpack.c.l.b16 %v3785
    %v4482 = vunpack.c.l.b16 %v3786
    %v4483 = vunpack.c.h.b16 %v3786
    %v4484 = vunpack.c.l.b16 %v3787
    %v4485 = vunpack.c.h.b16 %v3787
    %v4486 = vunpack.c.l.b16 %v3788
    %v4487 = vunpack.c.l.b16 %v3789
    %v4488 = vunpack.c.h.b16 %v3789
    %v4489 = vunpack.c.l.b16 %v3790
    %v4490 = vunpack.c.h.b16 %v3790
    %v4491 = vunpack.c.l.b16 %v3791
    %v4492 = vunpack.c.l.b16 %v3792
    %v4493 = vunpack.c.h.b16 %v3792
    %v4494 = vunpack.c.l.b16 %v3793
    %v4495 = vunpack.c.h.b16 %v3793
    %v4496 = vunpack.c.l.b16 %v3794
    %v4497 = vunpack.c.l.b16 %v3795
    %v4498 = vunpack.c.h.b16 %v3795
    %v4499 = vunpack.c.l.b16 %v3796
    %v4500 = vunpack.c.h.b16 %v3796
    %v4501 = vunpack.c.l.b16 %v3797
    %v4502 = vunpack.c.l.b16 %v3798
    %v4503 = vunpack.c.h.b16 %v3798
    %v4504 = vunpack.c.l.b16 %v3799
    %v4505 = vunpack.c.h.b16 %v3799
    %v4506 = vunpack.c.l.b16 %v3800
    %v4507 = vunpack.c.l.b16 %v3801
    %v4508 = vunpack.c.h.b16 %v3801
    %v4509 = vunpack.c.l.b16 %v3802
    %v4510 = vunpack.c.h.b16 %v3802
    %v4511 = vunpack.c.l.b16 %v3803
    %v4512 = vunpack.c.l.b16 %v3804
    %v4513 = vunpack.c.h.b16 %v3804
    %v4514 = vunpack.c.l.b16 %v3805
    %v4515 = vunpack.c.h.b16 %v3805
    %v4516 = vunpack.c.l.b16 %v3806
    %v4517 = vunpack.c.l.b16 %v3807
    %v4518 = vunpack.c.h.b16 %v3807
    %v4519 = vunpack.c.l.b16 %v3808
    %v4520 = vunpack.c.h.b16 %v3808
    %v4521 = vunpack.c.l.b16 %v3809
    %v4522 = vunpack.c.l.b16 %v3810
    %v4523 = vunpack.c.h.b16 %v3810
    %v4524 = vunpack.c.l.b16 %v3811
    %v4525 = vunpack.c.h.b16 %v3811
    %v4526 = vunpack.c.l.b16 %v3812
    %v4527 = vunpack.c.l.b16 %v3813
    %v4528 = vunpack.c.h.b16 %v3813
    %v4529 = vunpack.c.l.b16 %v3814
    %v4530 = vunpack.c.h.b16 %v3814
    %v4531 = vunpack.c.l.b16 %v3815
    %v4532 = vunpack.c.l.b16 %v3816
    %v4533 = vunpack.c.h.b16 %v3816
    %v4534 = vunpack.c.l.b16 %v3817
    %v4535 = vunpack.c.h.b16 %v3817
    %v4536 = vunpack.c.l.b16 %v3818
    %v4537 = vunpack.c.l.b16 %v3819
    %v4538 = vunpack.c.h.b16 %v3819
    %v4539 = vunpack.c.l.b16 %v3820
    %v4540 = vunpack.c.h.b16 %v3820
    %v4541 = vunpack.c.l.b16 %v3821
    %v4542 = vunpack.c.l.b16 %v3822
    %v4543 = vunpack.c.h.b16 %v3822
    %v4544 = vunpack.c.l.b16 %v3823
    %v4545 = vunpack.c.h.b16 %v3823
    %v4546 = vunpack.c.l.b16 %v3824
    %v4547 = vunpack.c.l.b16 %v3825
    %v4548 = vunpack.c.h.b16 %v3825
    %v4549 = vunpack.c.l.b16 %v3826
    %v4550 = vunpack.c.h.b16 %v3826
    %v4551 = vunpack.c.l.b16 %v3827
    %v4552 = vunpack.c.l.b16 %v3828
    %v4553 = vunpack.c.h.b16 %v3828
    %v4554 = vunpack.c.l.b16 %v3829
    %v4555 = vunpack.c.h.b16 %v3829
    %v4556 = vunpack.c.l.b16 %v3830
    %v4557 = vunpack.c.l.b16 %v3831
    %v4558 = vunpack.c.h.b16 %v3831
    %v4559 = vunpack.c.l.b16 %v3832
    %v4560 = vunpack.c.h.b16 %v3832
    %v4561 = vunpack.c.l.b16 %v3833
    %v4562 = vunpack.c.l.b16 %v3834
    %v4563 = vunpack.c.h.b16 %v3834
    %v4564 = vunpack.c.l.b16 %v3835
    %v4565 = vunpack.c.h.b16 %v3835
    %v4566 = vunpack.c.l.b16 %v3836
    %v4567 = vunpack.c.l.b16 %v3837
    %v4568 = vunpack.c.h.b16 %v3837
    %v4569 = vunpack.c.l.b16 %v3838
    %v4570 = vunpack.c.h.b16 %v3838
    %v4571 = vunpack.c.l.b16 %v3839
    %v4572 = vunpack.c.l.b16 %v3840
    %v4573 = vunpack.c.h.b16 %v3840
    %v4574 = vunpack.c.l.b16 %v3841
    %v4575 = vunpack.c.h.b16 %v3841
    %v4576 = vunpack.c.l.b16 %v3842
    %v4577 = vunpack.c.l.b16 %v3843
    %v4578 = vunpack.c.h.b16 %v3843
    %v4579 = vunpack.c.l.b16 %v3844
    %v4580 = vunpack.c.h.b16 %v3844
    %v4581 = vunpack.c.l.b16 %v3845
    %v4582 = vunpack.c.l.b16 %v3846
    %v4583 = vunpack.c.h.b16 %v3846
    %v4584 = vunpack.c.l.b16 %v3847
    %v4585 = vunpack.c.h.b16 %v3847
    %v4586 = vunpack.c.l.b16 %v3848
    %v4587 = vunpack.c.l.b16 %v3849
    %v4588 = vunpack.c.h.b16 %v3849
    %v4589 = vunpack.c.l.b16 %v3850
    %v4590 = vunpack.c.h.b16 %v3850
    %v4591 = vunpack.c.l.b16 %v3851
    %v4592 = vunpack.c.l.b16 %v3852
    %v4593 = vunpack.c.h.b16 %v3852
    %v4594 = vunpack.c.l.b16 %v3853
    %v4595 = vunpack.c.h.b16 %v3853
    %v4596 = vunpack.c.l.b16 %v3854
    %v4597 = vunpack.c.l.b16 %v3855
    %v4598 = vunpack.c.h.b16 %v3855
    %v4599 = vunpack.c.l.b16 %v3856
    %v4600 = vunpack.c.h.b16 %v3856
    %v4601 = vunpack.c.l.b16 %v3857
    %v4602 = vunpack.c.l.b16 %v3858
    %v4603 = vunpack.c.h.b16 %v3858
    %v4604 = vunpack.c.l.b16 %v3859
    %v4605 = vunpack.c.h.b16 %v3859
    %v4606 = vunpack.c.l.b16 %v3860
    %v4607 = vunpack.c.l.b16 %v3861
    %v4608 = vunpack.c.h.b16 %v3861
    %v4609 = vunpack.c.l.b16 %v3862
    %v4610 = vunpack.c.h.b16 %v3862
    %v4611 = vunpack.c.l.b16 %v3863
    %v4612 = vunpack.c.l.b16 %v3864
    %v4613 = vunpack.c.h.b16 %v3864
    %v4614 = vunpack.c.l.b16 %v3865
    %v4615 = vunpack.c.h.b16 %v3865
    %v4616 = vunpack.c.l.b16 %v3866
    %v4617 = vunpack.c.l.b16 %v3867
    %v4618 = vunpack.c.h.b16 %v3867
    %v4619 = vunpack.c.l.b16 %v3868
    %v4620 = vunpack.c.h.b16 %v3868
    %v4621 = vunpack.c.l.b16 %v3869
    %v4622 = vunpack.c.l.b16 %v3870
    %v4623 = vunpack.c.h.b16 %v3870
    %v4624 = vunpack.c.l.b16 %v3871
    %v4625 = vunpack.c.h.b16 %v3871
    %v4626 = vunpack.c.l.b16 %v3872
    %v4627 = vunpack.c.l.b16 %v3873
    %v4628 = vunpack.c.h.b16 %v3873
    %v4629 = vunpack.c.l.b16 %v3874
    %v4630 = vunpack.c.h.b16 %v3874
    %v4631 = vunpack.c.l.b16 %v3875
    %v4632 = vunpack.c.l.b16 %v3876
    %v4633 = vunpack.c.h.b16 %v3876
    %v4634 = vunpack.c.l.b16 %v3877
    %v4635 = vunpack.c.h.b16 %v3877
    %v4636 = vunpack.c.l.b16 %v3878
    %v4637 = vunpack.c.l.b16 %v3879
    %v4638 = vunpack.c.h.b16 %v3879
    %v4639 = vunpack.c.l.b16 %v3880
    %v4640 = vunpack.c.h.b16 %v3880
    %v4641 = vunpack.c.l.b16 %v3881
    %v4642 = vunpack.c.l.b16 %v3882
    %v4643 = vunpack.c.h.b16 %v3882
    %v4644 = vunpack.c.l.b16 %v3883
    %v4645 = vunpack.c.h.b16 %v3883
    %v4646 = vunpack.c.l.b16 %v3884
    %v4647 = vunpack.c.l.b16 %v3885
    %v4648 = vunpack.c.h.b16 %v3885
    %v4649 = vunpack.c.l.b16 %v3886
    %v4650 = vunpack.c.h.b16 %v3886
    %v4651 = vunpack.c.l.b16 %v3887
    %v4652 = vunpack.c.l.b16 %v3888
    %v4653 = vunpack.c.h.b16 %v3888
    %v4654 = vunpack.c.l.b16 %v3889
    %v4655 = vunpack.c.h.b16 %v3889
    %v4656 = vunpack.c.l.b16 %v3890
    %v4657 = vunpack.c.l.b16 %v3891
    %v4658 = vunpack.c.h.b16 %v3891
    %v4659 = vunpack.c.l.b16 %v3892
    %v4660 = vunpack.c.h.b16 %v3892
    %v4661 = vunpack.c.l.b16 %v3893
    %v4662 = vunpack.c.l.b16 %v3894
    %v4663 = vunpack.c.h.b16 %v3894
    %v4664 = vunpack.c.l.b16 %v3895
    %v4665 = vunpack.c.h.b16 %v3895
    %v4666 = vunpack.c.l.b16 %v3896
    %v4667 = vunpack.c.l.b16 %v3897
    %v4668 = vunpack.c.h.b16 %v3897
    %v4669 = vunpack.c.l.b16 %v3898
    %v4670 = vunpack.c.h.b16 %v3898
    %v4671 = vunpack.c.l.b16 %v3899
    %v4672 = vunpack.c.l.b16 %v3900
    %v4673 = vunpack.c.h.b16 %v3900
    %v4674 = vunpack.c.l.b16 %v3901
    %v4675 = vunpack.c.h.b16 %v3901
    %v4676 = vunpack.c.l.b16 %v3902
    %v4677 = vunpack.c.l.b16 %v3903
    %v4678 = vunpack.c.h.b16 %v3903
    %v4679 = vunpack.c.l.b16 %v3904
    %v4680 = vunpack.c.h.b16 %v3904
    %v4681 = vunpack.c.l.b16 %v3905
    %v4682 = vunpack.c.l.b16 %v3906
    %v4683 = vunpack.c.h.b16 %v3906
    %v4684 = vunpack.c.l.b16 %v3907
    %v4685 = vunpack.c.h.b16 %v3907
    %v4686 = vunpack.c.l.b16 %v3908
    %v4687 = vunpack.c.l.b16 %v3909
    %v4688 = vunpack.c.h.b16 %v3909
    %v4689 = vunpack.c.l.b16 %v3910
    %v4690 = vunpack.c.h.b16 %v3910
    %v4691 = vunpack.c.l.b16 %v3911
    %v4692 = vunpack.c.l.b16 %v3912
    %v4693 = vunpack.c.h.b16 %v3912
    %v4694 = vunpack.c.l.b16 %v3913
    %v4695 = vunpack.c.h.b16 %v3913
    %v4696 = vunpack.c.l.b16 %v3914
    %v4697 = vunpack.c.l.b16 %v3915
    %v4698 = vunpack.c.h.b16 %v3915
    %v4699 = vunpack.c.l.b16 %v3916
    %v4700 = vunpack.c.h.b16 %v3916
    %v4701 = vunpack.c.l.b16 %v3917
    %v4702 = vunpack.c.l.b16 %v3918
    %v4703 = vunpack.c.h.b16 %v3918
    %v4704 = vunpack.c.l.b16 %v3919
    %v4705 = vunpack.c.h.b16 %v3919
    %v4706 = vunpack.c.l.b16 %v3920
    %v4707 = vunpack.c.l.b16 %v3921
    %v4708 = vunpack.c.h.b16 %v3921
    %v4709 = vunpack.c.l.b16 %v3922
    %v4710 = vunpack.c.h.b16 %v3922
    %v4711 = vunpack.c.l.b16 %v3923
    %v4712 = vunpack.c.l.b16 %v3924
    %v4713 = vunpack.c.h.b16 %v3924
    %v4714 = vunpack.c.l.b16 %v3925
    %v4715 = vunpack.c.h.b16 %v3925
    %v4716 = vunpack.c.l.b16 %v3926
    %v4717 = vunpack.c.l.b16 %v3927
    %v4718 = vunpack.c.h.b16 %v3927
    %v4719 = vunpack.c.l.b16 %v3928
    %v4720 = vunpack.c.h.b16 %v3928
    %v4721 = vunpack.c.l.b16 %v3929
    %v4722 = vunpack.c.l.b16 %v3930
    %v4723 = vunpack.c.h.b16 %v3930
    %v4724 = vunpack.c.l.b16 %v3931
    %v4725 = vunpack.c.h.b16 %v3931
    %v4726 = vunpack.c.l.b16 %v3932
    %v4727 = vunpack.c.l.b16 %v3933
    %v4728 = vunpack.c.h.b16 %v3933
    %v4729 = vunpack.c.l.b16 %v3934
    %v4730 = vunpack.c.h.b16 %v3934
    %v4731 = vunpack.c.l.b16 %v3935
    %v4732 = vunpack.c.l.b16 %v3936
    %v4733 = vunpack.c.h.b16 %v3936
    %v4734 = vunpack.c.l.b16 %v3937
    %v4735 = vunpack.c.h.b16 %v3937
    %v4736 = vunpack.c.l.b16 %v3938
    %v4737 = vunpack.c.l.b16 %v3939
    %v4738 = vunpack.c.h.b16 %v3939
    %v4739 = vunpack.c.l.b16 %v3940
    %v4740 = vunpack.c.h.b16 %v3940
    %v4741 = vunpack.c.l.b16 %v3941
    %v4742 = vunpack.c.l.b16 %v3942
    %v4743 = vunpack.c.h.b16 %v3942
    %v4744 = vunpack.c.l.b16 %v3943
    %v4745 = vunpack.c.h.b16 %v3943
    %v4746 = vunpack.c.l.b16 %v3944
    %v4747 = vunpack.c.l.b16 %v3945
    %v4748 = vunpack.c.h.b16 %v3945
    %v4749 = vunpack.c.l.b16 %v3946
    %v4750 = vunpack.c.h.b16 %v3946
    %v4751 = vunpack.c.l.b16 %v3947
    %v4752 = vunpack.c.l.b16 %v3948
    %v4753 = vunpack.c.h.b16 %v3948
    %v4754 = vunpack.c.l.b16 %v3949
    %v4755 = vunpack.c.h.b16 %v3949
    %v4756 = vunpack.c.l.b16 %v3950
    %v4757 = vunpack.c.l.b16 %v3951
    %v4758 = vunpack.c.h.b16 %v3951
    %v4759 = vunpack.c.l.b16 %v3952
    %v4760 = vunpack.c.h.b16 %v3952
    %v4761 = vunpack.c.l.b16 %v3953
    %v4762 = vunpack.c.l.b16 %v3954
    %v4763 = vunpack.c.h.b16 %v3954
    %v4764 = vunpack.c.l.b16 %v3955
    %v4765 = vunpack.c.h.b16 %v3955
    %v4766 = vunpack.c.l.b16 %v3956
    %v4767 = vunpack.c.l.b16 %v3957
    %v4768 = vunpack.c.h.b16 %v3957
    %v4769 = vunpack.c.l.b16 %v3958
    %v4770 = vunpack.c.h.b16 %v3958
    %v4771 = vunpack.c.l.b16 %v3959
    %v4772 = vpack.c.b16 %v4377, %v4372
    %v4773 = vpack.c.b16 %v4378, %v4373
    %v4774 = vpack.c.b16 %v4379, %v4374
    %v4775 = vpack.c.b16 %v4380, %v4375
    %v4776 = vpack.c.b16 %v4381, %v4376
    %v4777 = vpack.c.b16 %v4387, %v4382
    %v4778 = vpack.c.b16 %v4388, %v4383
    %v4779 = vpack.c.b16 %v4389, %v4384
    %v4780 = vpack.c.b16 %v4390, %v4385
    %v4781 = vpack.c.b16 %v4391, %v4386
    %v4782 = vpack.c.b16 %v4397, %v4392
    %v4783 = vpack.c.b16 %v4398, %v4393
    %v4784 = vpack.c.b16 %v4399, %v4394
    %v4785 = vpack.c.b16 %v4400, %v4395
    %v4786 = vpack.c.b16 %v4401, %v4396
    %v4787 = vpack.c.b16 %v4407, %v4402
    %v4788 = vpack.c.b16 %v4408, %v4403
    %v4789 = vpack.c.b16 %v4409, %v4404
    %v4790 = vpack.c.b16 %v4410, %v4405
    %v4791 = vpack.c.b16 %v4411, %v4406
    %v4792 = vpack.c.b16 %v4417, %v4412
    %v4793 = vpack.c.b16 %v4418, %v4413
    %v4794 = vpack.c.b16 %v4419, %v4414
    %v4795 = vpack.c.b16 %v4420, %v4415
    %v4796 = vpack.c.b16 %v4421, %v4416
    %v4797 = vpack.c.b16 %v4427, %v4422
    %v4798 = vpack.c.b16 %v4428, %v4423
    %v4799 = vpack.c.b16 %v4429, %v4424
    %v4800 = vpack.c.b16 %v4430, %v4425
    %v4801 = vpack.c.b16 %v4431, %v4426
    %v4802 = vpack.c.b16 %v4437, %v4432
    %v4803 = vpack.c.b16 %v4438, %v4433
    %v4804 = vpack.c.b16 %v4439, %v4434
    %v4805 = vpack.c.b16 %v4440, %v4435
    %v4806 = vpack.c.b16 %v4441, %v4436
    %v4807 = vpack.c.b16 %v4447, %v4442
    %v4808 = vpack.c.b16 %v4448, %v4443
    %v4809 = vpack.c.b16 %v4449, %v4444
    %v4810 = vpack.c.b16 %v4450, %v4445
    %v4811 = vpack.c.b16 %v4451, %v4446
    %v4812 = vpack.c.b16 %v4457, %v4452
    %v4813 = vpack.c.b16 %v4458, %v4453
    %v4814 = vpack.c.b16 %v4459, %v4454
    %v4815 = vpack.c.b16 %v4460, %v4455
    %v4816 = vpack.c.b16 %v4461, %v4456
    %v4817 = vpack.c.b16 %v4467, %v4462
    %v4818 = vpack.c.b16 %v4468, %v4463
    %v4819 = vpack.c.b16 %v4469, %v4464
    %v4820 = vpack.c.b16 %v4470, %v4465
    %v4821 = vpack.c.b16 %v4471, %v4466
    %v4822 = vpack.c.b16 %v4477, %v4472
    %v4823 = vpack.c.b16 %v4478, %v4473
    %v4824 = vpack.c.b16 %v4479, %v4474
    %v4825 = vpack.c.b16 %v4480, %v4475
    %v4826 = vpack.c.b16 %v4481, %v4476
    %v4827 = vpack.c.b16 %v4487, %v4482
    %v4828 = vpack.c.b16 %v4488, %v4483
    %v4829 = vpack.c.b16 %v4489, %v4484
    %v4830 = vpack.c.b16 %v4490, %v4485
    %v4831 = vpack.c.b16 %v4491, %v4486
    %v4832 = vpack.c.b16 %v4497, %v4492
    %v4833 = vpack.c.b16 %v4498, %v4493
    %v4834 = vpack.c.b16 %v4499, %v4494
    %v4835 = vpack.c.b16 %v4500, %v4495
    %v4836 = vpack.c.b16 %v4501, %v4496
    %v4837 = vpack.c.b16 %v4507, %v4502
    %v4838 = vpack.c.b16 %v4508, %v4503
    %v4839 = vpack.c.b16 %v4509, %v4504
    %v4840 = vpack.c.b16 %v4510, %v4505
    %v4841 = vpack.c.b16 %v4511, %v4506
    %v4842 = vpack.c.b16 %v4517, %v4512
    %v4843 = vpack.c.b16 %v4518, %v4513
    %v4844 = vpack.c.b16 %v4519, %v4514
    %v4845 = vpack.c.b16 %v4520, %v4515
    %v4846 = vpack.c.b16 %v4521, %v4516
    %v4847 = vpack.c.b16 %v4527, %v4522
    %v4848 = vpack.c.b16 %v4528, %v4523
    %v4849 = vpack.c.b16 %v4529, %v4524
    %v4850 = vpack.c.b16 %v4530, %v4525
    %v4851 = vpack.c.b16 %v4531, %v4526
    %v4852 = vpack.c.b16 %v4537, %v4532
    %v4853 = vpack.c.b16 %v4538, %v4533
    %v4854 = vpack.c.b16 %v4539, %v4534
    %v4855 = vpack.c.b16 %v4540, %v4535
    %v4856 = vpack.c.b16 %v4541, %v4536
    %v4857 = vpack.c.b16 %v4547, %v4542
    %v4858 = vpack.c.b16 %v4548, %v4543
    %v4859 = vpack.c.b16 %v4549, %v4544
    %v4860 = vpack.c.b16 %v4550, %v4545
    %v4861 = vpack.c.b16 %v4551, %v4546
    %v4862 = vpack.c.b16 %v4557, %v4552
    %v4863 = vpack.c.b16 %v4558, %v4553
    %v4864 = vpack.c.b16 %v4559, %v4554
    %v4865 = vpack.c.b16 %v4560, %v4555
    %v4866 = vpack.c.b16 %v4561, %v4556
    %v4867 = vpack.c.b16 %v4567, %v4562
    %v4868 = vpack.c.b16 %v4568, %v4563
    %v4869 = vpack.c.b16 %v4569, %v4564
    %v4870 = vpack.c.b16 %v4570, %v4565
    %v4871 = vpack.c.b16 %v4571, %v4566
    %v4872 = vpack.c.b16 %v4577, %v4572
    %v4873 = vpack.c.b16 %v4578, %v4573
    %v4874 = vpack.c.b16 %v4579, %v4574
    %v4875 = vpack.c.b16 %v4580, %v4575
    %v4876 = vpack.c.b16 %v4581, %v4576
    %v4877 = vpack.c.b16 %v4587, %v4582
    %v4878 = vpack.c.b16 %v4588, %v4583
    %v4879 = vpack.c.b16 %v4589, %v4584
    %v4880 = vpack.c.b16 %v4590, %v4585
    %v4881 = vpack.c.b16 %v4591, %v4586
    %v4882 = vpack.c.b16 %v4597, %v4592
    %v4883 = vpack.c.b16 %v4598, %v4593
    %v4884 = vpack.c.b16 %v4599, %v4594
    %v4885 = vpack.c.b16 %v4600, %v4595
    %v4886 = vpack.c.b16 %v4601, %v4596
    %v4887 = vpack.c.b16 %v4607, %v4602
    %v4888 = vpack.c.b16 %v4608, %v4603
    %v4889 = vpack.c.b16 %v4609, %v4604
    %v4890 = vpack.c.b16 %v4610, %v4605
    %v4891 = vpack.c.b16 %v4611, %v4606
    %v4892 = vpack.c.b16 %v4617, %v4612
    %v4893 = vpack.c.b16 %v4618, %v4613
    %v4894 = vpack.c.b16 %v4619, %v4614
    %v4895 = vpack.c.b16 %v4620, %v4615
    %v4896 = vpack.c.b16 %v4621, %v4616
    %v4897 = vpack.c.b16 %v4627, %v4622
    %v4898 = vpack.c.b16 %v4628, %v4623
    %v4899 = vpack.c.b16 %v4629, %v4624
    %v4900 = vpack.c.b16 %v4630, %v4625
    %v4901 = vpack.c.b16 %v4631, %v4626
    %v4902 = vpack.c.b16 %v4637, %v4632
    %v4903 = vpack.c.b16 %v4638, %v4633
    %v4904 = vpack.c.b16 %v4639, %v4634
    %v4905 = vpack.c.b16 %v4640, %v4635
    %v4906 = vpack.c.b16 %v4641, %v4636
    %v4907 = vpack.c.b16 %v4647, %v4642
    %v4908 = vpack.c.b16 %v4648, %v4643
    %v4909 = vpack.c.b16 %v4649, %v4644
    %v4910 = vpack.c.b16 %v4650, %v4645
    %v4911 = vpack.c.b16 %v4651, %v4646
    %v4912 = vpack.c.b16 %v4657, %v4652
    %v4913 = vpack.c.b16 %v4658, %v4653
    %v4914 = vpack.c.b16 %v4659, %v4654
    %v4915 = vpack.c.b16 %v4660, %v4655
    %v4916 = vpack.c.b16 %v4661, %v4656
    %v4917 = vpack.c.b16 %v4667, %v4662
    %v4918 = vpack.c.b16 %v4668, %v4663
    %v4919 = vpack.c.b16 %v4669, %v4664
    %v4920 = vpack.c.b16 %v4670, %v4665
    %v4921 = vpack.c.b16 %v4671, %v4666
    %v4922 = vpack.c.b16 %v4677, %v4672
    %v4923 = vpack.c.b16 %v4678, %v4673
    %v4924 = vpack.c.b16 %v4679, %v4674
    %v4925 = vpack.c.b16 %v4680, %v4675
    %v4926 = vpack.c.b16 %v4681, %v4676
    %v4927 = vpack.c.b16 %v4687, %v4682
    %v4928 = vpack.c.b16 %v4688, %v4683
    %v4929 = vpack.c.b16 %v4689, %v4684
    %v4930 = vpack.c.b16 %v4690, %v4685
    %v4931 = vpack.c.b16 %v4691, %v4686
    %v4932 = vpack.c.b16 %v4697, %v4692
    %v4933 = vpack.c.b16 %v4698, %v4693
    %v4934 = vpack.c.b16 %v4699, %v4694
    %v4935 = vpack.c.b16 %v4700, %v4695
    %v4936 = vpack.c.b16 %v4701, %v4696
    %v4937 = vpack.c.b16 %v4707, %v4702
    %v4938 = vpack.c.b16 %v4708, %v4703
    %v4939 = vpack.c.b16 %v4709, %v4704
    %v4940 = vpack.c.b16 %v4710, %v4705
    %v4941 = vpack.c.b16 %v4711, %v4706
    %v4942 = vpack.c.b16 %v4717, %v4712
    %v4943 = vpack.c.b16 %v4718, %v4713
    %v4944 = vpack.c.b16 %v4719, %v4714
    %v4945 = vpack.c.b16 %v4720, %v4715
    %v4946 = vpack.c.b16 %v4721, %v4716
    %v4947 = vpack.c.b16 %v4727, %v4722
    %v4948 = vpack.c.b16 %v4728, %v4723
    %v4949 = vpack.c.b16 %v4729, %v4724
    %v4950 = vpack.c.b16 %v4730, %v4725
    %v4951 = vpack.c.b16 %v4731, %v4726
    %v4952 = vpack.c.b16 %v4737, %v4732
    %v4953 = vpack.c.b16 %v4738, %v4733
    %v4954 = vpack.c.b16 %v4739, %v4734
    %v4955 = vpack.c.b16 %v4740, %v4735
    %v4956 = vpack.c.b16 %v4741, %v4736
    %v4957 = vpack.c.b16 %v4747, %v4742
    %v4958 = vpack.c.b16 %v4748, %v4743
    %v4959 = vpack.c.b16 %v4749, %v4744
    %v4960 = vpack.c.b16 %v4750, %v4745
    %v4961 = vpack.c.b16 %v4751, %v4746
    %v4962 = vpack.c.b16 %v4757, %v4752
    %v4963 = vpack.c.b16 %v4758, %v4753
    %v4964 = vpack.c.b16 %v4759, %v4754
    %v4965 = vpack.c.b16 %v4760, %v4755
    %v4966 = vpack.c.b16 %v4761, %v4756
    %v4967 = vpack.c.b16 %v4767, %v4762
    %v4968 = vpack.c.b16 %v4768, %v4763
    %v4969 = vpack.c.b16 %v4769, %v4764
    %v4970 = vpack.c.b16 %v4770, %v4765
    %v4971 = vpack.c.b16 %v4771, %v4766
    %5172 = vmatprep.subr.bf16.mxu0 %v4808
    %5173 = vmatpush1.bf16.msra.mxu0 %v4807
    %5174 = vmatprep.subr.bf16.mxu0 %v4803
    %5175 = vmatpush1.bf16.msra.mxu0 %v4802
    %5176 = vmatprep.subr.bf16.mxu0 %v4798
    %5177 = vmatpush1.bf16.msra.mxu0 %v4797
    %5178 = vmatprep.subr.bf16.mxu0 %v4793
    %5179 = vmatpush1.bf16.msra.mxu0 %v4792
    %5180 = vmatprep.subr.bf16.mxu0 %v4788
    %5181 = vmatpush1.bf16.msra.mxu0 %v4787
    %5182 = vmatprep.subr.bf16.mxu0 %v4783
    %5183 = vmatpush1.bf16.msra.mxu0 %v4782
    %5184 = vmatprep.subr.bf16.mxu0 %v4778
    %5185 = vmatpush1.bf16.msra.mxu0 %v4777
    %5186 = vmatprep.subr.bf16.mxu0 %v4773
    %5187 = vmatpush1.bf16.msra.mxu0 %v4772
    %5188 = vmatprep.subr.bf16.mxu0 %v4848
    %5189 = vmatpush2.bf16.msra.mxu0 %v4847
    %5190 = vmatprep.subr.bf16.mxu0 %v4843
    %5191 = vmatpush2.bf16.msra.mxu0 %v4842
    %5192 = vmatprep.subr.bf16.mxu0 %v4838
    %5193 = vmatpush2.bf16.msra.mxu0 %v4837
    %5194 = vmatprep.subr.bf16.mxu0 %v4833
    %5195 = vmatpush2.bf16.msra.mxu0 %v4832
    %5196 = vmatprep.subr.bf16.mxu0 %v4828
    %5197 = vmatpush2.bf16.msra.mxu0 %v4827
    %5198 = vmatprep.subr.bf16.mxu0 %v4823
    %5199 = vmatpush2.bf16.msra.mxu0 %v4822
    %5200 = vmatprep.subr.bf16.mxu0 %v4818
    %5201 = vmatpush2.bf16.msra.mxu0 %v4817
    %5202 = vmatprep.subr.bf16.mxu0 %v4813
    %5203 = vmatpush2.bf16.msra.mxu0 %v4812
    %5204 = vmatprep.mubr.bf16.mxu0 %v3716
    %5205 = vmatmul.mubr.bf16.gmra.mxu0 %v3715
    %v5206 = vpop.f32.mrf.mxu0
    %v5207 = vadd.f32 %v4045, %v5206
    %v5208 = vpop.f32.mrf.mxu0
    %v5209 = vadd.f32 %v4047, %v5208
    %v5210 = vpop.f32.mrf.mxu0
    %v5211 = vpop.f32.mrf.mxu0
    %5212 = vdwg.mxu0
    %5213 = vmatprep.subr.bf16.mxu0 %v4888
    %5214 = vmatpush1.bf16.msra.mxu0 %v4887
    %5215 = vmatprep.subr.bf16.mxu0 %v4883
    %5216 = vmatpush1.bf16.msra.mxu0 %v4882
    %5217 = vmatprep.subr.bf16.mxu0 %v4878
    %5218 = vmatpush1.bf16.msra.mxu0 %v4877
    %5219 = vmatprep.subr.bf16.mxu0 %v4873
    %5220 = vmatpush1.bf16.msra.mxu0 %v4872
    %5221 = vmatprep.subr.bf16.mxu0 %v4868
    %5222 = vmatpush1.bf16.msra.mxu0 %v4867
    %5223 = vmatprep.subr.bf16.mxu0 %v4863
    %5224 = vmatpush1.bf16.msra.mxu0 %v4862
    %5225 = vmatprep.subr.bf16.mxu0 %v4858
    %5226 = vmatpush1.bf16.msra.mxu0 %v4857
    %5227 = vmatprep.subr.bf16.mxu0 %v4853
    %5228 = vmatpush1.bf16.msra.mxu0 %v4852
    %5229 = vmatprep.subr.bf16.mxu0 %v4928
    %5230 = vmatpush2.bf16.msra.mxu0 %v4927
    %5231 = vmatprep.subr.bf16.mxu0 %v4923
    %5232 = vmatpush2.bf16.msra.mxu0 %v4922
    %5233 = vmatprep.subr.bf16.mxu0 %v4918
    %5234 = vmatpush2.bf16.msra.mxu0 %v4917
    %5235 = vmatprep.subr.bf16.mxu0 %v4913
    %5236 = vmatpush2.bf16.msra.mxu0 %v4912
    %5237 = vmatprep.subr.bf16.mxu0 %v4908
    %5238 = vmatpush2.bf16.msra.mxu0 %v4907
    %5239 = vmatprep.subr.bf16.mxu0 %v4903
    %5240 = vmatpush2.bf16.msra.mxu0 %v4902
    %5241 = vmatprep.subr.bf16.mxu0 %v4898
    %5242 = vmatpush2.bf16.msra.mxu0 %v4897
    %5243 = vmatprep.subr.bf16.mxu0 %v4893
    %5244 = vmatpush2.bf16.msra.mxu0 %v4892
    %5245 = vmatprep.mubr.bf16.mxu0 %v3718
    %5246 = vmatmul.mubr.bf16.gmra.mxu0 %v3717
    %v5247 = vpop.f32.mrf.mxu0
    %v5248 = vadd.f32 %v5207, %v5247
    %v5249 = vpop.f32.mrf.mxu0
    %v5250 = vadd.f32 %v5209, %v5249
    %v5251 = vpop.f32.mrf.mxu0
    %v5252 = vpop.f32.mrf.mxu0
    %5253 = vdwg.mxu0
    %5254 = vmatprep.subr.bf16.mxu0 %v4968
    %5255 = vmatpush1.bf16.msra.mxu0 %v4967
    %5256 = vmatprep.subr.bf16.mxu0 %v4963
    %5257 = vmatpush1.bf16.msra.mxu0 %v4962
    %5258 = vmatprep.subr.bf16.mxu0 %v4958
    %5259 = vmatpush1.bf16.msra.mxu0 %v4957
    %5260 = vmatprep.subr.bf16.mxu0 %v4953
    %5261 = vmatpush1.bf16.msra.mxu0 %v4952
    %5262 = vmatprep.subr.bf16.mxu0 %v4948
    %5263 = vmatpush1.bf16.msra.mxu0 %v4947
    %5264 = vmatprep.subr.bf16.mxu0 %v4943
    %5265 = vmatpush1.bf16.msra.mxu0 %v4942
    %5266 = vmatprep.subr.bf16.mxu0 %v4938
    %5267 = vmatpush1.bf16.msra.mxu0 %v4937
    %5268 = vmatprep.subr.bf16.mxu0 %v4933
    %5269 = vmatpush1.bf16.msra.mxu0 %v4932
    %5270 = vmatprep.subr.bf16.mxu0 0
    %5271 = vmatpush2.bf16.msra.mxu0 0
    %5272 = vmatprep.subr.bf16.mxu0 0
    %5273 = vmatpush2.bf16.msra.mxu0 0
    %5274 = vmatprep.subr.bf16.mxu0 0
    %5275 = vmatpush2.bf16.msra.mxu0 0
    %5276 = vmatprep.subr.bf16.mxu0 0
    %5277 = vmatpush2.bf16.msra.mxu0 0
    %5278 = vmatprep.subr.bf16.mxu0 0
    %5279 = vmatpush2.bf16.msra.mxu0 0
    %5280 = vmatprep.subr.bf16.mxu0 0
    %5281 = vmatpush2.bf16.msra.mxu0 0
    %5282 = vmatprep.subr.bf16.mxu0 0
    %5283 = vmatpush2.bf16.msra.mxu0 0
    %5284 = vmatprep.subr.bf16.mxu0 0
    %5285 = vmatpush2.bf16.msra.mxu0 0
    %5286 = vmatprep.mubr.bf16.mxu0 0
    %5287 = vmatmul.mubr.bf16.gmra.mxu0 %v3719
    %v5288 = vpop.f32.mrf.mxu0
    %v5289 = vadd.f32 %v5248, %v5288
    %v5290 = vpop.f32.mrf.mxu0
    %v5291 = vadd.f32 %v5250, %v5290
    %v5292 = vpop.f32.mrf.mxu0
    %v5293 = vpop.f32.mrf.mxu0
    %5294 = vdwg.mxu0
    %5295 = vmatprep.subr.bf16.mxu0 %v4810
    %5296 = vmatpush1.bf16.msra.mxu0 %v4809
    %5297 = vmatprep.subr.bf16.mxu0 %v4805
    %5298 = vmatpush1.bf16.msra.mxu0 %v4804
    %5299 = vmatprep.subr.bf16.mxu0 %v4800
    %5300 = vmatpush1.bf16.msra.mxu0 %v4799
    %5301 = vmatprep.subr.bf16.mxu0 %v4795
    %5302 = vmatpush1.bf16.msra.mxu0 %v4794
    %5303 = vmatprep.subr.bf16.mxu0 %v4790
    %5304 = vmatpush1.bf16.msra.mxu0 %v4789
    %5305 = vmatprep.subr.bf16.mxu0 %v4785
    %5306 = vmatpush1.bf16.msra.mxu0 %v4784
    %5307 = vmatprep.subr.bf16.mxu0 %v4780
    %5308 = vmatpush1.bf16.msra.mxu0 %v4779
    %5309 = vmatprep.subr.bf16.mxu0 %v4775
    %5310 = vmatpush1.bf16.msra.mxu0 %v4774
    %5311 = vmatprep.subr.bf16.mxu0 %v4850
    %5312 = vmatpush2.bf16.msra.mxu0 %v4849
    %5313 = vmatprep.subr.bf16.mxu0 %v4845
    %5314 = vmatpush2.bf16.msra.mxu0 %v4844
    %5315 = vmatprep.subr.bf16.mxu0 %v4840
    %5316 = vmatpush2.bf16.msra.mxu0 %v4839
    %5317 = vmatprep.subr.bf16.mxu0 %v4835
    %5318 = vmatpush2.bf16.msra.mxu0 %v4834
    %5319 = vmatprep.subr.bf16.mxu0 %v4830
    %5320 = vmatpush2.bf16.msra.mxu0 %v4829
    %5321 = vmatprep.subr.bf16.mxu0 %v4825
    %5322 = vmatpush2.bf16.msra.mxu0 %v4824
    %5323 = vmatprep.subr.bf16.mxu0 %v4820
    %5324 = vmatpush2.bf16.msra.mxu0 %v4819
    %5325 = vmatprep.subr.bf16.mxu0 %v4815
    %5326 = vmatpush2.bf16.msra.mxu0 %v4814
    %5327 = vmatprep.mubr.bf16.mxu0 %v3716
    %5328 = vmatmul.mubr.bf16.gmra.mxu0 %v3715
    %v5329 = vpop.f32.mrf.mxu0
    %v5330 = vadd.f32 %v4086, %v5329
    %v5331 = vpop.f32.mrf.mxu0
    %v5332 = vadd.f32 %v4088, %v5331
    %v5333 = vpop.f32.mrf.mxu0
    %v5334 = vpop.f32.mrf.mxu0
    %5335 = vdwg.mxu0
    %5336 = vmatprep.subr.bf16.mxu0 %v4890
    %5337 = vmatpush1.bf16.msra.mxu0 %v4889
    %5338 = vmatprep.subr.bf16.mxu0 %v4885
    %5339 = vmatpush1.bf16.msra.mxu0 %v4884
    %5340 = vmatprep.subr.bf16.mxu0 %v4880
    %5341 = vmatpush1.bf16.msra.mxu0 %v4879
    %5342 = vmatprep.subr.bf16.mxu0 %v4875
    %5343 = vmatpush1.bf16.msra.mxu0 %v4874
    %5344 = vmatprep.subr.bf16.mxu0 %v4870
    %5345 = vmatpush1.bf16.msra.mxu0 %v4869
    %5346 = vmatprep.subr.bf16.mxu0 %v4865
    %5347 = vmatpush1.bf16.msra.mxu0 %v4864
    %5348 = vmatprep.subr.bf16.mxu0 %v4860
    %5349 = vmatpush1.bf16.msra.mxu0 %v4859
    %5350 = vmatprep.subr.bf16.mxu0 %v4855
    %5351 = vmatpush1.bf16.msra.mxu0 %v4854
    %5352 = vmatprep.subr.bf16.mxu0 %v4930
    %5353 = vmatpush2.bf16.msra.mxu0 %v4929
    %5354 = vmatprep.subr.bf16.mxu0 %v4925
    %5355 = vmatpush2.bf16.msra.mxu0 %v4924
    %5356 = vmatprep.subr.bf16.mxu0 %v4920
    %5357 = vmatpush2.bf16.msra.mxu0 %v4919
    %5358 = vmatprep.subr.bf16.mxu0 %v4915
    %5359 = vmatpush2.bf16.msra.mxu0 %v4914
    %5360 = vmatprep.subr.bf16.mxu0 %v4910
    %5361 = vmatpush2.bf16.msra.mxu0 %v4909
    %5362 = vmatprep.subr.bf16.mxu0 %v4905
    %5363 = vmatpush2.bf16.msra.mxu0 %v4904
    %5364 = vmatprep.subr.bf16.mxu0 %v4900
    %5365 = vmatpush2.bf16.msra.mxu0 %v4899
    %5366 = vmatprep.subr.bf16.mxu0 %v4895
    %5367 = vmatpush2.bf16.msra.mxu0 %v4894
    %5368 = vmatprep.mubr.bf16.mxu0 %v3718
    %5369 = vmatmul.mubr.bf16.gmra.mxu0 %v3717
    %v5370 = vpop.f32.mrf.mxu0
    %v5371 = vadd.f32 %v5330, %v5370
    %v5372 = vpop.f32.mrf.mxu0
    %v5373 = vadd.f32 %v5332, %v5372
    %v5374 = vpop.f32.mrf.mxu0
    %v5375 = vpop.f32.mrf.mxu0
    %5376 = vdwg.mxu0
    %5377 = vmatprep.subr.bf16.mxu0 %v4970
    %5378 = vmatpush1.bf16.msra.mxu0 %v4969
    %5379 = vmatprep.subr.bf16.mxu0 %v4965
    %5380 = vmatpush1.bf16.msra.mxu0 %v4964
    %5381 = vmatprep.subr.bf16.mxu0 %v4960
    %5382 = vmatpush1.bf16.msra.mxu0 %v4959
    %5383 = vmatprep.subr.bf16.mxu0 %v4955
    %5384 = vmatpush1.bf16.msra.mxu0 %v4954
    %5385 = vmatprep.subr.bf16.mxu0 %v4950
    %5386 = vmatpush1.bf16.msra.mxu0 %v4949
    %5387 = vmatprep.subr.bf16.mxu0 %v4945
    %5388 = vmatpush1.bf16.msra.mxu0 %v4944
    %5389 = vmatprep.subr.bf16.mxu0 %v4940
    %5390 = vmatpush1.bf16.msra.mxu0 %v4939
    %5391 = vmatprep.subr.bf16.mxu0 %v4935
    %5392 = vmatpush1.bf16.msra.mxu0 %v4934
    %5393 = vmatprep.subr.bf16.mxu0 0
    %5394 = vmatpush2.bf16.msra.mxu0 0
    %5395 = vmatprep.subr.bf16.mxu0 0
    %5396 = vmatpush2.bf16.msra.mxu0 0
    %5397 = vmatprep.subr.bf16.mxu0 0
    %5398 = vmatpush2.bf16.msra.mxu0 0
    %5399 = vmatprep.subr.bf16.mxu0 0
    %5400 = vmatpush2.bf16.msra.mxu0 0
    %5401 = vmatprep.subr.bf16.mxu0 0
    %5402 = vmatpush2.bf16.msra.mxu0 0
    %5403 = vmatprep.subr.bf16.mxu0 0
    %5404 = vmatpush2.bf16.msra.mxu0 0
    %5405 = vmatprep.subr.bf16.mxu0 0
    %5406 = vmatpush2.bf16.msra.mxu0 0
    %5407 = vmatprep.subr.bf16.mxu0 0
    %5408 = vmatpush2.bf16.msra.mxu0 0
    %5409 = vmatprep.mubr.bf16.mxu0 0
    %5410 = vmatmul.mubr.bf16.gmra.mxu0 %v3719
    %v5411 = vpop.f32.mrf.mxu0
    %v5412 = vadd.f32 %v5371, %v5411
    %v5413 = vpop.f32.mrf.mxu0
    %v5414 = vadd.f32 %v5373, %v5413
    %v5415 = vpop.f32.mrf.mxu0
    %v5416 = vpop.f32.mrf.mxu0
    %5417 = vdwg.mxu0
    %5418 = vmatprep.subr.bf16.mxu0 0
    %5419 = vmatpush1.bf16.msra.mxu0 %v4811
    %5420 = vmatprep.subr.bf16.mxu0 0
    %5421 = vmatpush1.bf16.msra.mxu0 %v4806
    %5422 = vmatprep.subr.bf16.mxu0 0
    %5423 = vmatpush1.bf16.msra.mxu0 %v4801
    %5424 = vmatprep.subr.bf16.mxu0 0
    %5425 = vmatpush1.bf16.msra.mxu0 %v4796
    %5426 = vmatprep.subr.bf16.mxu0 0
    %5427 = vmatpush1.bf16.msra.mxu0 %v4791
    %5428 = vmatprep.subr.bf16.mxu0 0
    %5429 = vmatpush1.bf16.msra.mxu0 %v4786
    %5430 = vmatprep.subr.bf16.mxu0 0
    %5431 = vmatpush1.bf16.msra.mxu0 %v4781
    %5432 = vmatprep.subr.bf16.mxu0 0
    %5433 = vmatpush1.bf16.msra.mxu0 %v4776
    %5434 = vmatprep.subr.bf16.mxu0 0
    %5435 = vmatpush2.bf16.msra.mxu0 %v4851
    %5436 = vmatprep.subr.bf16.mxu0 0
    %5437 = vmatpush2.bf16.msra.mxu0 %v4846
    %5438 = vmatprep.subr.bf16.mxu0 0
    %5439 = vmatpush2.bf16.msra.mxu0 %v4841
    %5440 = vmatprep.subr.bf16.mxu0 0
    %5441 = vmatpush2.bf16.msra.mxu0 %v4836
    %5442 = vmatprep.subr.bf16.mxu0 0
    %5443 = vmatpush2.bf16.msra.mxu0 %v4831
    %5444 = vmatprep.subr.bf16.mxu0 0
    %5445 = vmatpush2.bf16.msra.mxu0 %v4826
    %5446 = vmatprep.subr.bf16.mxu0 0
    %5447 = vmatpush2.bf16.msra.mxu0 %v4821
    %5448 = vmatprep.subr.bf16.mxu0 0
    %5449 = vmatpush2.bf16.msra.mxu0 %v4816
    %5450 = vmatprep.mubr.bf16.mxu0 %v3716
    %5451 = vmatmul.mubr.bf16.gmra.mxu0 %v3715
    %v5452 = vpop.f32.mrf.mxu0
    %v5453 = vadd.f32 %v4127, %v5452
    %v5454 = vpop.f32.mrf.mxu0
    %v5455 = vpop.f32.mrf.mxu0
    %v5456 = vpop.f32.mrf.mxu0
    %5457 = vdwg.mxu0
    %5458 = vmatprep.subr.bf16.mxu0 0
    %5459 = vmatpush1.bf16.msra.mxu0 %v4891
    %5460 = vmatprep.subr.bf16.mxu0 0
    %5461 = vmatpush1.bf16.msra.mxu0 %v4886
    %5462 = vmatprep.subr.bf16.mxu0 0
    %5463 = vmatpush1.bf16.msra.mxu0 %v4881
    %5464 = vmatprep.subr.bf16.mxu0 0
    %5465 = vmatpush1.bf16.msra.mxu0 %v4876
    %5466 = vmatprep.subr.bf16.mxu0 0
    %5467 = vmatpush1.bf16.msra.mxu0 %v4871
    %5468 = vmatprep.subr.bf16.mxu0 0
    %5469 = vmatpush1.bf16.msra.mxu0 %v4866
    %5470 = vmatprep.subr.bf16.mxu0 0
    %5471 = vmatpush1.bf16.msra.mxu0 %v4861
    %5472 = vmatprep.subr.bf16.mxu0 0
    %5473 = vmatpush1.bf16.msra.mxu0 %v4856
    %5474 = vmatprep.subr.bf16.mxu0 0
    %5475 = vmatpush2.bf16.msra.mxu0 %v4931
    %5476 = vmatprep.subr.bf16.mxu0 0
    %5477 = vmatpush2.bf16.msra.mxu0 %v4926
    %5478 = vmatprep.subr.bf16.mxu0 0
    %5479 = vmatpush2.bf16.msra.mxu0 %v4921
    %5480 = vmatprep.subr.bf16.mxu0 0
    %5481 = vmatpush2.bf16.msra.mxu0 %v4916
    %5482 = vmatprep.subr.bf16.mxu0 0
    %5483 = vmatpush2.bf16.msra.mxu0 %v4911
    %5484 = vmatprep.subr.bf16.mxu0 0
    %5485 = vmatpush2.bf16.msra.mxu0 %v4906
    %5486 = vmatprep.subr.bf16.mxu0 0
    %5487 = vmatpush2.bf16.msra.mxu0 %v4901
    %5488 = vmatprep.subr.bf16.mxu0 0
    %5489 = vmatpush2.bf16.msra.mxu0 %v4896
    %5490 = vmatprep.mubr.bf16.mxu0 %v3718
    %5491 = vmatmul.mubr.bf16.gmra.mxu0 %v3717
    %v5492 = vpop.f32.mrf.mxu0
    %v5493 = vadd.f32 %v5453, %v5492
    %v5494 = vpop.f32.mrf.mxu0
    %v5495 = vpop.f32.mrf.mxu0
    %v5496 = vpop.f32.mrf.mxu0
    %5497 = vdwg.mxu0
    %5498 = vmatprep.subr.bf16.mxu0 0
    %5499 = vmatpush1.bf16.msra.mxu0 %v4971
    %5500 = vmatprep.subr.bf16.mxu0 0
    %5501 = vmatpush1.bf16.msra.mxu0 %v4966
    %5502 = vmatprep.subr.bf16.mxu0 0
    %5503 = vmatpush1.bf16.msra.mxu0 %v4961
    %5504 = vmatprep.subr.bf16.mxu0 0
    %5505 = vmatpush1.bf16.msra.mxu0 %v4956
    %5506 = vmatprep.subr.bf16.mxu0 0
    %5507 = vmatpush1.bf16.msra.mxu0 %v4951
    %5508 = vmatprep.subr.bf16.mxu0 0
    %5509 = vmatpush1.bf16.msra.mxu0 %v4946
    %5510 = vmatprep.subr.bf16.mxu0 0
    %5511 = vmatpush1.bf16.msra.mxu0 %v4941
    %5512 = vmatprep.subr.bf16.mxu0 0
    %5513 = vmatpush1.bf16.msra.mxu0 %v4936
    %5514 = vmatprep.subr.bf16.mxu0 0
    %5515 = vmatpush2.bf16.msra.mxu0 0
    %5516 = vmatprep.subr.bf16.mxu0 0
    %5517 = vmatpush2.bf16.msra.mxu0 0
    %5518 = vmatprep.subr.bf16.mxu0 0
    %5519 = vmatpush2.bf16.msra.mxu0 0
    %5520 = vmatprep.subr.bf16.mxu0 0
    %5521 = vmatpush2.bf16.msra.mxu0 0
    %5522 = vmatprep.subr.bf16.mxu0 0
    %5523 = vmatpush2.bf16.msra.mxu0 0
    %5524 = vmatprep.subr.bf16.mxu0 0
    %5525 = vmatpush2.bf16.msra.mxu0 0
    %5526 = vmatprep.subr.bf16.mxu0 0
    %5527 = vmatpush2.bf16.msra.mxu0 0
    %5528 = vmatprep.subr.bf16.mxu0 0
    %5529 = vmatpush2.bf16.msra.mxu0 0
    %5530 = vmatprep.mubr.bf16.mxu0 0
    %5531 = vmatmul.mubr.bf16.gmra.mxu0 %v3719
    %v5532 = vpop.f32.mrf.mxu0
    %v5533 = vadd.f32 %v5493, %v5532
    %v5534 = vpop.f32.mrf.mxu0
    %v5535 = vpop.f32.mrf.mxu0
    %v5536 = vpop.f32.mrf.mxu0
    %5537 = vdwg.mxu0
    %v5538 = vld [vmem:[%s10] sm:$0x1f]
    %v5540 = vlaneseq
    %v5541 = vshrl.u32 %v5540, 7
    %v5542 = vsub.s32 0, %v5541
    %v5543 = vrot.slane %v5538, %v5542
    %v5544 = vlaneseq
    %v5545 = vshrl.u32 %v5544, 7
    %v5546 = vsub.s32 1, %v5545
    %v5547 = vrot.slane %v5538, %v5546
    %v5548 = vlaneseq
    %v5549 = vshrl.u32 %v5548, 7
    %v5550 = vsub.s32 2, %v5549
    %v5551 = vrot.slane %v5538, %v5550
    %v5552 = vlaneseq
    %v5553 = vshrl.u32 %v5552, 7
    %v5554 = vsub.s32 3, %v5553
    %v5555 = vrot.slane %v5538, %v5554
    %v5556 = vlaneseq
    %v5557 = vshrl.u32 %v5556, 7
    %v5558 = vsub.s32 4, %v5557
    %v5559 = vrot.slane %v5538, %v5558
    %v5565 = vadd.f32 %v5289, %v5543
    %v5566 = vadd.f32 %v5291, %v5547
    %v5567 = vadd.f32 %v5412, %v5551
    %v5568 = vadd.f32 %v5414, %v5555
    %v5569 = vadd.f32 %v5533, %v5559
    %vm5570 = vcmp.gt.f32.partialorder %v5565, 0.0
    %vm5571 = vcmp.gt.f32.partialorder %v5566, 0.0
    %vm5572 = vcmp.gt.f32.partialorder %v5567, 0.0
    %vm5573 = vcmp.gt.f32.partialorder %v5568, 0.0
    %vm5574 = vcmp.gt.f32.partialorder %v5569, 0.0
    %v5575 = vmul.f32 %v5565, 0.01
    %v5576 = vmul.f32 %v5566, 0.01
    %v5577 = vmul.f32 %v5567, 0.01
    %v5578 = vmul.f32 %v5568, 0.01
    %v5579 = vmul.f32 %v5569, 0.01
    %v5580 = vsel %vm5570, %v5565, %v5575
    %v5581 = vsel %vm5571, %v5566, %v5576
    %v5582 = vsel %vm5572, %v5567, %v5577
    %v5583 = vsel %vm5573, %v5568, %v5578
    %v5584 = vsel %vm5574, %v5569, %v5579
    %v5585 = vpack.c.bf16 %v5580, %v5580
    %v5586 = vpack.c.bf16 %v5581, %v5581
    %v5587 = vpack.c.bf16 %v5582, %v5582
    %v5588 = vpack.c.bf16 %v5583, %v5583
    %v5589 = vpack.c.bf16 %v5584, %v5584
    %v5590 = vld [vmem:[#allocation13] sm:$0xff]
    %v5591 = vld [vmem:[#allocation13 + $0x8] sm:$0xff]
    %v5592 = vld [vmem:[#allocation13 + $0x10] sm:$0xff]
    %v5593 = vld [vmem:[#allocation13 + $0x18] sm:$0xff]
    %v5594 = vld [vmem:[#allocation13 + $0x20] sm:$0xff]
    %v5595 = vld [vmem:[#allocation13 + $0x28] sm:$0xff]
    %v5596 = vld [vmem:[#allocation13 + $0x30] sm:$0xff]
    %v5597 = vld [vmem:[#allocation13 + $0x38] sm:$0xff]
    %v5598 = vld [vmem:[#allocation13 + $0x40] sm:$0xff]
    %v5599 = vld [vmem:[#allocation13 + $0x48] sm:$0xff]
    %v5600 = vld [vmem:[#allocation13 + $0x50] sm:$0xff]
    %v5601 = vld [vmem:[#allocation13 + $0x58] sm:$0xff]
    %v5602 = vld [vmem:[#allocation13 + $0x60] sm:$0xff]
    %v5603 = vld [vmem:[#allocation13 + $0x68] sm:$0xff]
    %v5604 = vld [vmem:[#allocation13 + $0x70] sm:$0xff]
    %v5605 = vld [vmem:[#allocation13 + $0x78] sm:$0xff]
    %v5606 = vld [vmem:[#allocation13 + $0x80] sm:$0xff]
    %v5607 = vld [vmem:[#allocation13 + $0x88] sm:$0xff]
    %v5608 = vld [vmem:[#allocation13 + $0x90] sm:$0xff]
    %v5609 = vld [vmem:[#allocation13 + $0x98] sm:$0xff]
    %v5610 = vld [vmem:[#allocation13 + $0xa0] sm:$0xff]
    %v5611 = vld [vmem:[#allocation13 + $0xa8] sm:$0xff]
    %v5612 = vld [vmem:[#allocation13 + $0xb0] sm:$0xff]
    %v5613 = vld [vmem:[#allocation13 + $0xb8] sm:$0xff]
    %v5614 = vld [vmem:[#allocation13 + $0xc0] sm:$0xff]
    %v5615 = vld [vmem:[#allocation13 + $0xc8] sm:$0xff]
    %v5616 = vld [vmem:[#allocation13 + $0xd0] sm:$0xff]
    %v5617 = vld [vmem:[#allocation13 + $0xd8] sm:$0xff]
    %v5618 = vld [vmem:[#allocation13 + $0xe0] sm:$0xff]
    %v5619 = vld [vmem:[#allocation13 + $0xe8] sm:$0xff]
    %v5620 = vld [vmem:[#allocation13 + $0xf0] sm:$0xff]
    %v5621 = vld [vmem:[#allocation13 + $0xf8] sm:$0xff]
    %v5622 = vld [vmem:[#allocation13 + $0x100] sm:$0xff]
    %v5623 = vld [vmem:[#allocation13 + $0x108] sm:$0xff]
    %v5624 = vld [vmem:[#allocation13 + $0x110] sm:$0xff]
    %v5625 = vld [vmem:[#allocation13 + $0x118] sm:$0xff]
    %v5626 = vld [vmem:[#allocation13 + $0x120] sm:$0xff]
    %v5627 = vld [vmem:[#allocation13 + $0x128] sm:$0xff]
    %v5628 = vld [vmem:[#allocation13 + $0x130] sm:$0xff]
    %v5629 = vld [vmem:[#allocation13 + $0x138] sm:$0xff]
    %v5630 = vld [vmem:[#allocation13 + $0x140] sm:$0xff]
    %v5631 = vld [vmem:[#allocation13 + $0x148] sm:$0xff]
    %v5632 = vld [vmem:[#allocation13 + $0x150] sm:$0xff]
    %v5633 = vld [vmem:[#allocation13 + $0x158] sm:$0xff]
    %v5634 = vld [vmem:[#allocation13 + $0x160] sm:$0xff]
    %v5635 = vld [vmem:[#allocation13 + $0x168] sm:$0xff]
    %v5636 = vld [vmem:[#allocation13 + $0x170] sm:$0xff]
    %v5637 = vld [vmem:[#allocation13 + $0x178] sm:$0xff]
    %v5638 = vld [vmem:[#allocation13 + $0x180] sm:$0xff]
    %v5639 = vld [vmem:[#allocation13 + $0x188] sm:$0xff]
    %v5640 = vld [vmem:[#allocation13 + $0x190] sm:$0xff]
    %v5641 = vld [vmem:[#allocation13 + $0x198] sm:$0xff]
    %v5642 = vld [vmem:[#allocation13 + $0x1a0] sm:$0xff]
    %v5643 = vld [vmem:[#allocation13 + $0x1a8] sm:$0xff]
    %v5644 = vld [vmem:[#allocation13 + $0x1b0] sm:$0xff]
    %v5645 = vld [vmem:[#allocation13 + $0x1b8] sm:$0xff]
    %v5646 = vld [vmem:[#allocation13 + $0x1c0] sm:$0xff]
    %v5647 = vld [vmem:[#allocation13 + $0x1c8] sm:$0xff]
    %v5648 = vld [vmem:[#allocation13 + $0x1d0] sm:$0xff]
    %v5649 = vld [vmem:[#allocation13 + $0x1d8] sm:$0xff]
    %v5650 = vld [vmem:[#allocation13 + $0x1e0] sm:$0xff]
    %v5651 = vld [vmem:[#allocation13 + $0x1e8] sm:$0xff]
    %v5652 = vld [vmem:[#allocation13 + $0x1f0] sm:$0xff]
    %v5653 = vld [vmem:[#allocation13 + $0x1f8] sm:$0xff]
    %v5654 = vld [vmem:[#allocation13 + $0x200] sm:$0xff]
    %v5655 = vld [vmem:[#allocation13 + $0x208] sm:$0xff]
    %v5656 = vld [vmem:[#allocation13 + $0x210] sm:$0xff]
    %v5657 = vld [vmem:[#allocation13 + $0x218] sm:$0xff]
    %v5658 = vld [vmem:[#allocation13 + $0x220] sm:$0xff]
    %v5659 = vld [vmem:[#allocation13 + $0x228] sm:$0xff]
    %v5660 = vld [vmem:[#allocation13 + $0x230] sm:$0xff]
    %v5661 = vld [vmem:[#allocation13 + $0x238] sm:$0xff]
    %v5662 = vld [vmem:[#allocation13 + $0x240] sm:$0xff]
    %v5663 = vld [vmem:[#allocation13 + $0x248] sm:$0xff]
    %v5664 = vld [vmem:[#allocation13 + $0x250] sm:$0xff]
    %v5665 = vld [vmem:[#allocation13 + $0x258] sm:$0xff]
    %v5666 = vld [vmem:[#allocation13 + $0x260] sm:$0xff]
    %v5667 = vld [vmem:[#allocation13 + $0x268] sm:$0xff]
    %v5668 = vld [vmem:[#allocation13 + $0x270] sm:$0xff]
    %v5669 = vld [vmem:[#allocation13 + $0x278] sm:$0xff]
    %v5670 = vld [vmem:[%s12] sm:$0x3]
    %v5672 = vlaneseq
    %v5673 = vshrl.u32 %v5672, 7
    %v5674 = vsub.s32 0, %v5673
    %v5675 = vrot.slane %v5670, %v5674
    %v5676 = vlaneseq
    %v5677 = vshrl.u32 %v5676, 7
    %v5678 = vsub.s32 1, %v5677
    %v5679 = vrot.slane %v5670, %v5678
    %v5762 = vunpack.c.l.b16 %v5590
    %v5763 = vunpack.c.h.b16 %v5590
    %v5764 = vunpack.c.l.b16 %v5591
    %v5765 = vunpack.c.h.b16 %v5591
    %v5766 = vunpack.c.l.b16 %v5592
    %v5767 = vunpack.c.h.b16 %v5592
    %v5768 = vunpack.c.l.b16 %v5593
    %v5769 = vunpack.c.h.b16 %v5593
    %v5770 = vunpack.c.l.b16 %v5594
    %v5771 = vunpack.c.h.b16 %v5594
    %v5772 = vunpack.c.l.b16 %v5595
    %v5773 = vunpack.c.h.b16 %v5595
    %v5774 = vunpack.c.l.b16 %v5596
    %v5775 = vunpack.c.h.b16 %v5596
    %v5776 = vunpack.c.l.b16 %v5597
    %v5777 = vunpack.c.h.b16 %v5597
    %v5778 = vunpack.c.l.b16 %v5598
    %v5779 = vunpack.c.h.b16 %v5598
    %v5780 = vunpack.c.l.b16 %v5599
    %v5781 = vunpack.c.h.b16 %v5599
    %v5782 = vunpack.c.l.b16 %v5600
    %v5783 = vunpack.c.h.b16 %v5600
    %v5784 = vunpack.c.l.b16 %v5601
    %v5785 = vunpack.c.h.b16 %v5601
    %v5786 = vunpack.c.l.b16 %v5602
    %v5787 = vunpack.c.h.b16 %v5602
    %v5788 = vunpack.c.l.b16 %v5603
    %v5789 = vunpack.c.h.b16 %v5603
    %v5790 = vunpack.c.l.b16 %v5604
    %v5791 = vunpack.c.h.b16 %v5604
    %v5792 = vunpack.c.l.b16 %v5605
    %v5793 = vunpack.c.h.b16 %v5605
    %v5794 = vunpack.c.l.b16 %v5606
    %v5795 = vunpack.c.h.b16 %v5606
    %v5796 = vunpack.c.l.b16 %v5607
    %v5797 = vunpack.c.h.b16 %v5607
    %v5798 = vunpack.c.l.b16 %v5608
    %v5799 = vunpack.c.h.b16 %v5608
    %v5800 = vunpack.c.l.b16 %v5609
    %v5801 = vunpack.c.h.b16 %v5609
    %v5802 = vunpack.c.l.b16 %v5610
    %v5803 = vunpack.c.h.b16 %v5610
    %v5804 = vunpack.c.l.b16 %v5611
    %v5805 = vunpack.c.h.b16 %v5611
    %v5806 = vunpack.c.l.b16 %v5612
    %v5807 = vunpack.c.h.b16 %v5612
    %v5808 = vunpack.c.l.b16 %v5613
    %v5809 = vunpack.c.h.b16 %v5613
    %v5810 = vunpack.c.l.b16 %v5614
    %v5811 = vunpack.c.h.b16 %v5614
    %v5812 = vunpack.c.l.b16 %v5615
    %v5813 = vunpack.c.h.b16 %v5615
    %v5814 = vunpack.c.l.b16 %v5616
    %v5815 = vunpack.c.h.b16 %v5616
    %v5816 = vunpack.c.l.b16 %v5617
    %v5817 = vunpack.c.h.b16 %v5617
    %v5818 = vunpack.c.l.b16 %v5618
    %v5819 = vunpack.c.h.b16 %v5618
    %v5820 = vunpack.c.l.b16 %v5619
    %v5821 = vunpack.c.h.b16 %v5619
    %v5822 = vunpack.c.l.b16 %v5620
    %v5823 = vunpack.c.h.b16 %v5620
    %v5824 = vunpack.c.l.b16 %v5621
    %v5825 = vunpack.c.h.b16 %v5621
    %v5826 = vunpack.c.l.b16 %v5622
    %v5827 = vunpack.c.h.b16 %v5622
    %v5828 = vunpack.c.l.b16 %v5623
    %v5829 = vunpack.c.h.b16 %v5623
    %v5830 = vunpack.c.l.b16 %v5624
    %v5831 = vunpack.c.h.b16 %v5624
    %v5832 = vunpack.c.l.b16 %v5625
    %v5833 = vunpack.c.h.b16 %v5625
    %v5834 = vunpack.c.l.b16 %v5626
    %v5835 = vunpack.c.h.b16 %v5626
    %v5836 = vunpack.c.l.b16 %v5627
    %v5837 = vunpack.c.h.b16 %v5627
    %v5838 = vunpack.c.l.b16 %v5628
    %v5839 = vunpack.c.h.b16 %v5628
    %v5840 = vunpack.c.l.b16 %v5629
    %v5841 = vunpack.c.h.b16 %v5629
    %v5842 = vunpack.c.l.b16 %v5630
    %v5843 = vunpack.c.h.b16 %v5630
    %v5844 = vunpack.c.l.b16 %v5631
    %v5845 = vunpack.c.h.b16 %v5631
    %v5846 = vunpack.c.l.b16 %v5632
    %v5847 = vunpack.c.h.b16 %v5632
    %v5848 = vunpack.c.l.b16 %v5633
    %v5849 = vunpack.c.h.b16 %v5633
    %v5850 = vunpack.c.l.b16 %v5634
    %v5851 = vunpack.c.h.b16 %v5634
    %v5852 = vunpack.c.l.b16 %v5635
    %v5853 = vunpack.c.h.b16 %v5635
    %v5854 = vunpack.c.l.b16 %v5636
    %v5855 = vunpack.c.h.b16 %v5636
    %v5856 = vunpack.c.l.b16 %v5637
    %v5857 = vunpack.c.h.b16 %v5637
    %v5858 = vunpack.c.l.b16 %v5638
    %v5859 = vunpack.c.h.b16 %v5638
    %v5860 = vunpack.c.l.b16 %v5639
    %v5861 = vunpack.c.h.b16 %v5639
    %v5862 = vunpack.c.l.b16 %v5640
    %v5863 = vunpack.c.h.b16 %v5640
    %v5864 = vunpack.c.l.b16 %v5641
    %v5865 = vunpack.c.h.b16 %v5641
    %v5866 = vunpack.c.l.b16 %v5642
    %v5867 = vunpack.c.h.b16 %v5642
    %v5868 = vunpack.c.l.b16 %v5643
    %v5869 = vunpack.c.h.b16 %v5643
    %v5870 = vunpack.c.l.b16 %v5644
    %v5871 = vunpack.c.h.b16 %v5644
    %v5872 = vunpack.c.l.b16 %v5645
    %v5873 = vunpack.c.h.b16 %v5645
    %v5874 = vunpack.c.l.b16 %v5646
    %v5875 = vunpack.c.h.b16 %v5646
    %v5876 = vunpack.c.l.b16 %v5647
    %v5877 = vunpack.c.h.b16 %v5647
    %v5878 = vunpack.c.l.b16 %v5648
    %v5879 = vunpack.c.h.b16 %v5648
    %v5880 = vunpack.c.l.b16 %v5649
    %v5881 = vunpack.c.h.b16 %v5649
    %v5882 = vunpack.c.l.b16 %v5650
    %v5883 = vunpack.c.h.b16 %v5650
    %v5884 = vunpack.c.l.b16 %v5651
    %v5885 = vunpack.c.h.b16 %v5651
    %v5886 = vunpack.c.l.b16 %v5652
    %v5887 = vunpack.c.h.b16 %v5652
    %v5888 = vunpack.c.l.b16 %v5653
    %v5889 = vunpack.c.h.b16 %v5653
    %v5890 = vunpack.c.l.b16 %v5654
    %v5891 = vunpack.c.h.b16 %v5654
    %v5892 = vunpack.c.l.b16 %v5655
    %v5893 = vunpack.c.h.b16 %v5655
    %v5894 = vunpack.c.l.b16 %v5656
    %v5895 = vunpack.c.h.b16 %v5656
    %v5896 = vunpack.c.l.b16 %v5657
    %v5897 = vunpack.c.h.b16 %v5657
    %v5898 = vunpack.c.l.b16 %v5658
    %v5899 = vunpack.c.h.b16 %v5658
    %v5900 = vunpack.c.l.b16 %v5659
    %v5901 = vunpack.c.h.b16 %v5659
    %v5902 = vunpack.c.l.b16 %v5660
    %v5903 = vunpack.c.h.b16 %v5660
    %v5904 = vunpack.c.l.b16 %v5661
    %v5905 = vunpack.c.h.b16 %v5661
    %v5906 = vunpack.c.l.b16 %v5662
    %v5907 = vunpack.c.h.b16 %v5662
    %v5908 = vunpack.c.l.b16 %v5663
    %v5909 = vunpack.c.h.b16 %v5663
    %v5910 = vunpack.c.l.b16 %v5664
    %v5911 = vunpack.c.h.b16 %v5664
    %v5912 = vunpack.c.l.b16 %v5665
    %v5913 = vunpack.c.h.b16 %v5665
    %v5914 = vunpack.c.l.b16 %v5666
    %v5915 = vunpack.c.h.b16 %v5666
    %v5916 = vunpack.c.l.b16 %v5667
    %v5917 = vunpack.c.h.b16 %v5667
    %v5918 = vunpack.c.l.b16 %v5668
    %v5919 = vunpack.c.h.b16 %v5668
    %v5920 = vunpack.c.l.b16 %v5669
    %v5921 = vunpack.c.h.b16 %v5669
    %v5922 = vpack.c.b16 %v5764, %v5762
    %v5923 = vpack.c.b16 %v5765, %v5763
    %v5924 = vpack.c.b16 %v5768, %v5766
    %v5925 = vpack.c.b16 %v5769, %v5767
    %v5926 = vpack.c.b16 %v5772, %v5770
    %v5927 = vpack.c.b16 %v5773, %v5771
    %v5928 = vpack.c.b16 %v5776, %v5774
    %v5929 = vpack.c.b16 %v5777, %v5775
    %v5930 = vpack.c.b16 %v5780, %v5778
    %v5931 = vpack.c.b16 %v5781, %v5779
    %v5932 = vpack.c.b16 %v5784, %v5782
    %v5933 = vpack.c.b16 %v5785, %v5783
    %v5934 = vpack.c.b16 %v5788, %v5786
    %v5935 = vpack.c.b16 %v5789, %v5787
    %v5936 = vpack.c.b16 %v5792, %v5790
    %v5937 = vpack.c.b16 %v5793, %v5791
    %v5938 = vpack.c.b16 %v5796, %v5794
    %v5939 = vpack.c.b16 %v5797, %v5795
    %v5940 = vpack.c.b16 %v5800, %v5798
    %v5941 = vpack.c.b16 %v5801, %v5799
    %v5942 = vpack.c.b16 %v5804, %v5802
    %v5943 = vpack.c.b16 %v5805, %v5803
    %v5944 = vpack.c.b16 %v5808, %v5806
    %v5945 = vpack.c.b16 %v5809, %v5807
    %v5946 = vpack.c.b16 %v5812, %v5810
    %v5947 = vpack.c.b16 %v5813, %v5811
    %v5948 = vpack.c.b16 %v5816, %v5814
    %v5949 = vpack.c.b16 %v5817, %v5815
    %v5950 = vpack.c.b16 %v5820, %v5818
    %v5951 = vpack.c.b16 %v5821, %v5819
    %v5952 = vpack.c.b16 %v5824, %v5822
    %v5953 = vpack.c.b16 %v5825, %v5823
    %v5954 = vpack.c.b16 %v5828, %v5826
    %v5955 = vpack.c.b16 %v5829, %v5827
    %v5956 = vpack.c.b16 %v5832, %v5830
    %v5957 = vpack.c.b16 %v5833, %v5831
    %v5958 = vpack.c.b16 %v5836, %v5834
    %v5959 = vpack.c.b16 %v5837, %v5835
    %v5960 = vpack.c.b16 %v5840, %v5838
    %v5961 = vpack.c.b16 %v5841, %v5839
    %v5962 = vpack.c.b16 %v5844, %v5842
    %v5963 = vpack.c.b16 %v5845, %v5843
    %v5964 = vpack.c.b16 %v5848, %v5846
    %v5965 = vpack.c.b16 %v5849, %v5847
    %v5966 = vpack.c.b16 %v5852, %v5850
    %v5967 = vpack.c.b16 %v5853, %v5851
    %v5968 = vpack.c.b16 %v5856, %v5854
    %v5969 = vpack.c.b16 %v5857, %v5855
    %v5970 = vpack.c.b16 %v5860, %v5858
    %v5971 = vpack.c.b16 %v5861, %v5859
    %v5972 = vpack.c.b16 %v5864, %v5862
    %v5973 = vpack.c.b16 %v5865, %v5863
    %v5974 = vpack.c.b16 %v5868, %v5866
    %v5975 = vpack.c.b16 %v5869, %v5867
    %v5976 = vpack.c.b16 %v5872, %v5870
    %v5977 = vpack.c.b16 %v5873, %v5871
    %v5978 = vpack.c.b16 %v5876, %v5874
    %v5979 = vpack.c.b16 %v5877, %v5875
    %v5980 = vpack.c.b16 %v5880, %v5878
    %v5981 = vpack.c.b16 %v5881, %v5879
    %v5982 = vpack.c.b16 %v5884, %v5882
    %v5983 = vpack.c.b16 %v5885, %v5883
    %v5984 = vpack.c.b16 %v5888, %v5886
    %v5985 = vpack.c.b16 %v5889, %v5887
    %v5986 = vpack.c.b16 %v5892, %v5890
    %v5987 = vpack.c.b16 %v5893, %v5891
    %v5988 = vpack.c.b16 %v5896, %v5894
    %v5989 = vpack.c.b16 %v5897, %v5895
    %v5990 = vpack.c.b16 %v5900, %v5898
    %v5991 = vpack.c.b16 %v5901, %v5899
    %v5992 = vpack.c.b16 %v5904, %v5902
    %v5993 = vpack.c.b16 %v5905, %v5903
    %v5994 = vpack.c.b16 %v5908, %v5906
    %v5995 = vpack.c.b16 %v5909, %v5907
    %v5996 = vpack.c.b16 %v5912, %v5910
    %v5997 = vpack.c.b16 %v5913, %v5911
    %v5998 = vpack.c.b16 %v5916, %v5914
    %v5999 = vpack.c.b16 %v5917, %v5915
    %v6000 = vpack.c.b16 %v5920, %v5918
    %v6001 = vpack.c.b16 %v5921, %v5919
    %6082 = vmatprep.subr.bf16.mxu0 %v5937
    %6083 = vmatpush1.bf16.msra.mxu0 %v5936
    %6084 = vmatprep.subr.bf16.mxu0 %v5935
    %6085 = vmatpush1.bf16.msra.mxu0 %v5934
    %6086 = vmatprep.subr.bf16.mxu0 %v5933
    %6087 = vmatpush1.bf16.msra.mxu0 %v5932
    %6088 = vmatprep.subr.bf16.mxu0 %v5931
    %6089 = vmatpush1.bf16.msra.mxu0 %v5930
    %6090 = vmatprep.subr.bf16.mxu0 %v5929
    %6091 = vmatpush1.bf16.msra.mxu0 %v5928
    %6092 = vmatprep.subr.bf16.mxu0 %v5927
    %6093 = vmatpush1.bf16.msra.mxu0 %v5926
    %6094 = vmatprep.subr.bf16.mxu0 %v5925
    %6095 = vmatpush1.bf16.msra.mxu0 %v5924
    %6096 = vmatprep.subr.bf16.mxu0 %v5923
    %6097 = vmatpush1.bf16.msra.mxu0 %v5922
    %6098 = vmatprep.subr.bf16.mxu0 %v5953
    %6099 = vmatpush2.bf16.msra.mxu0 %v5952
    %6100 = vmatprep.subr.bf16.mxu0 %v5951
    %6101 = vmatpush2.bf16.msra.mxu0 %v5950
    %6102 = vmatprep.subr.bf16.mxu0 %v5949
    %6103 = vmatpush2.bf16.msra.mxu0 %v5948
    %6104 = vmatprep.subr.bf16.mxu0 %v5947
    %6105 = vmatpush2.bf16.msra.mxu0 %v5946
    %6106 = vmatprep.subr.bf16.mxu0 %v5945
    %6107 = vmatpush2.bf16.msra.mxu0 %v5944
    %6108 = vmatprep.subr.bf16.mxu0 %v5943
    %6109 = vmatpush2.bf16.msra.mxu0 %v5942
    %6110 = vmatprep.subr.bf16.mxu0 %v5941
    %6111 = vmatpush2.bf16.msra.mxu0 %v5940
    %6112 = vmatprep.subr.bf16.mxu0 %v5939
    %6113 = vmatpush2.bf16.msra.mxu0 %v5938
    %6114 = vmatprep.mubr.bf16.mxu0 %v5586
    %6115 = vmatmul.mubr.bf16.gmra.mxu0 %v5585
    %v6116 = vpop.f32.mrf.mxu0
    %v6117 = vadd.f32 %v5675, %v6116
    %v6118 = vpop.f32.mrf.mxu0
    %v6119 = vadd.f32 %v5679, %v6118
    %v6120 = vpop.f32.mrf.mxu0
    %v6121 = vpop.f32.mrf.mxu0
    %6122 = vdwg.mxu0
    %6123 = vmatprep.subr.bf16.mxu0 %v5969
    %6124 = vmatpush1.bf16.msra.mxu0 %v5968
    %6125 = vmatprep.subr.bf16.mxu0 %v5967
    %6126 = vmatpush1.bf16.msra.mxu0 %v5966
    %6127 = vmatprep.subr.bf16.mxu0 %v5965
    %6128 = vmatpush1.bf16.msra.mxu0 %v5964
    %6129 = vmatprep.subr.bf16.mxu0 %v5963
    %6130 = vmatpush1.bf16.msra.mxu0 %v5962
    %6131 = vmatprep.subr.bf16.mxu0 %v5961
    %6132 = vmatpush1.bf16.msra.mxu0 %v5960
    %6133 = vmatprep.subr.bf16.mxu0 %v5959
    %6134 = vmatpush1.bf16.msra.mxu0 %v5958
    %6135 = vmatprep.subr.bf16.mxu0 %v5957
    %6136 = vmatpush1.bf16.msra.mxu0 %v5956
    %6137 = vmatprep.subr.bf16.mxu0 %v5955
    %6138 = vmatpush1.bf16.msra.mxu0 %v5954
    %6139 = vmatprep.subr.bf16.mxu0 %v5985
    %6140 = vmatpush2.bf16.msra.mxu0 %v5984
    %6141 = vmatprep.subr.bf16.mxu0 %v5983
    %6142 = vmatpush2.bf16.msra.mxu0 %v5982
    %6143 = vmatprep.subr.bf16.mxu0 %v5981
    %6144 = vmatpush2.bf16.msra.mxu0 %v5980
    %6145 = vmatprep.subr.bf16.mxu0 %v5979
    %6146 = vmatpush2.bf16.msra.mxu0 %v5978
    %6147 = vmatprep.subr.bf16.mxu0 %v5977
    %6148 = vmatpush2.bf16.msra.mxu0 %v5976
    %6149 = vmatprep.subr.bf16.mxu0 %v5975
    %6150 = vmatpush2.bf16.msra.mxu0 %v5974
    %6151 = vmatprep.subr.bf16.mxu0 %v5973
    %6152 = vmatpush2.bf16.msra.mxu0 %v5972
    %6153 = vmatprep.subr.bf16.mxu0 %v5971
    %6154 = vmatpush2.bf16.msra.mxu0 %v5970
    %6155 = vmatprep.mubr.bf16.mxu0 %v5588
    %6156 = vmatmul.mubr.bf16.gmra.mxu0 %v5587
    %v6157 = vpop.f32.mrf.mxu0
    %v6158 = vadd.f32 %v6117, %v6157
    %v6159 = vpop.f32.mrf.mxu0
    %v6160 = vadd.f32 %v6119, %v6159
    %v6161 = vpop.f32.mrf.mxu0
    %v6162 = vpop.f32.mrf.mxu0
    %6163 = vdwg.mxu0
    %6164 = vmatprep.subr.bf16.mxu0 %v6001
    %6165 = vmatpush1.bf16.msra.mxu0 %v6000
    %6166 = vmatprep.subr.bf16.mxu0 %v5999
    %6167 = vmatpush1.bf16.msra.mxu0 %v5998
    %6168 = vmatprep.subr.bf16.mxu0 %v5997
    %6169 = vmatpush1.bf16.msra.mxu0 %v5996
    %6170 = vmatprep.subr.bf16.mxu0 %v5995
    %6171 = vmatpush1.bf16.msra.mxu0 %v5994
    %6172 = vmatprep.subr.bf16.mxu0 %v5993
    %6173 = vmatpush1.bf16.msra.mxu0 %v5992
    %6174 = vmatprep.subr.bf16.mxu0 %v5991
    %6175 = vmatpush1.bf16.msra.mxu0 %v5990
    %6176 = vmatprep.subr.bf16.mxu0 %v5989
    %6177 = vmatpush1.bf16.msra.mxu0 %v5988
    %6178 = vmatprep.subr.bf16.mxu0 %v5987
    %6179 = vmatpush1.bf16.msra.mxu0 %v5986
    %6180 = vmatprep.subr.bf16.mxu0 0
    %6181 = vmatpush2.bf16.msra.mxu0 0
    %6182 = vmatprep.subr.bf16.mxu0 0
    %6183 = vmatpush2.bf16.msra.mxu0 0
    %6184 = vmatprep.subr.bf16.mxu0 0
    %6185 = vmatpush2.bf16.msra.mxu0 0
    %6186 = vmatprep.subr.bf16.mxu0 0
    %6187 = vmatpush2.bf16.msra.mxu0 0
    %6188 = vmatprep.subr.bf16.mxu0 0
    %6189 = vmatpush2.bf16.msra.mxu0 0
    %6190 = vmatprep.subr.bf16.mxu0 0
    %6191 = vmatpush2.bf16.msra.mxu0 0
    %6192 = vmatprep.subr.bf16.mxu0 0
    %6193 = vmatpush2.bf16.msra.mxu0 0
    %6194 = vmatprep.subr.bf16.mxu0 0
    %6195 = vmatpush2.bf16.msra.mxu0 0
    %6196 = vmatprep.mubr.bf16.mxu0 0
    %6197 = vmatmul.mubr.bf16.gmra.mxu0 %v5589
    %v6198 = vpop.f32.mrf.mxu0
    %v6199 = vadd.f32 %v6158, %v6198
    %v6200 = vpop.f32.mrf.mxu0
    %v6201 = vadd.f32 %v6160, %v6200
    %v6202 = vpop.f32.mrf.mxu0
    %v6203 = vpop.f32.mrf.mxu0
    %6204 = vdwg.mxu0
    %vm6205 = vcmp.gt.f32.partialorder %v6199, 0.0
    %vm6206 = vcmp.gt.f32.partialorder %v6201, 0.0
    %v6207 = vmul.f32 %v6199, 0.01
    %v6208 = vmul.f32 %v6201, 0.01
    %v6209 = vsel %vm6205, %v6199, %v6207
    %v6210 = vsel %vm6206, %v6201, %v6208
    %v6211 = vpack.c.bf16 %v6209, %v6209
    %v6212 = vpack.c.bf16 %v6210, %v6210
    %v6213 = vld [vmem:[#allocation14] sm:$0xf]
    %v6214 = vld [vmem:[#allocation14 + $0x4] sm:$0xf]
    %v6215 = vld [vmem:[#allocation14 + $0x8] sm:$0xf]
    %v6216 = vld [vmem:[#allocation14 + $0xc] sm:$0xf]
    %v6217 = vld [vmem:[#allocation14 + $0x10] sm:$0xf]
    %v6218 = vld [vmem:[#allocation14 + $0x14] sm:$0xf]
    %v6219 = vld [vmem:[#allocation14 + $0x18] sm:$0xf]
    %v6220 = vld [vmem:[#allocation14 + $0x1c] sm:$0xf]
    %v6221 = vld [vmem:[#allocation14 + $0x20] sm:$0xf]
    %v6222 = vld [vmem:[#allocation14 + $0x24] sm:$0xf]
    %v6223 = vld [vmem:[#allocation14 + $0x28] sm:$0xf]
    %v6224 = vld [vmem:[#allocation14 + $0x2c] sm:$0xf]
    %v6225 = vld [vmem:[#allocation14 + $0x30] sm:$0xf]
    %v6226 = vld [vmem:[#allocation14 + $0x34] sm:$0xf]
    %v6227 = vld [vmem:[#allocation14 + $0x38] sm:$0xf]
    %v6228 = vld [vmem:[#allocation14 + $0x3c] sm:$0xf]
    %v6229 = vld [vmem:[#allocation14 + $0x40] sm:$0xf]
    %v6230 = vld [vmem:[#allocation14 + $0x44] sm:$0xf]
    %v6231 = vld [vmem:[#allocation14 + $0x48] sm:$0xf]
    %v6232 = vld [vmem:[#allocation14 + $0x4c] sm:$0xf]
    %v6233 = vld [vmem:[#allocation14 + $0x50] sm:$0xf]
    %v6234 = vld [vmem:[#allocation14 + $0x54] sm:$0xf]
    %v6235 = vld [vmem:[#allocation14 + $0x58] sm:$0xf]
    %v6236 = vld [vmem:[#allocation14 + $0x5c] sm:$0xf]
    %v6237 = vld [vmem:[#allocation14 + $0x60] sm:$0xf]
    %v6238 = vld [vmem:[#allocation14 + $0x64] sm:$0xf]
    %v6239 = vld [vmem:[#allocation14 + $0x68] sm:$0xf]
    %v6240 = vld [vmem:[#allocation14 + $0x6c] sm:$0xf]
    %v6241 = vld [vmem:[#allocation14 + $0x70] sm:$0xf]
    %v6242 = vld [vmem:[#allocation14 + $0x74] sm:$0xf]
    %v6243 = vld [vmem:[#allocation14 + $0x78] sm:$0xf]
    %v6244 = vld [vmem:[#allocation14 + $0x7c] sm:$0xf]
    %v6245 = vld [vmem:[%s14] sm:$0x1]
    %v6247 = vlaneseq
    %v6248 = vshrl.u32 %v6247, 7
    %v6249 = vsub.s32 0, %v6248
    %v6250 = vrot.slane %v6245, %v6249
    %v6284 = vunpack.c.l.b16 %v6213
    %v6285 = vunpack.c.l.b16 %v6214
    %v6286 = vunpack.c.l.b16 %v6215
    %v6287 = vunpack.c.l.b16 %v6216
    %v6288 = vunpack.c.l.b16 %v6217
    %v6289 = vunpack.c.l.b16 %v6218
    %v6290 = vunpack.c.l.b16 %v6219
    %v6291 = vunpack.c.l.b16 %v6220
    %v6292 = vunpack.c.l.b16 %v6221
    %v6293 = vunpack.c.l.b16 %v6222
    %v6294 = vunpack.c.l.b16 %v6223
    %v6295 = vunpack.c.l.b16 %v6224
    %v6296 = vunpack.c.l.b16 %v6225
    %v6297 = vunpack.c.l.b16 %v6226
    %v6298 = vunpack.c.l.b16 %v6227
    %v6299 = vunpack.c.l.b16 %v6228
    %v6300 = vunpack.c.l.b16 %v6229
    %v6301 = vunpack.c.l.b16 %v6230
    %v6302 = vunpack.c.l.b16 %v6231
    %v6303 = vunpack.c.l.b16 %v6232
    %v6304 = vunpack.c.l.b16 %v6233
    %v6305 = vunpack.c.l.b16 %v6234
    %v6306 = vunpack.c.l.b16 %v6235
    %v6307 = vunpack.c.l.b16 %v6236
    %v6308 = vunpack.c.l.b16 %v6237
    %v6309 = vunpack.c.l.b16 %v6238
    %v6310 = vunpack.c.l.b16 %v6239
    %v6311 = vunpack.c.l.b16 %v6240
    %v6312 = vunpack.c.l.b16 %v6241
    %v6313 = vunpack.c.l.b16 %v6242
    %v6314 = vunpack.c.l.b16 %v6243
    %v6315 = vunpack.c.l.b16 %v6244
    %v6316 = vpack.c.b16 %v6285, %v6284
    %v6317 = vpack.c.b16 %v6287, %v6286
    %v6318 = vpack.c.b16 %v6289, %v6288
    %v6319 = vpack.c.b16 %v6291, %v6290
    %v6320 = vpack.c.b16 %v6293, %v6292
    %v6321 = vpack.c.b16 %v6295, %v6294
    %v6322 = vpack.c.b16 %v6297, %v6296
    %v6323 = vpack.c.b16 %v6299, %v6298
    %v6324 = vpack.c.b16 %v6301, %v6300
    %v6325 = vpack.c.b16 %v6303, %v6302
    %v6326 = vpack.c.b16 %v6305, %v6304
    %v6327 = vpack.c.b16 %v6307, %v6306
    %v6328 = vpack.c.b16 %v6309, %v6308
    %v6329 = vpack.c.b16 %v6311, %v6310
    %v6330 = vpack.c.b16 %v6313, %v6312
    %v6331 = vpack.c.b16 %v6315, %v6314
    %6348 = vmatprep.subr.bf16.mxu0 0
    %6349 = vmatpush1.bf16.msra.mxu0 %v6323
    %6350 = vmatprep.subr.bf16.mxu0 0
    %6351 = vmatpush1.bf16.msra.mxu0 %v6322
    %6352 = vmatprep.subr.bf16.mxu0 0
    %6353 = vmatpush1.bf16.msra.mxu0 %v6321
    %6354 = vmatprep.subr.bf16.mxu0 0
    %6355 = vmatpush1.bf16.msra.mxu0 %v6320
    %6356 = vmatprep.subr.bf16.mxu0 0
    %6357 = vmatpush1.bf16.msra.mxu0 %v6319
    %6358 = vmatprep.subr.bf16.mxu0 0
    %6359 = vmatpush1.bf16.msra.mxu0 %v6318
    %6360 = vmatprep.subr.bf16.mxu0 0
    %6361 = vmatpush1.bf16.msra.mxu0 %v6317
    %6362 = vmatprep.subr.bf16.mxu0 0
    %6363 = vmatpush1.bf16.msra.mxu0 %v6316
    %6364 = vmatprep.subr.bf16.mxu0 0
    %6365 = vmatpush2.bf16.msra.mxu0 %v6331
    %6366 = vmatprep.subr.bf16.mxu0 0
    %6367 = vmatpush2.bf16.msra.mxu0 %v6330
    %6368 = vmatprep.subr.bf16.mxu0 0
    %6369 = vmatpush2.bf16.msra.mxu0 %v6329
    %6370 = vmatprep.subr.bf16.mxu0 0
    %6371 = vmatpush2.bf16.msra.mxu0 %v6328
    %6372 = vmatprep.subr.bf16.mxu0 0
    %6373 = vmatpush2.bf16.msra.mxu0 %v6327
    %6374 = vmatprep.subr.bf16.mxu0 0
    %6375 = vmatpush2.bf16.msra.mxu0 %v6326
    %6376 = vmatprep.subr.bf16.mxu0 0
    %6377 = vmatpush2.bf16.msra.mxu0 %v6325
    %6378 = vmatprep.subr.bf16.mxu0 0
    %6379 = vmatpush2.bf16.msra.mxu0 %v6324
    %6380 = vmatprep.mubr.bf16.mxu0 %v6212
    %6381 = vmatmul.mubr.bf16.gmra.mxu0 %v6211
    %v6382 = vpop.f32.mrf.mxu0
    %v6383 = vadd.f32 %v6250, %v6382
    %v6384 = vpop.f32.mrf.mxu0
    %v6385 = vpop.f32.mrf.mxu0
    %v6386 = vpop.f32.mrf.mxu0
    %6387 = vdwg.mxu0
    %6388 = vst [vmem:[#allocation16] sm:$0xff] %v6383
    // Predicated region
    $region94: #{tpu_custom_call.1} parent=1 // pred_check
      _
    $region95: #{tpu_custom_call.1} parent=1 // pred_check_branch
      %6390 = sbr.rel (0) target = $region97
    $region96: #{tpu_custom_call.1} parent=1 // pred_region
      %s6392 = ssub.s32 128, 128
      %6393 = vsyncadd [#allocation4], %s6392
      %s6395 = sshll.u32 [#allocation16], 4
      %s6396 = int_to_ptr.vmem [resolvable:$true] %s6395
      %6398 = dma.vmem_to_hbm [thread:$0]  %s6396, 128, %s15, [#allocation4]
    $region97: #{tpu_custom_call.1} parent=1 // pred_fallthru
      _
    // Predicated region
    $region98: #{tpu_custom_call.1} parent=1 // pred_check
      _
    $region99: #{tpu_custom_call.1} parent=1 // pred_check_branch
      %6400 = sbr.rel (0) target = $region101
    $region100: #{tpu_custom_call.1} parent=1 // pred_region
      %6401 = dma.done [#allocation4], 128
    $region101: #{tpu_custom_call.1} parent=1 // pred_fallthru
      _
    %6402 = vsyncpa [#allocation3], 1
    %6403 = vsyncpa [#allocation6], 1
    %6404 = vsyncpa [#allocation9], 1
    %6405 = vsyncpa [#allocation12], 1
    %6406 = vsyncpa [#allocation15], 1
    %6407 = vsyncpa [#allocation4], 1

</llo_original>
